<compile_context>
chip_gen: v5e
topology: v5e:2x2
jax: 0.10.0
libtpu: 0.0.40
codegen_flags: <defaults>
</compile_context>

<pallas_src>
import jax
import jax.numpy as jnp
import numpy as np
from jax.experimental import pallas as pl
from jax.experimental.pallas import tpu as pltpu


def word_encoder_kernel(ids_ref, lens_ref, emb_ref,
                        wih_f_ref, bih_f_ref, wih_b_ref, bih_b_ref,
                        whh_f_ref, bhh_f_ref, whh_b_ref, bhh_b_ref,
                        wh2u_ref, bh2u_ref, wuw_ref,
                        out_ref, h_scr):
    f32 = jnp.float32
    cdt = wih_f_ref.dtype                 # MXU operand dtype (f32, or bf16 opt-in)
    Bt = lens_ref.shape[0]
    TB = ids_ref.shape[0]
    T = TB // Bt
    V, E = emb_ref.shape
    H = whh_f_ref.shape[0]
    PW = out_ref.shape[1]

    # --- embedding lookup as one-hot matmul (V=32 -> cheap, stays on the MXU) -
    # TODO(synk): for a realistic vocab (30k+) replace the O(T*B*V) one-hot with
    # a scalar-prefetch / DMA row gather (and ship ids lane-dense).
    ids = ids_ref[...]                                                 # (T*Bt, 1) i32
    onehot = (jax.lax.broadcasted_iota(jnp.int32, (TB, V), 1) == ids).astype(cdt)
    x = jnp.dot(onehot, emb_ref[...], preferred_element_type=f32)      # (T*Bt, E)
    # nn.Dropout is identity at inference time.
    # TODO(synk): training-mode stochastic dropout not implemented.

    # --- GRU input projections: one matmul per direction against resident x ---
    # (a fused (E,6H) weight would force a 128-lane-tile-crossing slice at 3H=96)
    xc = x.astype(cdt)
    gi_f = jnp.dot(xc, wih_f_ref[...], preferred_element_type=f32) + bih_f_ref[...]
    gi_b = jnp.dot(xc, wih_b_ref[...], preferred_element_type=f32) + bih_b_ref[...]

    lens = lens_ref[...]                                               # (Bt, 1) i32
    whh_f = whh_f_ref[...]; bhh_f = bhh_f_ref[...]
    whh_b = whh_b_ref[...]; bhh_b = bhh_b_ref[...]

    # Hoisted per-step validity masks (packed-sequence semantics), shared by both
    # directions (forward step t / backward step T-1-t).
    valid = [lens > t for t in range(T)]                               # T x (Bt, 1) bool

    def gru_cell(gi_t, h_prev, whh_t, bhh):
        gh = jnp.dot(h_prev.astype(cdt), whh_t, preferred_element_type=f32) + bhh
        r = jax.nn.sigmoid(gi_t[:, 0:H] + gh[:, 0:H])
        z = jax.nn.sigmoid(gi_t[:, H:2 * H] + gh[:, H:2 * H])
        n = jnp.tanh(gi_t[:, 2 * H:3 * H] + r * gh[:, 2 * H:3 * H])
        return (1.0 - z) * n + z * h_prev

    # --- bidirectional recurrence: fwd & bwd interleaved per iteration (two
    # independent MXU chains); per-step outputs staged time-major into ONE
    # (T*Bt, 2H) VMEM scratch: lanes 0:H = forward, lanes H:2H = backward.
    h_f = jnp.zeros((Bt, H), f32)
    h_b = jnp.zeros((Bt, H), f32)
    for t in range(T):                        # T static -> fully unrolled
        tb = T - 1 - t
        hn_f = gru_cell(gi_f[t * Bt:(t + 1) * Bt, :], h_f, whh_f, bhh_f)
        hn_b = gru_cell(gi_b[tb * Bt:(tb + 1) * Bt, :], h_b, whh_b, bhh_b)
        m_f = valid[t]
        m_b = valid[tb]
        h_scr[t * Bt:(t + 1) * Bt, 0:H] = jnp.where(m_f, hn_f, 0.0)       # padded -> 0
        h_scr[tb * Bt:(tb + 1) * Bt, H:2 * H] = jnp.where(m_b, hn_b, 0.0)
        h_f = jnp.where(m_f, hn_f, h_f)        # carry hidden state only while valid
        h_b = jnp.where(m_b, hn_b, h_b)

    h_all = h_scr[...]                         # (T*Bt, 2H), time-major

    # --- word attention, batched over all timesteps: one K=2H matmul ----------
    u = jnp.tanh(jnp.dot(h_all.astype(cdt), wh2u_ref[...],
                         preferred_element_type=f32) + bh2u_ref[...])   # (T*Bt, A)
    s_col = jnp.dot(u.astype(cdt), wuw_ref[...], preferred_element_type=f32)  # (T*Bt, 1)
    # de-interleave time-major scores into (Bt, T): T cheap sublane slices + concat
    scores = jnp.concatenate(
        [s_col[t * Bt:(t + 1) * Bt, :] for t in range(T)], axis=1)      # (Bt, T)

    t_iota = jax.lax.broadcasted_iota(jnp.int32, (Bt, T), 1)
    mask = t_iota < lens                                                # sequence_mask
    # finite fill value: exp underflows to 0 for padded slots, and a (degenerate)
    # zero-length row yields a uniform distribution instead of NaN.  Callers must
    # discard outputs of any length-0 padding rows.
    masked = jnp.where(mask, scores, jnp.float32(-1e30))
    m = jnp.max(masked, axis=1, keepdims=True)
    e = jnp.exp(masked - m)
    alpha = e / jnp.sum(e, axis=1, keepdims=True)                       # softmax(dim=1)

    # weighted sum over time directly on the merged (Bt, 2H) rows.
    rep = jnp.zeros((Bt, 2 * H), f32)
    for t in range(T):
        rep = rep + alpha[:, t:t + 1] * h_all[t * Bt:(t + 1) * Bt, :]

    # single lane-dense packed output row: [ rep | alpha | zero pad ] -> (Bt, PW)
    pad = PW - 2 * H - T
    pieces = [rep, alpha]
    if pad:
        pieces.append(jnp.zeros((Bt, pad), f32))
    out_ref[...] = jnp.concatenate(pieces, axis=1)


def _pick_batch_tile(B, target=256):
    """Largest multiple of 8 dividing B, <= target, keeping >= 2 grid tiles
    (so v7x's two TensorCores both get work) whenever B > 8."""
    best = 8
    for bt in range(8, min(B, target) + 1, 8):
        if B % bt == 0 and (B // bt >= 2 or B <= 8):
            best = bt
    return best


def word_encoder_forward(sents, words_per_sent, params, *, batch_tile=None,
                         mxu_dtype=jnp.float32):
    """sents: (B, T) int32 token ids; words_per_sent: (B,) int32 lengths (>=1).

    mxu_dtype: dtype of MXU operands (weights + activations fed to jnp.dot).
    Keep f32 on v5e; jnp.bfloat16 is a valid opt-in on v6e/v7x (accumulation and
    all elementwise math stay f32 either way).
    """
    B, T = sents.shape
    V, E = params["emb"].shape
    H = params["whh_f_t"].shape[0]
    A = params["wh2u_t"].shape[1]

    if batch_tile is None:
        batch_tile = _pick_batch_tile(B)
    assert B % batch_tile == 0 and batch_tile % 8 == 0, \
        "pad the batch to a multiple of 8 (and of batch_tile)"
    n_tiles = B // batch_tile

    # packed output width: rep (2H) + alpha (T), padded to a 128-lane multiple
    pack_w = max(128, ((2 * H + T + 127) // 128) * 128)

    # Host-side layout plumbing: per-batch-tile, time-major token-id column.
    ids_tm = (sents.astype(jnp.int32)
              .reshape(n_tiles, batch_tile, T)
              .transpose(0, 2, 1)
              .reshape(n_tiles, T * batch_tile, 1))
    lens = words_per_sent.reshape(B, 1).astype(jnp.int32)

    cast = lambda w: w.astype(mxu_dtype)
    args = (ids_tm, lens,
            cast(params["emb"]),
            cast(params["wih_f_t"]), params["bih_f"],
            cast(params["wih_b_t"]), params["bih_b"],
            cast(params["whh_f_t"]), params["bhh_f"],
            cast(params["whh_b_t"]), params["bhh_b"],
            cast(params["wh2u_t"]), params["bh2u"],
            cast(params["wuw_col"]))

    def full(x):
        nd = x.ndim

        def imap(i):
            return (0,) * nd
        return pl.BlockSpec(tuple(x.shape), imap)

    in_specs = [
        pl.BlockSpec((None, T * batch_tile, 1), lambda i: (i, 0, 0)),  # ids (tile dim squeezed)
        pl.BlockSpec((batch_tile, 1), lambda i: (i, 0)),               # lens
        full(args[2]),                                                  # emb
        full(args[3]), full(args[4]), full(args[5]), full(args[6]),    # wih_f, bih_f, wih_b, bih_b
        full(args[7]), full(args[8]), full(args[9]), full(args[10]),   # whh_f, bhh_f, whh_b, bhh_b
        full(args[11]), full(args[12]), full(args[13]),                 # wh2u, bh2u, wuw
    ]
    out_specs = pl.BlockSpec((batch_tile, pack_w), lambda i: (i, 0))

    tokens = B * T
    cost = pl.CostEstimate(
        flops=int(2 * tokens * (V * E + 2 * E * 3 * H + 2 * H * 3 * H + 2 * H * A + A)),
        transcendentals=int(tokens * (6 * H + A + 1)),
        bytes_accessed=int(sum(int(np.prod(a.shape)) * a.dtype.itemsize for a in args)
                           + B * pack_w * 4),
    )

    packed = pl.pallas_call(
        word_encoder_kernel,
        out_shape=jax.ShapeDtypeStruct((B, pack_w), jnp.float32),
        grid=(n_tiles,),
        in_specs=in_specs,
        out_specs=out_specs,
        scratch_shapes=[pltpu.VMEM((T * batch_tile, 2 * H), jnp.float32)],
        compiler_params=pltpu.CompilerParams(
            dimension_semantics=("parallel",),
            vmem_limit_bytes=32 * 1024 * 1024),
        cost_estimate=cost,
    )(*args)

    rep = packed[:, :2 * H]
    alpha = packed[:, 2 * H:2 * H + T]
    return rep, alpha


def word_encoder_ref(sents, lengths, p):
    """Pure-JAX reference mirroring the PyTorch forward semantics."""
    B, T = sents.shape
    H = p["whh_f_t"].shape[0]
    emb = p["emb"][sents]                                   # (B, T, E)

    def run(reverse):
        wih_t = p["wih_b_t"] if reverse else p["wih_f_t"]
        whh_t = p["whh_b_t"] if reverse else p["whh_f_t"]
        bih = p["bih_b"] if reverse else p["bih_f"]
        bhh = p["bhh_b"] if reverse else p["bhh_f"]
        h = jnp.zeros((B, H), jnp.float32)
        out = [None] * T
        order = range(T - 1, -1, -1) if reverse else range(T)
        for t in order:
            gi = emb[:, t, :] @ wih_t + bih
            gh = h @ whh_t + bhh
            r = jax.nn.sigmoid(gi[:, :H] + gh[:, :H])
            z = jax.nn.sigmoid(gi[:, H:2 * H] + gh[:, H:2 * H])
            n = jnp.tanh(gi[:, 2 * H:] + r * gh[:, 2 * H:])
            h_new = (1.0 - z) * n + z * h
            valid = (lengths > t)[:, None]
            h = jnp.where(valid, h_new, h)
            out[t] = jnp.where(valid, h_new, 0.0)
        return jnp.stack(out, axis=1)

    hcat = jnp.concatenate([run(False), run(True)], axis=2)   # (B, T, 2H)
    u = jnp.tanh(hcat @ p["wh2u_t"] + p["bh2u"])
    scores = (u @ p["wuw_col"])[..., 0]
    mask = jnp.arange(T)[None, :] < lengths[:, None]
    alpha = jax.nn.softmax(jnp.where(mask, scores, -jnp.inf), axis=1)
    rep = jnp.sum(alpha[..., None] * hcat, axis=1)
    return rep, alpha


if __name__ == "__main__":
    # module hyper-params: vocab_size=32, emb_size=32, word_rnn_size=32,
    # word_att_size=32, dropout=0.1 (identity at inference)
    V, E, H, A = 32, 32, 32, 32
    B, T = 16, 8                 # auto batch_tile=8 -> two grid tiles, "parallel"

    key = jax.random.PRNGKey(0)
    ks = jax.random.split(key, 16)

    def init(k, shape, scale=0.3):
        return jax.random.uniform(k, shape, jnp.float32, -scale, scale)

    params = dict(
        emb=init(ks[0], (V, E)),
        # GRU weights, pre-transposed; gate order (r, z, n) like PyTorch.
        wih_f_t=init(ks[1], (E, 3 * H)), whh_f_t=init(ks[2], (H, 3 * H)),
        bih_f=init(ks[3], (1, 3 * H)), bhh_f=init(ks[4], (1, 3 * H)),
        wih_b_t=init(ks[5], (E, 3 * H)), whh_b_t=init(ks[6], (H, 3 * H)),
        bih_b=init(ks[7], (1, 3 * H)), bhh_b=init(ks[8], (1, 3 * H)),
        wh2u_t=init(ks[9], (2 * H, A)), bh2u=init(ks[10], (1, A)),
        wuw_col=init(ks[11], (A, 1)),
    )

    sents = jax.random.randint(ks[12], (B, T), 0, V, dtype=jnp.int32)
    words_per_sent = jnp.array([8, 5, 3, 6, 8, 2, 7, 4,
                                1, 8, 4, 6, 2, 5, 7, 3], dtype=jnp.int32)

    rep, alpha = word_encoder_forward(sents, words_per_sent, params)
    jax.block_until_ready((rep, alpha))

    rep_r, alpha_r = word_encoder_ref(sents, words_per_sent, params)
    np.testing.assert_allclose(np.asarray(rep), np.asarray(rep_r), rtol=2e-3, atol=2e-3)
    np.testing.assert_allclose(np.asarray(alpha), np.asarray(alpha_r), rtol=2e-3, atol=2e-3)
    print("KERNEL_OK")
</pallas_src>

<mosaic_0001>
module attributes {stable_mosaic.version = 11 : i64} {
  func.func @word_encoder_kernel(%arg0: i32, %arg1: memref<1x64x1xi32, #tpu.memory_space<vmem>>, %arg2: memref<8x1xi32, #tpu.memory_space<vmem>>, %arg3: memref<32x32xf32, #tpu.memory_space<vmem>>, %arg4: memref<32x96xf32, #tpu.memory_space<vmem>>, %arg5: memref<1x96xf32, #tpu.memory_space<vmem>>, %arg6: memref<32x96xf32, #tpu.memory_space<vmem>>, %arg7: memref<1x96xf32, #tpu.memory_space<vmem>>, %arg8: memref<32x96xf32, #tpu.memory_space<vmem>>, %arg9: memref<1x96xf32, #tpu.memory_space<vmem>>, %arg10: memref<32x96xf32, #tpu.memory_space<vmem>>, %arg11: memref<1x96xf32, #tpu.memory_space<vmem>>, %arg12: memref<64x32xf32, #tpu.memory_space<vmem>>, %arg13: memref<1x32xf32, #tpu.memory_space<vmem>>, %arg14: memref<32x1xf32, #tpu.memory_space<vmem>>, %arg15: memref<8x128xf32, #tpu.memory_space<vmem>>, %arg16: memref<64x64xf32, #tpu.memory_space<vmem>>) attributes {dimension_semantics = [#tpu.dimension_semantics<parallel>], iteration_bounds = array<i64: 2>, scalar_prefetch = 0 : i64, scratch_operands = 1 : i64, tpu.core_type = #tpu.core_type<tc>, window_params = [{transform_indices = @transform_0, window_bounds = array<i64: 1, 64, 1>}, {transform_indices = @transform_1, window_bounds = array<i64: 8, 1>}, {pipeline_mode = #tpu.pipeline_mode<synchronous>, transform_indices = @transform_2, window_bounds = array<i64: 32, 32>}, {pipeline_mode = #tpu.pipeline_mode<synchronous>, transform_indices = @transform_3, window_bounds = array<i64: 32, 96>}, {pipeline_mode = #tpu.pipeline_mode<synchronous>, transform_indices = @transform_4, window_bounds = array<i64: 1, 96>}, {pipeline_mode = #tpu.pipeline_mode<synchronous>, transform_indices = @transform_5, window_bounds = array<i64: 32, 96>}, {pipeline_mode = #tpu.pipeline_mode<synchronous>, transform_indices = @transform_6, window_bounds = array<i64: 1, 96>}, {pipeline_mode = #tpu.pipeline_mode<synchronous>, transform_indices = @transform_7, window_bounds = array<i64: 32, 96>}, {pipeline_mode = #tpu.pipeline_mode<synchronous>, transform_indices = @transform_8, window_bounds = array<i64: 1, 96>}, {pipeline_mode = #tpu.pipeline_mode<synchronous>, transform_indices = @transform_9, window_bounds = array<i64: 32, 96>}, {pipeline_mode = #tpu.pipeline_mode<synchronous>, transform_indices = @transform_10, window_bounds = array<i64: 1, 96>}, {pipeline_mode = #tpu.pipeline_mode<synchronous>, transform_indices = @transform_11, window_bounds = array<i64: 64, 32>}, {pipeline_mode = #tpu.pipeline_mode<synchronous>, transform_indices = @transform_12, window_bounds = array<i64: 1, 32>}, {pipeline_mode = #tpu.pipeline_mode<synchronous>, transform_indices = @transform_13, window_bounds = array<i64: 32, 1>}, {transform_indices = @transform_14, window_bounds = array<i64: 8, 128>}]} {
    %c0 = arith.constant 0 : index
    %c0_0 = arith.constant 0 : index
    %c0_1 = arith.constant 0 : index
    %0 = vector.load %arg1[%c0, %c0_0, %c0_1] : memref<1x64x1xi32, #tpu.memory_space<vmem>>, vector<1x64x1xi32>
    %1 = vector.shape_cast %0 : vector<1x64x1xi32> to vector<64x1xi32>
    %2 = tpu.iota {dimensions = array<i32: 1>} : vector<64x32xi32>
    %3 = vector.broadcast %1 : vector<64x1xi32> to vector<64x32xi32>
    %4 = arith.cmpi eq, %2, %3 : vector<64x32xi32>
    %5 = arith.extui %4 : vector<64x32xi1> to vector<64x32xi32>
    %6 = arith.sitofp %5 : vector<64x32xi32> to vector<64x32xf32>
    %c0_2 = arith.constant 0 : index
    %c0_3 = arith.constant 0 : index
    %7 = vector.load %arg3[%c0_2, %c0_3] : memref<32x32xf32, #tpu.memory_space<vmem>>, vector<32x32xf32>
    %cst = arith.constant dense<0.000000e+00> : vector<64x32xf32>
    %8 = tpu.matmul %6, %7, %cst {dimension_numbers = #tpu.dot_dimension_numbers<[1], [0], [0], [1], [0, 0, 1, 1], [], []>} : vector<64x32xf32>, vector<32x32xf32>, vector<64x32xf32> -> vector<64x32xf32>
    %c0_4 = arith.constant 0 : index
    %c0_5 = arith.constant 0 : index
    %9 = vector.load %arg4[%c0_4, %c0_5] : memref<32x96xf32, #tpu.memory_space<vmem>>, vector<32x96xf32>
    %cst_6 = arith.constant dense<0.000000e+00> : vector<64x96xf32>
    %10 = tpu.matmul %8, %9, %cst_6 {dimension_numbers = #tpu.dot_dimension_numbers<[1], [0], [0], [1], [0, 0, 1, 1], [], []>} : vector<64x32xf32>, vector<32x96xf32>, vector<64x96xf32> -> vector<64x96xf32>
    %c0_7 = arith.constant 0 : index
    %c0_8 = arith.constant 0 : index
    %11 = vector.load %arg5[%c0_7, %c0_8] : memref<1x96xf32, #tpu.memory_space<vmem>>, vector<1x96xf32>
    %12 = vector.broadcast %11 : vector<1x96xf32> to vector<64x96xf32>
    %13 = arith.addf %10, %12 : vector<64x96xf32>
    %c0_9 = arith.constant 0 : index
    %c0_10 = arith.constant 0 : index
    %14 = vector.load %arg6[%c0_9, %c0_10] : memref<32x96xf32, #tpu.memory_space<vmem>>, vector<32x96xf32>
    %cst_11 = arith.constant dense<0.000000e+00> : vector<64x96xf32>
    %15 = tpu.matmul %8, %14, %cst_11 {dimension_numbers = #tpu.dot_dimension_numbers<[1], [0], [0], [1], [0, 0, 1, 1], [], []>} : vector<64x32xf32>, vector<32x96xf32>, vector<64x96xf32> -> vector<64x96xf32>
    %c0_12 = arith.constant 0 : index
    %c0_13 = arith.constant 0 : index
    %16 = vector.load %arg7[%c0_12, %c0_13] : memref<1x96xf32, #tpu.memory_space<vmem>>, vector<1x96xf32>
    %17 = vector.broadcast %16 : vector<1x96xf32> to vector<64x96xf32>
    %18 = arith.addf %15, %17 : vector<64x96xf32>
    %c0_14 = arith.constant 0 : index
    %c0_15 = arith.constant 0 : index
    %19 = vector.load %arg2[%c0_14, %c0_15] : memref<8x1xi32, #tpu.memory_space<vmem>>, vector<8x1xi32>
    %c0_16 = arith.constant 0 : index
    %c0_17 = arith.constant 0 : index
    %20 = vector.load %arg8[%c0_16, %c0_17] : memref<32x96xf32, #tpu.memory_space<vmem>>, vector<32x96xf32>
    %c0_18 = arith.constant 0 : index
    %c0_19 = arith.constant 0 : index
    %21 = vector.load %arg9[%c0_18, %c0_19] : memref<1x96xf32, #tpu.memory_space<vmem>>, vector<1x96xf32>
    %c0_20 = arith.constant 0 : index
    %c0_21 = arith.constant 0 : index
    %22 = vector.load %arg10[%c0_20, %c0_21] : memref<32x96xf32, #tpu.memory_space<vmem>>, vector<32x96xf32>
    %c0_22 = arith.constant 0 : index
    %c0_23 = arith.constant 0 : index
    %23 = vector.load %arg11[%c0_22, %c0_23] : memref<1x96xf32, #tpu.memory_space<vmem>>, vector<1x96xf32>
    %c0_i32 = arith.constant 0 : i32
    %24 = vector.broadcast %c0_i32 : i32 to vector<8x1xi32>
    %25 = arith.cmpi sgt, %19, %24 : vector<8x1xi32>
    %c1_i32 = arith.constant 1 : i32
    %26 = vector.broadcast %c1_i32 : i32 to vector<8x1xi32>
    %27 = arith.cmpi sgt, %19, %26 : vector<8x1xi32>
    %c2_i32 = arith.constant 2 : i32
    %28 = vector.broadcast %c2_i32 : i32 to vector<8x1xi32>
    %29 = arith.cmpi sgt, %19, %28 : vector<8x1xi32>
    %c3_i32 = arith.constant 3 : i32
    %30 = vector.broadcast %c3_i32 : i32 to vector<8x1xi32>
    %31 = arith.cmpi sgt, %19, %30 : vector<8x1xi32>
    %c4_i32 = arith.constant 4 : i32
    %32 = vector.broadcast %c4_i32 : i32 to vector<8x1xi32>
    %33 = arith.cmpi sgt, %19, %32 : vector<8x1xi32>
    %c5_i32 = arith.constant 5 : i32
    %34 = vector.broadcast %c5_i32 : i32 to vector<8x1xi32>
    %35 = arith.cmpi sgt, %19, %34 : vector<8x1xi32>
    %c6_i32 = arith.constant 6 : i32
    %36 = vector.broadcast %c6_i32 : i32 to vector<8x1xi32>
    %37 = arith.cmpi sgt, %19, %36 : vector<8x1xi32>
    %c7_i32 = arith.constant 7 : i32
    %38 = vector.broadcast %c7_i32 : i32 to vector<8x1xi32>
    %39 = arith.cmpi sgt, %19, %38 : vector<8x1xi32>
    %cst_24 = arith.constant 0.000000e+00 : f32
    %40 = vector.broadcast %cst_24 : f32 to vector<8x32xf32>
    %cst_25 = arith.constant 0.000000e+00 : f32
    %41 = vector.broadcast %cst_25 : f32 to vector<8x32xf32>
    %42 = vector.extract_strided_slice %13 {offsets = [0, 0], sizes = [8, 96], strides = [1, 1]} : vector<64x96xf32> to vector<8x96xf32>
    %cst_26 = arith.constant dense<0.000000e+00> : vector<8x96xf32>
    %43 = tpu.matmul %40, %20, %cst_26 {dimension_numbers = #tpu.dot_dimension_numbers<[1], [0], [0], [1], [0, 0, 1, 1], [], []>} : vector<8x32xf32>, vector<32x96xf32>, vector<8x96xf32> -> vector<8x96xf32>
    %44 = vector.broadcast %21 : vector<1x96xf32> to vector<8x96xf32>
    %45 = arith.addf %43, %44 : vector<8x96xf32>
    %46 = vector.extract_strided_slice %42 {offsets = [0, 0], sizes = [8, 32], strides = [1, 1]} : vector<8x96xf32> to vector<8x32xf32>
    %47 = vector.extract_strided_slice %45 {offsets = [0, 0], sizes = [8, 32], strides = [1, 1]} : vector<8x96xf32> to vector<8x32xf32>
    %48 = arith.addf %46, %47 : vector<8x32xf32>
    %49 = arith.negf %48 : vector<8x32xf32>
    %50 = math.exp %49 : vector<8x32xf32>
    %cst_27 = arith.constant 1.000000e+00 : f32
    %51 = vector.broadcast %cst_27 : f32 to vector<8x32xf32>
    %52 = arith.addf %51, %50 : vector<8x32xf32>
    %53 = arith.divf %51, %52 : vector<8x32xf32>
    %54 = vector.extract_strided_slice %42 {offsets = [0, 32], sizes = [8, 32], strides = [1, 1]} : vector<8x96xf32> to vector<8x32xf32>
    %55 = vector.extract_strided_slice %45 {offsets = [0, 32], sizes = [8, 32], strides = [1, 1]} : vector<8x96xf32> to vector<8x32xf32>
    %56 = arith.addf %54, %55 : vector<8x32xf32>
    %57 = arith.negf %56 : vector<8x32xf32>
    %58 = math.exp %57 : vector<8x32xf32>
    %cst_28 = arith.constant 1.000000e+00 : f32
    %59 = vector.broadcast %cst_28 : f32 to vector<8x32xf32>
    %60 = arith.addf %59, %58 : vector<8x32xf32>
    %61 = arith.divf %59, %60 : vector<8x32xf32>
    %62 = vector.extract_strided_slice %42 {offsets = [0, 64], sizes = [8, 32], strides = [1, 1]} : vector<8x96xf32> to vector<8x32xf32>
    %63 = vector.extract_strided_slice %45 {offsets = [0, 64], sizes = [8, 32], strides = [1, 1]} : vector<8x96xf32> to vector<8x32xf32>
    %64 = arith.mulf %53, %63 : vector<8x32xf32>
    %65 = arith.addf %62, %64 : vector<8x32xf32>
    %66 = math.tanh %65 : vector<8x32xf32>
    %cst_29 = arith.constant 1.000000e+00 : f32
    %67 = vector.broadcast %cst_29 : f32 to vector<8x32xf32>
    %68 = arith.subf %67, %61 : vector<8x32xf32>
    %69 = arith.mulf %68, %66 : vector<8x32xf32>
    %70 = arith.mulf %61, %40 : vector<8x32xf32>
    %71 = arith.addf %69, %70 : vector<8x32xf32>
    %72 = vector.extract_strided_slice %18 {offsets = [56, 0], sizes = [8, 96], strides = [1, 1]} : vector<64x96xf32> to vector<8x96xf32>
    %cst_30 = arith.constant dense<0.000000e+00> : vector<8x96xf32>
    %73 = tpu.matmul %41, %22, %cst_30 {dimension_numbers = #tpu.dot_dimension_numbers<[1], [0], [0], [1], [0, 0, 1, 1], [], []>} : vector<8x32xf32>, vector<32x96xf32>, vector<8x96xf32> -> vector<8x96xf32>
    %74 = vector.broadcast %23 : vector<1x96xf32> to vector<8x96xf32>
    %75 = arith.addf %73, %74 : vector<8x96xf32>
    %76 = vector.extract_strided_slice %72 {offsets = [0, 0], sizes = [8, 32], strides = [1, 1]} : vector<8x96xf32> to vector<8x32xf32>
    %77 = vector.extract_strided_slice %75 {offsets = [0, 0], sizes = [8, 32], strides = [1, 1]} : vector<8x96xf32> to vector<8x32xf32>
    %78 = arith.addf %76, %77 : vector<8x32xf32>
    %79 = arith.negf %78 : vector<8x32xf32>
    %80 = math.exp %79 : vector<8x32xf32>
    %cst_31 = arith.constant 1.000000e+00 : f32
    %81 = vector.broadcast %cst_31 : f32 to vector<8x32xf32>
    %82 = arith.addf %81, %80 : vector<8x32xf32>
    %83 = arith.divf %81, %82 : vector<8x32xf32>
    %84 = vector.extract_strided_slice %72 {offsets = [0, 32], sizes = [8, 32], strides = [1, 1]} : vector<8x96xf32> to vector<8x32xf32>
    %85 = vector.extract_strided_slice %75 {offsets = [0, 32], sizes = [8, 32], strides = [1, 1]} : vector<8x96xf32> to vector<8x32xf32>
    %86 = arith.addf %84, %85 : vector<8x32xf32>
    %87 = arith.negf %86 : vector<8x32xf32>
    %88 = math.exp %87 : vector<8x32xf32>
    %cst_32 = arith.constant 1.000000e+00 : f32
    %89 = vector.broadcast %cst_32 : f32 to vector<8x32xf32>
    %90 = arith.addf %89, %88 : vector<8x32xf32>
    %91 = arith.divf %89, %90 : vector<8x32xf32>
    %92 = vector.extract_strided_slice %72 {offsets = [0, 64], sizes = [8, 32], strides = [1, 1]} : vector<8x96xf32> to vector<8x32xf32>
    %93 = vector.extract_strided_slice %75 {offsets = [0, 64], sizes = [8, 32], strides = [1, 1]} : vector<8x96xf32> to vector<8x32xf32>
    %94 = arith.mulf %83, %93 : vector<8x32xf32>
    %95 = arith.addf %92, %94 : vector<8x32xf32>
    %96 = math.tanh %95 : vector<8x32xf32>
    %cst_33 = arith.constant 1.000000e+00 : f32
    %97 = vector.broadcast %cst_33 : f32 to vector<8x32xf32>
    %98 = arith.subf %97, %91 : vector<8x32xf32>
    %99 = arith.mulf %98, %96 : vector<8x32xf32>
    %100 = arith.mulf %91, %41 : vector<8x32xf32>
    %101 = arith.addf %99, %100 : vector<8x32xf32>
    %cst_34 = arith.constant 0.000000e+00 : f32
    %102 = vector.shape_cast %25 : vector<8x1xi1> to vector<8x1xi1>
    %103 = vector.broadcast %102 : vector<8x1xi1> to vector<8x32xi1>
    %104 = vector.broadcast %cst_34 : f32 to vector<8x32xf32>
    %105 = arith.select %103, %71, %104 : vector<8x32xi1>, vector<8x32xf32>
    %c0_35 = arith.constant 0 : index
    %c0_36 = arith.constant 0 : index
    %106 = vector.load %arg16[%c0_35, %c0_36] : memref<64x64xf32, #tpu.memory_space<vmem>>, vector<8x32xf32>
    tpu.vector_store %arg16[%c0_35, %c0_36], %105 {strides = array<i32>} : memref<64x64xf32, #tpu.memory_space<vmem>>, vector<8x32xf32>,
    %cst_37 = arith.constant 0.000000e+00 : f32
    %107 = vector.shape_cast %39 : vector<8x1xi1> to vector<8x1xi1>
    %108 = vector.broadcast %107 : vector<8x1xi1> to vector<8x32xi1>
    %109 = vector.broadcast %cst_37 : f32 to vector<8x32xf32>
    %110 = arith.select %108, %101, %109 : vector<8x32xi1>, vector<8x32xf32>
    %c56 = arith.constant 56 : index
    %c32 = arith.constant 32 : index
    %111 = vector.load %arg16[%c56, %c32] : memref<64x64xf32, #tpu.memory_space<vmem>>, vector<8x32xf32>
    tpu.vector_store %arg16[%c56, %c32], %110 {strides = array<i32>} : memref<64x64xf32, #tpu.memory_space<vmem>>, vector<8x32xf32>,
    %112 = vector.shape_cast %25 : vector<8x1xi1> to vector<8x1xi1>
    %113 = vector.broadcast %112 : vector<8x1xi1> to vector<8x32xi1>
    %114 = arith.select %113, %71, %40 : vector<8x32xi1>, vector<8x32xf32>
    %115 = vector.shape_cast %39 : vector<8x1xi1> to vector<8x1xi1>
    %116 = vector.broadcast %115 : vector<8x1xi1> to vector<8x32xi1>
    %117 = arith.select %116, %101, %41 : vector<8x32xi1>, vector<8x32xf32>
    %118 = vector.extract_strided_slice %13 {offsets = [8, 0], sizes = [8, 96], strides = [1, 1]} : vector<64x96xf32> to vector<8x96xf32>
    %cst_38 = arith.constant dense<0.000000e+00> : vector<8x96xf32>
    %119 = tpu.matmul %114, %20, %cst_38 {dimension_numbers = #tpu.dot_dimension_numbers<[1], [0], [0], [1], [0, 0, 1, 1], [], []>} : vector<8x32xf32>, vector<32x96xf32>, vector<8x96xf32> -> vector<8x96xf32>
    %120 = vector.broadcast %21 : vector<1x96xf32> to vector<8x96xf32>
    %121 = arith.addf %119, %120 : vector<8x96xf32>
    %122 = vector.extract_strided_slice %118 {offsets = [0, 0], sizes = [8, 32], strides = [1, 1]} : vector<8x96xf32> to vector<8x32xf32>
    %123 = vector.extract_strided_slice %121 {offsets = [0, 0], sizes = [8, 32], strides = [1, 1]} : vector<8x96xf32> to vector<8x32xf32>
    %124 = arith.addf %122, %123 : vector<8x32xf32>
    %125 = arith.negf %124 : vector<8x32xf32>
    %126 = math.exp %125 : vector<8x32xf32>
    %cst_39 = arith.constant 1.000000e+00 : f32
    %127 = vector.broadcast %cst_39 : f32 to vector<8x32xf32>
    %128 = arith.addf %127, %126 : vector<8x32xf32>
    %129 = arith.divf %127, %128 : vector<8x32xf32>
    %130 = vector.extract_strided_slice %118 {offsets = [0, 32], sizes = [8, 32], strides = [1, 1]} : vector<8x96xf32> to vector<8x32xf32>
    %131 = vector.extract_strided_slice %121 {offsets = [0, 32], sizes = [8, 32], strides = [1, 1]} : vector<8x96xf32> to vector<8x32xf32>
    %132 = arith.addf %130, %131 : vector<8x32xf32>
    %133 = arith.negf %132 : vector<8x32xf32>
    %134 = math.exp %133 : vector<8x32xf32>
    %cst_40 = arith.constant 1.000000e+00 : f32
    %135 = vector.broadcast %cst_40 : f32 to vector<8x32xf32>
    %136 = arith.addf %135, %134 : vector<8x32xf32>
    %137 = arith.divf %135, %136 : vector<8x32xf32>
    %138 = vector.extract_strided_slice %118 {offsets = [0, 64], sizes = [8, 32], strides = [1, 1]} : vector<8x96xf32> to vector<8x32xf32>
    %139 = vector.extract_strided_slice %121 {offsets = [0, 64], sizes = [8, 32], strides = [1, 1]} : vector<8x96xf32> to vector<8x32xf32>
    %140 = arith.mulf %129, %139 : vector<8x32xf32>
    %141 = arith.addf %138, %140 : vector<8x32xf32>
    %142 = math.tanh %141 : vector<8x32xf32>
    %cst_41 = arith.constant 1.000000e+00 : f32
    %143 = vector.broadcast %cst_41 : f32 to vector<8x32xf32>
    %144 = arith.subf %143, %137 : vector<8x32xf32>
    %145 = arith.mulf %144, %142 : vector<8x32xf32>
    %146 = arith.mulf %137, %114 : vector<8x32xf32>
    %147 = arith.addf %145, %146 : vector<8x32xf32>
    %148 = vector.extract_strided_slice %18 {offsets = [48, 0], sizes = [8, 96], strides = [1, 1]} : vector<64x96xf32> to vector<8x96xf32>
    %cst_42 = arith.constant dense<0.000000e+00> : vector<8x96xf32>
    %149 = tpu.matmul %117, %22, %cst_42 {dimension_numbers = #tpu.dot_dimension_numbers<[1], [0], [0], [1], [0, 0, 1, 1], [], []>} : vector<8x32xf32>, vector<32x96xf32>, vector<8x96xf32> -> vector<8x96xf32>
    %150 = vector.broadcast %23 : vector<1x96xf32> to vector<8x96xf32>
    %151 = arith.addf %149, %150 : vector<8x96xf32>
    %152 = vector.extract_strided_slice %148 {offsets = [0, 0], sizes = [8, 32], strides = [1, 1]} : vector<8x96xf32> to vector<8x32xf32>
    %153 = vector.extract_strided_slice %151 {offsets = [0, 0], sizes = [8, 32], strides = [1, 1]} : vector<8x96xf32> to vector<8x32xf32>
    %154 = arith.addf %152, %153 : vector<8x32xf32>
    %155 = arith.negf %154 : vector<8x32xf32>
    %156 = math.exp %155 : vector<8x32xf32>
    %cst_43 = arith.constant 1.000000e+00 : f32
    %157 = vector.broadcast %cst_43 : f32 to vector<8x32xf32>
    %158 = arith.addf %157, %156 : vector<8x32xf32>
    %159 = arith.divf %157, %158 : vector<8x32xf32>
    %160 = vector.extract_strided_slice %148 {offsets = [0, 32], sizes = [8, 32], strides = [1, 1]} : vector<8x96xf32> to vector<8x32xf32>
    %161 = vector.extract_strided_slice %151 {offsets = [0, 32], sizes = [8, 32], strides = [1, 1]} : vector<8x96xf32> to vector<8x32xf32>
    %162 = arith.addf %160, %161 : vector<8x32xf32>
    %163 = arith.negf %162 : vector<8x32xf32>
    %164 = math.exp %163 : vector<8x32xf32>
    %cst_44 = arith.constant 1.000000e+00 : f32
    %165 = vector.broadcast %cst_44 : f32 to vector<8x32xf32>
    %166 = arith.addf %165, %164 : vector<8x32xf32>
    %167 = arith.divf %165, %166 : vector<8x32xf32>
    %168 = vector.extract_strided_slice %148 {offsets = [0, 64], sizes = [8, 32], strides = [1, 1]} : vector<8x96xf32> to vector<8x32xf32>
    %169 = vector.extract_strided_slice %151 {offsets = [0, 64], sizes = [8, 32], strides = [1, 1]} : vector<8x96xf32> to vector<8x32xf32>
    %170 = arith.mulf %159, %169 : vector<8x32xf32>
    %171 = arith.addf %168, %170 : vector<8x32xf32>
    %172 = math.tanh %171 : vector<8x32xf32>
    %cst_45 = arith.constant 1.000000e+00 : f32
    %173 = vector.broadcast %cst_45 : f32 to vector<8x32xf32>
    %174 = arith.subf %173, %167 : vector<8x32xf32>
    %175 = arith.mulf %174, %172 : vector<8x32xf32>
    %176 = arith.mulf %167, %117 : vector<8x32xf32>
    %177 = arith.addf %175, %176 : vector<8x32xf32>
    %cst_46 = arith.constant 0.000000e+00 : f32
    %178 = vector.shape_cast %27 : vector<8x1xi1> to vector<8x1xi1>
    %179 = vector.broadcast %178 : vector<8x1xi1> to vector<8x32xi1>
    %180 = vector.broadcast %cst_46 : f32 to vector<8x32xf32>
    %181 = arith.select %179, %147, %180 : vector<8x32xi1>, vector<8x32xf32>
    %c8 = arith.constant 8 : index
    %c0_47 = arith.constant 0 : index
    %182 = vector.load %arg16[%c8, %c0_47] : memref<64x64xf32, #tpu.memory_space<vmem>>, vector<8x32xf32>
    tpu.vector_store %arg16[%c8, %c0_47], %181 {strides = array<i32>} : memref<64x64xf32, #tpu.memory_space<vmem>>, vector<8x32xf32>,
    %cst_48 = arith.constant 0.000000e+00 : f32
    %183 = vector.shape_cast %37 : vector<8x1xi1> to vector<8x1xi1>
    %184 = vector.broadcast %183 : vector<8x1xi1> to vector<8x32xi1>
    %185 = vector.broadcast %cst_48 : f32 to vector<8x32xf32>
    %186 = arith.select %184, %177, %185 : vector<8x32xi1>, vector<8x32xf32>
    %c48 = arith.constant 48 : index
    %c32_49 = arith.constant 32 : index
    %187 = vector.load %arg16[%c48, %c32_49] : memref<64x64xf32, #tpu.memory_space<vmem>>, vector<8x32xf32>
    tpu.vector_store %arg16[%c48, %c32_49], %186 {strides = array<i32>} : memref<64x64xf32, #tpu.memory_space<vmem>>, vector<8x32xf32>,
    %188 = vector.shape_cast %27 : vector<8x1xi1> to vector<8x1xi1>
    %189 = vector.broadcast %188 : vector<8x1xi1> to vector<8x32xi1>
    %190 = arith.select %189, %147, %114 : vector<8x32xi1>, vector<8x32xf32>
    %191 = vector.shape_cast %37 : vector<8x1xi1> to vector<8x1xi1>
    %192 = vector.broadcast %191 : vector<8x1xi1> to vector<8x32xi1>
    %193 = arith.select %192, %177, %117 : vector<8x32xi1>, vector<8x32xf32>
    %194 = vector.extract_strided_slice %13 {offsets = [16, 0], sizes = [8, 96], strides = [1, 1]} : vector<64x96xf32> to vector<8x96xf32>
    %cst_50 = arith.constant dense<0.000000e+00> : vector<8x96xf32>
    %195 = tpu.matmul %190, %20, %cst_50 {dimension_numbers = #tpu.dot_dimension_numbers<[1], [0], [0], [1], [0, 0, 1, 1], [], []>} : vector<8x32xf32>, vector<32x96xf32>, vector<8x96xf32> -> vector<8x96xf32>
    %196 = vector.broadcast %21 : vector<1x96xf32> to vector<8x96xf32>
    %197 = arith.addf %195, %196 : vector<8x96xf32>
    %198 = vector.extract_strided_slice %194 {offsets = [0, 0], sizes = [8, 32], strides = [1, 1]} : vector<8x96xf32> to vector<8x32xf32>
    %199 = vector.extract_strided_slice %197 {offsets = [0, 0], sizes = [8, 32], strides = [1, 1]} : vector<8x96xf32> to vector<8x32xf32>
    %200 = arith.addf %198, %199 : vector<8x32xf32>
    %201 = arith.negf %200 : vector<8x32xf32>
    %202 = math.exp %201 : vector<8x32xf32>
    %cst_51 = arith.constant 1.000000e+00 : f32
    %203 = vector.broadcast %cst_51 : f32 to vector<8x32xf32>
    %204 = arith.addf %203, %202 : vector<8x32xf32>
    %205 = arith.divf %203, %204 : vector<8x32xf32>
    %206 = vector.extract_strided_slice %194 {offsets = [0, 32], sizes = [8, 32], strides = [1, 1]} : vector<8x96xf32> to vector<8x32xf32>
    %207 = vector.extract_strided_slice %197 {offsets = [0, 32], sizes = [8, 32], strides = [1, 1]} : vector<8x96xf32> to vector<8x32xf32>
    %208 = arith.addf %206, %207 : vector<8x32xf32>
    %209 = arith.negf %208 : vector<8x32xf32>
    %210 = math.exp %209 : vector<8x32xf32>
    %cst_52 = arith.constant 1.000000e+00 : f32
    %211 = vector.broadcast %cst_52 : f32 to vector<8x32xf32>
    %212 = arith.addf %211, %210 : vector<8x32xf32>
    %213 = arith.divf %211, %212 : vector<8x32xf32>
    %214 = vector.extract_strided_slice %194 {offsets = [0, 64], sizes = [8, 32], strides = [1, 1]} : vector<8x96xf32> to vector<8x32xf32>
    %215 = vector.extract_strided_slice %197 {offsets = [0, 64], sizes = [8, 32], strides = [1, 1]} : vector<8x96xf32> to vector<8x32xf32>
    %216 = arith.mulf %205, %215 : vector<8x32xf32>
    %217 = arith.addf %214, %216 : vector<8x32xf32>
    %218 = math.tanh %217 : vector<8x32xf32>
    %cst_53 = arith.constant 1.000000e+00 : f32
    %219 = vector.broadcast %cst_53 : f32 to vector<8x32xf32>
    %220 = arith.subf %219, %213 : vector<8x32xf32>
    %221 = arith.mulf %220, %218 : vector<8x32xf32>
    %222 = arith.mulf %213, %190 : vector<8x32xf32>
    %223 = arith.addf %221, %222 : vector<8x32xf32>
    %224 = vector.extract_strided_slice %18 {offsets = [40, 0], sizes = [8, 96], strides = [1, 1]} : vector<64x96xf32> to vector<8x96xf32>
    %cst_54 = arith.constant dense<0.000000e+00> : vector<8x96xf32>
    %225 = tpu.matmul %193, %22, %cst_54 {dimension_numbers = #tpu.dot_dimension_numbers<[1], [0], [0], [1], [0, 0, 1, 1], [], []>} : vector<8x32xf32>, vector<32x96xf32>, vector<8x96xf32> -> vector<8x96xf32>
    %226 = vector.broadcast %23 : vector<1x96xf32> to vector<8x96xf32>
    %227 = arith.addf %225, %226 : vector<8x96xf32>
    %228 = vector.extract_strided_slice %224 {offsets = [0, 0], sizes = [8, 32], strides = [1, 1]} : vector<8x96xf32> to vector<8x32xf32>
    %229 = vector.extract_strided_slice %227 {offsets = [0, 0], sizes = [8, 32], strides = [1, 1]} : vector<8x96xf32> to vector<8x32xf32>
    %230 = arith.addf %228, %229 : vector<8x32xf32>
    %231 = arith.negf %230 : vector<8x32xf32>
    %232 = math.exp %231 : vector<8x32xf32>
    %cst_55 = arith.constant 1.000000e+00 : f32
    %233 = vector.broadcast %cst_55 : f32 to vector<8x32xf32>
    %234 = arith.addf %233, %232 : vector<8x32xf32>
    %235 = arith.divf %233, %234 : vector<8x32xf32>
    %236 = vector.extract_strided_slice %224 {offsets = [0, 32], sizes = [8, 32], strides = [1, 1]} : vector<8x96xf32> to vector<8x32xf32>
    %237 = vector.extract_strided_slice %227 {offsets = [0, 32], sizes = [8, 32], strides = [1, 1]} : vector<8x96xf32> to vector<8x32xf32>
    %238 = arith.addf %236, %237 : vector<8x32xf32>
    %239 = arith.negf %238 : vector<8x32xf32>
    %240 = math.exp %239 : vector<8x32xf32>
    %cst_56 = arith.constant 1.000000e+00 : f32
    %241 = vector.broadcast %cst_56 : f32 to vector<8x32xf32>
    %242 = arith.addf %241, %240 : vector<8x32xf32>
    %243 = arith.divf %241, %242 : vector<8x32xf32>
    %244 = vector.extract_strided_slice %224 {offsets = [0, 64], sizes = [8, 32], strides = [1, 1]} : vector<8x96xf32> to vector<8x32xf32>
    %245 = vector.extract_strided_slice %227 {offsets = [0, 64], sizes = [8, 32], strides = [1, 1]} : vector<8x96xf32> to vector<8x32xf32>
    %246 = arith.mulf %235, %245 : vector<8x32xf32>
    %247 = arith.addf %244, %246 : vector<8x32xf32>
    %248 = math.tanh %247 : vector<8x32xf32>
    %cst_57 = arith.constant 1.000000e+00 : f32
    %249 = vector.broadcast %cst_57 : f32 to vector<8x32xf32>
    %250 = arith.subf %249, %243 : vector<8x32xf32>
    %251 = arith.mulf %250, %248 : vector<8x32xf32>
    %252 = arith.mulf %243, %193 : vector<8x32xf32>
    %253 = arith.addf %251, %252 : vector<8x32xf32>
    %cst_58 = arith.constant 0.000000e+00 : f32
    %254 = vector.shape_cast %29 : vector<8x1xi1> to vector<8x1xi1>
    %255 = vector.broadcast %254 : vector<8x1xi1> to vector<8x32xi1>
    %256 = vector.broadcast %cst_58 : f32 to vector<8x32xf32>
    %257 = arith.select %255, %223, %256 : vector<8x32xi1>, vector<8x32xf32>
    %c16 = arith.constant 16 : index
    %c0_59 = arith.constant 0 : index
    %258 = vector.load %arg16[%c16, %c0_59] : memref<64x64xf32, #tpu.memory_space<vmem>>, vector<8x32xf32>
    tpu.vector_store %arg16[%c16, %c0_59], %257 {strides = array<i32>} : memref<64x64xf32, #tpu.memory_space<vmem>>, vector<8x32xf32>,
    %cst_60 = arith.constant 0.000000e+00 : f32
    %259 = vector.shape_cast %35 : vector<8x1xi1> to vector<8x1xi1>
    %260 = vector.broadcast %259 : vector<8x1xi1> to vector<8x32xi1>
    %261 = vector.broadcast %cst_60 : f32 to vector<8x32xf32>
    %262 = arith.select %260, %253, %261 : vector<8x32xi1>, vector<8x32xf32>
    %c40 = arith.constant 40 : index
    %c32_61 = arith.constant 32 : index
    %263 = vector.load %arg16[%c40, %c32_61] : memref<64x64xf32, #tpu.memory_space<vmem>>, vector<8x32xf32>
    tpu.vector_store %arg16[%c40, %c32_61], %262 {strides = array<i32>} : memref<64x64xf32, #tpu.memory_space<vmem>>, vector<8x32xf32>,
    %264 = vector.shape_cast %29 : vector<8x1xi1> to vector<8x1xi1>
    %265 = vector.broadcast %264 : vector<8x1xi1> to vector<8x32xi1>
    %266 = arith.select %265, %223, %190 : vector<8x32xi1>, vector<8x32xf32>
    %267 = vector.shape_cast %35 : vector<8x1xi1> to vector<8x1xi1>
    %268 = vector.broadcast %267 : vector<8x1xi1> to vector<8x32xi1>
    %269 = arith.select %268, %253, %193 : vector<8x32xi1>, vector<8x32xf32>
    %270 = vector.extract_strided_slice %13 {offsets = [24, 0], sizes = [8, 96], strides = [1, 1]} : vector<64x96xf32> to vector<8x96xf32>
    %cst_62 = arith.constant dense<0.000000e+00> : vector<8x96xf32>
    %271 = tpu.matmul %266, %20, %cst_62 {dimension_numbers = #tpu.dot_dimension_numbers<[1], [0], [0], [1], [0, 0, 1, 1], [], []>} : vector<8x32xf32>, vector<32x96xf32>, vector<8x96xf32> -> vector<8x96xf32>
    %272 = vector.broadcast %21 : vector<1x96xf32> to vector<8x96xf32>
    %273 = arith.addf %271, %272 : vector<8x96xf32>
    %274 = vector.extract_strided_slice %270 {offsets = [0, 0], sizes = [8, 32], strides = [1, 1]} : vector<8x96xf32> to vector<8x32xf32>
    %275 = vector.extract_strided_slice %273 {offsets = [0, 0], sizes = [8, 32], strides = [1, 1]} : vector<8x96xf32> to vector<8x32xf32>
    %276 = arith.addf %274, %275 : vector<8x32xf32>
    %277 = arith.negf %276 : vector<8x32xf32>
    %278 = math.exp %277 : vector<8x32xf32>
    %cst_63 = arith.constant 1.000000e+00 : f32
    %279 = vector.broadcast %cst_63 : f32 to vector<8x32xf32>
    %280 = arith.addf %279, %278 : vector<8x32xf32>
    %281 = arith.divf %279, %280 : vector<8x32xf32>
    %282 = vector.extract_strided_slice %270 {offsets = [0, 32], sizes = [8, 32], strides = [1, 1]} : vector<8x96xf32> to vector<8x32xf32>
    %283 = vector.extract_strided_slice %273 {offsets = [0, 32], sizes = [8, 32], strides = [1, 1]} : vector<8x96xf32> to vector<8x32xf32>
    %284 = arith.addf %282, %283 : vector<8x32xf32>
    %285 = arith.negf %284 : vector<8x32xf32>
    %286 = math.exp %285 : vector<8x32xf32>
    %cst_64 = arith.constant 1.000000e+00 : f32
    %287 = vector.broadcast %cst_64 : f32 to vector<8x32xf32>
    %288 = arith.addf %287, %286 : vector<8x32xf32>
    %289 = arith.divf %287, %288 : vector<8x32xf32>
    %290 = vector.extract_strided_slice %270 {offsets = [0, 64], sizes = [8, 32], strides = [1, 1]} : vector<8x96xf32> to vector<8x32xf32>
    %291 = vector.extract_strided_slice %273 {offsets = [0, 64], sizes = [8, 32], strides = [1, 1]} : vector<8x96xf32> to vector<8x32xf32>
    %292 = arith.mulf %281, %291 : vector<8x32xf32>
    %293 = arith.addf %290, %292 : vector<8x32xf32>
    %294 = math.tanh %293 : vector<8x32xf32>
    %cst_65 = arith.constant 1.000000e+00 : f32
    %295 = vector.broadcast %cst_65 : f32 to vector<8x32xf32>
    %296 = arith.subf %295, %289 : vector<8x32xf32>
    %297 = arith.mulf %296, %294 : vector<8x32xf32>
    %298 = arith.mulf %289, %266 : vector<8x32xf32>
    %299 = arith.addf %297, %298 : vector<8x32xf32>
    %300 = vector.extract_strided_slice %18 {offsets = [32, 0], sizes = [8, 96], strides = [1, 1]} : vector<64x96xf32> to vector<8x96xf32>
    %cst_66 = arith.constant dense<0.000000e+00> : vector<8x96xf32>
    %301 = tpu.matmul %269, %22, %cst_66 {dimension_numbers = #tpu.dot_dimension_numbers<[1], [0], [0], [1], [0, 0, 1, 1], [], []>} : vector<8x32xf32>, vector<32x96xf32>, vector<8x96xf32> -> vector<8x96xf32>
    %302 = vector.broadcast %23 : vector<1x96xf32> to vector<8x96xf32>
    %303 = arith.addf %301, %302 : vector<8x96xf32>
    %304 = vector.extract_strided_slice %300 {offsets = [0, 0], sizes = [8, 32], strides = [1, 1]} : vector<8x96xf32> to vector<8x32xf32>
    %305 = vector.extract_strided_slice %303 {offsets = [0, 0], sizes = [8, 32], strides = [1, 1]} : vector<8x96xf32> to vector<8x32xf32>
    %306 = arith.addf %304, %305 : vector<8x32xf32>
    %307 = arith.negf %306 : vector<8x32xf32>
    %308 = math.exp %307 : vector<8x32xf32>
    %cst_67 = arith.constant 1.000000e+00 : f32
    %309 = vector.broadcast %cst_67 : f32 to vector<8x32xf32>
    %310 = arith.addf %309, %308 : vector<8x32xf32>
    %311 = arith.divf %309, %310 : vector<8x32xf32>
    %312 = vector.extract_strided_slice %300 {offsets = [0, 32], sizes = [8, 32], strides = [1, 1]} : vector<8x96xf32> to vector<8x32xf32>
    %313 = vector.extract_strided_slice %303 {offsets = [0, 32], sizes = [8, 32], strides = [1, 1]} : vector<8x96xf32> to vector<8x32xf32>
    %314 = arith.addf %312, %313 : vector<8x32xf32>
    %315 = arith.negf %314 : vector<8x32xf32>
    %316 = math.exp %315 : vector<8x32xf32>
    %cst_68 = arith.constant 1.000000e+00 : f32
    %317 = vector.broadcast %cst_68 : f32 to vector<8x32xf32>
    %318 = arith.addf %317, %316 : vector<8x32xf32>
    %319 = arith.divf %317, %318 : vector<8x32xf32>
    %320 = vector.extract_strided_slice %300 {offsets = [0, 64], sizes = [8, 32], strides = [1, 1]} : vector<8x96xf32> to vector<8x32xf32>
    %321 = vector.extract_strided_slice %303 {offsets = [0, 64], sizes = [8, 32], strides = [1, 1]} : vector<8x96xf32> to vector<8x32xf32>
    %322 = arith.mulf %311, %321 : vector<8x32xf32>
    %323 = arith.addf %320, %322 : vector<8x32xf32>
    %324 = math.tanh %323 : vector<8x32xf32>
    %cst_69 = arith.constant 1.000000e+00 : f32
    %325 = vector.broadcast %cst_69 : f32 to vector<8x32xf32>
    %326 = arith.subf %325, %319 : vector<8x32xf32>
    %327 = arith.mulf %326, %324 : vector<8x32xf32>
    %328 = arith.mulf %319, %269 : vector<8x32xf32>
    %329 = arith.addf %327, %328 : vector<8x32xf32>
    %cst_70 = arith.constant 0.000000e+00 : f32
    %330 = vector.shape_cast %31 : vector<8x1xi1> to vector<8x1xi1>
    %331 = vector.broadcast %330 : vector<8x1xi1> to vector<8x32xi1>
    %332 = vector.broadcast %cst_70 : f32 to vector<8x32xf32>
    %333 = arith.select %331, %299, %332 : vector<8x32xi1>, vector<8x32xf32>
    %c24 = arith.constant 24 : index
    %c0_71 = arith.constant 0 : index
    %334 = vector.load %arg16[%c24, %c0_71] : memref<64x64xf32, #tpu.memory_space<vmem>>, vector<8x32xf32>
    tpu.vector_store %arg16[%c24, %c0_71], %333 {strides = array<i32>} : memref<64x64xf32, #tpu.memory_space<vmem>>, vector<8x32xf32>,
    %cst_72 = arith.constant 0.000000e+00 : f32
    %335 = vector.shape_cast %33 : vector<8x1xi1> to vector<8x1xi1>
    %336 = vector.broadcast %335 : vector<8x1xi1> to vector<8x32xi1>
    %337 = vector.broadcast %cst_72 : f32 to vector<8x32xf32>
    %338 = arith.select %336, %329, %337 : vector<8x32xi1>, vector<8x32xf32>
    %c32_73 = arith.constant 32 : index
    %c32_74 = arith.constant 32 : index
    %339 = vector.load %arg16[%c32_73, %c32_74] : memref<64x64xf32, #tpu.memory_space<vmem>>, vector<8x32xf32>
    tpu.vector_store %arg16[%c32_73, %c32_74], %338 {strides = array<i32>} : memref<64x64xf32, #tpu.memory_space<vmem>>, vector<8x32xf32>,
    %340 = vector.shape_cast %31 : vector<8x1xi1> to vector<8x1xi1>
    %341 = vector.broadcast %340 : vector<8x1xi1> to vector<8x32xi1>
    %342 = arith.select %341, %299, %266 : vector<8x32xi1>, vector<8x32xf32>
    %343 = vector.shape_cast %33 : vector<8x1xi1> to vector<8x1xi1>
    %344 = vector.broadcast %343 : vector<8x1xi1> to vector<8x32xi1>
    %345 = arith.select %344, %329, %269 : vector<8x32xi1>, vector<8x32xf32>
    %346 = vector.extract_strided_slice %13 {offsets = [32, 0], sizes = [8, 96], strides = [1, 1]} : vector<64x96xf32> to vector<8x96xf32>
    %cst_75 = arith.constant dense<0.000000e+00> : vector<8x96xf32>
    %347 = tpu.matmul %342, %20, %cst_75 {dimension_numbers = #tpu.dot_dimension_numbers<[1], [0], [0], [1], [0, 0, 1, 1], [], []>} : vector<8x32xf32>, vector<32x96xf32>, vector<8x96xf32> -> vector<8x96xf32>
    %348 = vector.broadcast %21 : vector<1x96xf32> to vector<8x96xf32>
    %349 = arith.addf %347, %348 : vector<8x96xf32>
    %350 = vector.extract_strided_slice %346 {offsets = [0, 0], sizes = [8, 32], strides = [1, 1]} : vector<8x96xf32> to vector<8x32xf32>
    %351 = vector.extract_strided_slice %349 {offsets = [0, 0], sizes = [8, 32], strides = [1, 1]} : vector<8x96xf32> to vector<8x32xf32>
    %352 = arith.addf %350, %351 : vector<8x32xf32>
    %353 = arith.negf %352 : vector<8x32xf32>
    %354 = math.exp %353 : vector<8x32xf32>
    %cst_76 = arith.constant 1.000000e+00 : f32
    %355 = vector.broadcast %cst_76 : f32 to vector<8x32xf32>
    %356 = arith.addf %355, %354 : vector<8x32xf32>
    %357 = arith.divf %355, %356 : vector<8x32xf32>
    %358 = vector.extract_strided_slice %346 {offsets = [0, 32], sizes = [8, 32], strides = [1, 1]} : vector<8x96xf32> to vector<8x32xf32>
    %359 = vector.extract_strided_slice %349 {offsets = [0, 32], sizes = [8, 32], strides = [1, 1]} : vector<8x96xf32> to vector<8x32xf32>
    %360 = arith.addf %358, %359 : vector<8x32xf32>
    %361 = arith.negf %360 : vector<8x32xf32>
    %362 = math.exp %361 : vector<8x32xf32>
    %cst_77 = arith.constant 1.000000e+00 : f32
    %363 = vector.broadcast %cst_77 : f32 to vector<8x32xf32>
    %364 = arith.addf %363, %362 : vector<8x32xf32>
    %365 = arith.divf %363, %364 : vector<8x32xf32>
    %366 = vector.extract_strided_slice %346 {offsets = [0, 64], sizes = [8, 32], strides = [1, 1]} : vector<8x96xf32> to vector<8x32xf32>
    %367 = vector.extract_strided_slice %349 {offsets = [0, 64], sizes = [8, 32], strides = [1, 1]} : vector<8x96xf32> to vector<8x32xf32>
    %368 = arith.mulf %357, %367 : vector<8x32xf32>
    %369 = arith.addf %366, %368 : vector<8x32xf32>
    %370 = math.tanh %369 : vector<8x32xf32>
    %cst_78 = arith.constant 1.000000e+00 : f32
    %371 = vector.broadcast %cst_78 : f32 to vector<8x32xf32>
    %372 = arith.subf %371, %365 : vector<8x32xf32>
    %373 = arith.mulf %372, %370 : vector<8x32xf32>
    %374 = arith.mulf %365, %342 : vector<8x32xf32>
    %375 = arith.addf %373, %374 : vector<8x32xf32>
    %376 = vector.extract_strided_slice %18 {offsets = [24, 0], sizes = [8, 96], strides = [1, 1]} : vector<64x96xf32> to vector<8x96xf32>
    %cst_79 = arith.constant dense<0.000000e+00> : vector<8x96xf32>
    %377 = tpu.matmul %345, %22, %cst_79 {dimension_numbers = #tpu.dot_dimension_numbers<[1], [0], [0], [1], [0, 0, 1, 1], [], []>} : vector<8x32xf32>, vector<32x96xf32>, vector<8x96xf32> -> vector<8x96xf32>
    %378 = vector.broadcast %23 : vector<1x96xf32> to vector<8x96xf32>
    %379 = arith.addf %377, %378 : vector<8x96xf32>
    %380 = vector.extract_strided_slice %376 {offsets = [0, 0], sizes = [8, 32], strides = [1, 1]} : vector<8x96xf32> to vector<8x32xf32>
    %381 = vector.extract_strided_slice %379 {offsets = [0, 0], sizes = [8, 32], strides = [1, 1]} : vector<8x96xf32> to vector<8x32xf32>
    %382 = arith.addf %380, %381 : vector<8x32xf32>
    %383 = arith.negf %382 : vector<8x32xf32>
    %384 = math.exp %383 : vector<8x32xf32>
    %cst_80 = arith.constant 1.000000e+00 : f32
    %385 = vector.broadcast %cst_80 : f32 to vector<8x32xf32>
    %386 = arith.addf %385, %384 : vector<8x32xf32>
    %387 = arith.divf %385, %386 : vector<8x32xf32>
    %388 = vector.extract_strided_slice %376 {offsets = [0, 32], sizes = [8, 32], strides = [1, 1]} : vector<8x96xf32> to vector<8x32xf32>
    %389 = vector.extract_strided_slice %379 {offsets = [0, 32], sizes = [8, 32], strides = [1, 1]} : vector<8x96xf32> to vector<8x32xf32>
    %390 = arith.addf %388, %389 : vector<8x32xf32>
    %391 = arith.negf %390 : vector<8x32xf32>
    %392 = math.exp %391 : vector<8x32xf32>
    %cst_81 = arith.constant 1.000000e+00 : f32
    %393 = vector.broadcast %cst_81 : f32 to vector<8x32xf32>
    %394 = arith.addf %393, %392 : vector<8x32xf32>
    %395 = arith.divf %393, %394 : vector<8x32xf32>
    %396 = vector.extract_strided_slice %376 {offsets = [0, 64], sizes = [8, 32], strides = [1, 1]} : vector<8x96xf32> to vector<8x32xf32>
    %397 = vector.extract_strided_slice %379 {offsets = [0, 64], sizes = [8, 32], strides = [1, 1]} : vector<8x96xf32> to vector<8x32xf32>
    %398 = arith.mulf %387, %397 : vector<8x32xf32>
    %399 = arith.addf %396, %398 : vector<8x32xf32>
    %400 = math.tanh %399 : vector<8x32xf32>
    %cst_82 = arith.constant 1.000000e+00 : f32
    %401 = vector.broadcast %cst_82 : f32 to vector<8x32xf32>
    %402 = arith.subf %401, %395 : vector<8x32xf32>
    %403 = arith.mulf %402, %400 : vector<8x32xf32>
    %404 = arith.mulf %395, %345 : vector<8x32xf32>
    %405 = arith.addf %403, %404 : vector<8x32xf32>
    %cst_83 = arith.constant 0.000000e+00 : f32
    %406 = vector.shape_cast %33 : vector<8x1xi1> to vector<8x1xi1>
    %407 = vector.broadcast %406 : vector<8x1xi1> to vector<8x32xi1>
    %408 = vector.broadcast %cst_83 : f32 to vector<8x32xf32>
    %409 = arith.select %407, %375, %408 : vector<8x32xi1>, vector<8x32xf32>
    %c32_84 = arith.constant 32 : index
    %c0_85 = arith.constant 0 : index
    %410 = vector.load %arg16[%c32_84, %c0_85] : memref<64x64xf32, #tpu.memory_space<vmem>>, vector<8x32xf32>
    tpu.vector_store %arg16[%c32_84, %c0_85], %409 {strides = array<i32>} : memref<64x64xf32, #tpu.memory_space<vmem>>, vector<8x32xf32>,
    %cst_86 = arith.constant 0.000000e+00 : f32
    %411 = vector.shape_cast %31 : vector<8x1xi1> to vector<8x1xi1>
    %412 = vector.broadcast %411 : vector<8x1xi1> to vector<8x32xi1>
    %413 = vector.broadcast %cst_86 : f32 to vector<8x32xf32>
    %414 = arith.select %412, %405, %413 : vector<8x32xi1>, vector<8x32xf32>
    %c24_87 = arith.constant 24 : index
    %c32_88 = arith.constant 32 : index
    %415 = vector.load %arg16[%c24_87, %c32_88] : memref<64x64xf32, #tpu.memory_space<vmem>>, vector<8x32xf32>
    tpu.vector_store %arg16[%c24_87, %c32_88], %414 {strides = array<i32>} : memref<64x64xf32, #tpu.memory_space<vmem>>, vector<8x32xf32>,
    %416 = vector.shape_cast %33 : vector<8x1xi1> to vector<8x1xi1>
    %417 = vector.broadcast %416 : vector<8x1xi1> to vector<8x32xi1>
    %418 = arith.select %417, %375, %342 : vector<8x32xi1>, vector<8x32xf32>
    %419 = vector.shape_cast %31 : vector<8x1xi1> to vector<8x1xi1>
    %420 = vector.broadcast %419 : vector<8x1xi1> to vector<8x32xi1>
    %421 = arith.select %420, %405, %345 : vector<8x32xi1>, vector<8x32xf32>
    %422 = vector.extract_strided_slice %13 {offsets = [40, 0], sizes = [8, 96], strides = [1, 1]} : vector<64x96xf32> to vector<8x96xf32>
    %cst_89 = arith.constant dense<0.000000e+00> : vector<8x96xf32>
    %423 = tpu.matmul %418, %20, %cst_89 {dimension_numbers = #tpu.dot_dimension_numbers<[1], [0], [0], [1], [0, 0, 1, 1], [], []>} : vector<8x32xf32>, vector<32x96xf32>, vector<8x96xf32> -> vector<8x96xf32>
    %424 = vector.broadcast %21 : vector<1x96xf32> to vector<8x96xf32>
    %425 = arith.addf %423, %424 : vector<8x96xf32>
    %426 = vector.extract_strided_slice %422 {offsets = [0, 0], sizes = [8, 32], strides = [1, 1]} : vector<8x96xf32> to vector<8x32xf32>
    %427 = vector.extract_strided_slice %425 {offsets = [0, 0], sizes = [8, 32], strides = [1, 1]} : vector<8x96xf32> to vector<8x32xf32>
    %428 = arith.addf %426, %427 : vector<8x32xf32>
    %429 = arith.negf %428 : vector<8x32xf32>
    %430 = math.exp %429 : vector<8x32xf32>
    %cst_90 = arith.constant 1.000000e+00 : f32
    %431 = vector.broadcast %cst_90 : f32 to vector<8x32xf32>
    %432 = arith.addf %431, %430 : vector<8x32xf32>
    %433 = arith.divf %431, %432 : vector<8x32xf32>
    %434 = vector.extract_strided_slice %422 {offsets = [0, 32], sizes = [8, 32], strides = [1, 1]} : vector<8x96xf32> to vector<8x32xf32>
    %435 = vector.extract_strided_slice %425 {offsets = [0, 32], sizes = [8, 32], strides = [1, 1]} : vector<8x96xf32> to vector<8x32xf32>
    %436 = arith.addf %434, %435 : vector<8x32xf32>
    %437 = arith.negf %436 : vector<8x32xf32>
    %438 = math.exp %437 : vector<8x32xf32>
    %cst_91 = arith.constant 1.000000e+00 : f32
    %439 = vector.broadcast %cst_91 : f32 to vector<8x32xf32>
    %440 = arith.addf %439, %438 : vector<8x32xf32>
    %441 = arith.divf %439, %440 : vector<8x32xf32>
    %442 = vector.extract_strided_slice %422 {offsets = [0, 64], sizes = [8, 32], strides = [1, 1]} : vector<8x96xf32> to vector<8x32xf32>
    %443 = vector.extract_strided_slice %425 {offsets = [0, 64], sizes = [8, 32], strides = [1, 1]} : vector<8x96xf32> to vector<8x32xf32>
    %444 = arith.mulf %433, %443 : vector<8x32xf32>
    %445 = arith.addf %442, %444 : vector<8x32xf32>
    %446 = math.tanh %445 : vector<8x32xf32>
    %cst_92 = arith.constant 1.000000e+00 : f32
    %447 = vector.broadcast %cst_92 : f32 to vector<8x32xf32>
    %448 = arith.subf %447, %441 : vector<8x32xf32>
    %449 = arith.mulf %448, %446 : vector<8x32xf32>
    %450 = arith.mulf %441, %418 : vector<8x32xf32>
    %451 = arith.addf %449, %450 : vector<8x32xf32>
    %452 = vector.extract_strided_slice %18 {offsets = [16, 0], sizes = [8, 96], strides = [1, 1]} : vector<64x96xf32> to vector<8x96xf32>
    %cst_93 = arith.constant dense<0.000000e+00> : vector<8x96xf32>
    %453 = tpu.matmul %421, %22, %cst_93 {dimension_numbers = #tpu.dot_dimension_numbers<[1], [0], [0], [1], [0, 0, 1, 1], [], []>} : vector<8x32xf32>, vector<32x96xf32>, vector<8x96xf32> -> vector<8x96xf32>
    %454 = vector.broadcast %23 : vector<1x96xf32> to vector<8x96xf32>
    %455 = arith.addf %453, %454 : vector<8x96xf32>
    %456 = vector.extract_strided_slice %452 {offsets = [0, 0], sizes = [8, 32], strides = [1, 1]} : vector<8x96xf32> to vector<8x32xf32>
    %457 = vector.extract_strided_slice %455 {offsets = [0, 0], sizes = [8, 32], strides = [1, 1]} : vector<8x96xf32> to vector<8x32xf32>
    %458 = arith.addf %456, %457 : vector<8x32xf32>
    %459 = arith.negf %458 : vector<8x32xf32>
    %460 = math.exp %459 : vector<8x32xf32>
    %cst_94 = arith.constant 1.000000e+00 : f32
    %461 = vector.broadcast %cst_94 : f32 to vector<8x32xf32>
    %462 = arith.addf %461, %460 : vector<8x32xf32>
    %463 = arith.divf %461, %462 : vector<8x32xf32>
    %464 = vector.extract_strided_slice %452 {offsets = [0, 32], sizes = [8, 32], strides = [1, 1]} : vector<8x96xf32> to vector<8x32xf32>
    %465 = vector.extract_strided_slice %455 {offsets = [0, 32], sizes = [8, 32], strides = [1, 1]} : vector<8x96xf32> to vector<8x32xf32>
    %466 = arith.addf %464, %465 : vector<8x32xf32>
    %467 = arith.negf %466 : vector<8x32xf32>
    %468 = math.exp %467 : vector<8x32xf32>
    %cst_95 = arith.constant 1.000000e+00 : f32
    %469 = vector.broadcast %cst_95 : f32 to vector<8x32xf32>
    %470 = arith.addf %469, %468 : vector<8x32xf32>
    %471 = arith.divf %469, %470 : vector<8x32xf32>
    %472 = vector.extract_strided_slice %452 {offsets = [0, 64], sizes = [8, 32], strides = [1, 1]} : vector<8x96xf32> to vector<8x32xf32>
    %473 = vector.extract_strided_slice %455 {offsets = [0, 64], sizes = [8, 32], strides = [1, 1]} : vector<8x96xf32> to vector<8x32xf32>
    %474 = arith.mulf %463, %473 : vector<8x32xf32>
    %475 = arith.addf %472, %474 : vector<8x32xf32>
    %476 = math.tanh %475 : vector<8x32xf32>
    %cst_96 = arith.constant 1.000000e+00 : f32
    %477 = vector.broadcast %cst_96 : f32 to vector<8x32xf32>
    %478 = arith.subf %477, %471 : vector<8x32xf32>
    %479 = arith.mulf %478, %476 : vector<8x32xf32>
    %480 = arith.mulf %471, %421 : vector<8x32xf32>
    %481 = arith.addf %479, %480 : vector<8x32xf32>
    %cst_97 = arith.constant 0.000000e+00 : f32
    %482 = vector.shape_cast %35 : vector<8x1xi1> to vector<8x1xi1>
    %483 = vector.broadcast %482 : vector<8x1xi1> to vector<8x32xi1>
    %484 = vector.broadcast %cst_97 : f32 to vector<8x32xf32>
    %485 = arith.select %483, %451, %484 : vector<8x32xi1>, vector<8x32xf32>
    %c40_98 = arith.constant 40 : index
    %c0_99 = arith.constant 0 : index
    %486 = vector.load %arg16[%c40_98, %c0_99] : memref<64x64xf32, #tpu.memory_space<vmem>>, vector<8x32xf32>
    tpu.vector_store %arg16[%c40_98, %c0_99], %485 {strides = array<i32>} : memref<64x64xf32, #tpu.memory_space<vmem>>, vector<8x32xf32>,
    %cst_100 = arith.constant 0.000000e+00 : f32
    %487 = vector.shape_cast %29 : vector<8x1xi1> to vector<8x1xi1>
    %488 = vector.broadcast %487 : vector<8x1xi1> to vector<8x32xi1>
    %489 = vector.broadcast %cst_100 : f32 to vector<8x32xf32>
    %490 = arith.select %488, %481, %489 : vector<8x32xi1>, vector<8x32xf32>
    %c16_101 = arith.constant 16 : index
    %c32_102 = arith.constant 32 : index
    %491 = vector.load %arg16[%c16_101, %c32_102] : memref<64x64xf32, #tpu.memory_space<vmem>>, vector<8x32xf32>
    tpu.vector_store %arg16[%c16_101, %c32_102], %490 {strides = array<i32>} : memref<64x64xf32, #tpu.memory_space<vmem>>, vector<8x32xf32>,
    %492 = vector.shape_cast %35 : vector<8x1xi1> to vector<8x1xi1>
    %493 = vector.broadcast %492 : vector<8x1xi1> to vector<8x32xi1>
    %494 = arith.select %493, %451, %418 : vector<8x32xi1>, vector<8x32xf32>
    %495 = vector.shape_cast %29 : vector<8x1xi1> to vector<8x1xi1>
    %496 = vector.broadcast %495 : vector<8x1xi1> to vector<8x32xi1>
    %497 = arith.select %496, %481, %421 : vector<8x32xi1>, vector<8x32xf32>
    %498 = vector.extract_strided_slice %13 {offsets = [48, 0], sizes = [8, 96], strides = [1, 1]} : vector<64x96xf32> to vector<8x96xf32>
    %cst_103 = arith.constant dense<0.000000e+00> : vector<8x96xf32>
    %499 = tpu.matmul %494, %20, %cst_103 {dimension_numbers = #tpu.dot_dimension_numbers<[1], [0], [0], [1], [0, 0, 1, 1], [], []>} : vector<8x32xf32>, vector<32x96xf32>, vector<8x96xf32> -> vector<8x96xf32>
    %500 = vector.broadcast %21 : vector<1x96xf32> to vector<8x96xf32>
    %501 = arith.addf %499, %500 : vector<8x96xf32>
    %502 = vector.extract_strided_slice %498 {offsets = [0, 0], sizes = [8, 32], strides = [1, 1]} : vector<8x96xf32> to vector<8x32xf32>
    %503 = vector.extract_strided_slice %501 {offsets = [0, 0], sizes = [8, 32], strides = [1, 1]} : vector<8x96xf32> to vector<8x32xf32>
    %504 = arith.addf %502, %503 : vector<8x32xf32>
    %505 = arith.negf %504 : vector<8x32xf32>
    %506 = math.exp %505 : vector<8x32xf32>
    %cst_104 = arith.constant 1.000000e+00 : f32
    %507 = vector.broadcast %cst_104 : f32 to vector<8x32xf32>
    %508 = arith.addf %507, %506 : vector<8x32xf32>
    %509 = arith.divf %507, %508 : vector<8x32xf32>
    %510 = vector.extract_strided_slice %498 {offsets = [0, 32], sizes = [8, 32], strides = [1, 1]} : vector<8x96xf32> to vector<8x32xf32>
    %511 = vector.extract_strided_slice %501 {offsets = [0, 32], sizes = [8, 32], strides = [1, 1]} : vector<8x96xf32> to vector<8x32xf32>
    %512 = arith.addf %510, %511 : vector<8x32xf32>
    %513 = arith.negf %512 : vector<8x32xf32>
    %514 = math.exp %513 : vector<8x32xf32>
    %cst_105 = arith.constant 1.000000e+00 : f32
    %515 = vector.broadcast %cst_105 : f32 to vector<8x32xf32>
    %516 = arith.addf %515, %514 : vector<8x32xf32>
    %517 = arith.divf %515, %516 : vector<8x32xf32>
    %518 = vector.extract_strided_slice %498 {offsets = [0, 64], sizes = [8, 32], strides = [1, 1]} : vector<8x96xf32> to vector<8x32xf32>
    %519 = vector.extract_strided_slice %501 {offsets = [0, 64], sizes = [8, 32], strides = [1, 1]} : vector<8x96xf32> to vector<8x32xf32>
    %520 = arith.mulf %509, %519 : vector<8x32xf32>
    %521 = arith.addf %518, %520 : vector<8x32xf32>
    %522 = math.tanh %521 : vector<8x32xf32>
    %cst_106 = arith.constant 1.000000e+00 : f32
    %523 = vector.broadcast %cst_106 : f32 to vector<8x32xf32>
    %524 = arith.subf %523, %517 : vector<8x32xf32>
    %525 = arith.mulf %524, %522 : vector<8x32xf32>
    %526 = arith.mulf %517, %494 : vector<8x32xf32>
    %527 = arith.addf %525, %526 : vector<8x32xf32>
    %528 = vector.extract_strided_slice %18 {offsets = [8, 0], sizes = [8, 96], strides = [1, 1]} : vector<64x96xf32> to vector<8x96xf32>
    %cst_107 = arith.constant dense<0.000000e+00> : vector<8x96xf32>
    %529 = tpu.matmul %497, %22, %cst_107 {dimension_numbers = #tpu.dot_dimension_numbers<[1], [0], [0], [1], [0, 0, 1, 1], [], []>} : vector<8x32xf32>, vector<32x96xf32>, vector<8x96xf32> -> vector<8x96xf32>
    %530 = vector.broadcast %23 : vector<1x96xf32> to vector<8x96xf32>
    %531 = arith.addf %529, %530 : vector<8x96xf32>
    %532 = vector.extract_strided_slice %528 {offsets = [0, 0], sizes = [8, 32], strides = [1, 1]} : vector<8x96xf32> to vector<8x32xf32>
    %533 = vector.extract_strided_slice %531 {offsets = [0, 0], sizes = [8, 32], strides = [1, 1]} : vector<8x96xf32> to vector<8x32xf32>
    %534 = arith.addf %532, %533 : vector<8x32xf32>
    %535 = arith.negf %534 : vector<8x32xf32>
    %536 = math.exp %535 : vector<8x32xf32>
    %cst_108 = arith.constant 1.000000e+00 : f32
    %537 = vector.broadcast %cst_108 : f32 to vector<8x32xf32>
    %538 = arith.addf %537, %536 : vector<8x32xf32>
    %539 = arith.divf %537, %538 : vector<8x32xf32>
    %540 = vector.extract_strided_slice %528 {offsets = [0, 32], sizes = [8, 32], strides = [1, 1]} : vector<8x96xf32> to vector<8x32xf32>
    %541 = vector.extract_strided_slice %531 {offsets = [0, 32], sizes = [8, 32], strides = [1, 1]} : vector<8x96xf32> to vector<8x32xf32>
    %542 = arith.addf %540, %541 : vector<8x32xf32>
    %543 = arith.negf %542 : vector<8x32xf32>
    %544 = math.exp %543 : vector<8x32xf32>
    %cst_109 = arith.constant 1.000000e+00 : f32
    %545 = vector.broadcast %cst_109 : f32 to vector<8x32xf32>
    %546 = arith.addf %545, %544 : vector<8x32xf32>
    %547 = arith.divf %545, %546 : vector<8x32xf32>
    %548 = vector.extract_strided_slice %528 {offsets = [0, 64], sizes = [8, 32], strides = [1, 1]} : vector<8x96xf32> to vector<8x32xf32>
    %549 = vector.extract_strided_slice %531 {offsets = [0, 64], sizes = [8, 32], strides = [1, 1]} : vector<8x96xf32> to vector<8x32xf32>
    %550 = arith.mulf %539, %549 : vector<8x32xf32>
    %551 = arith.addf %548, %550 : vector<8x32xf32>
    %552 = math.tanh %551 : vector<8x32xf32>
    %cst_110 = arith.constant 1.000000e+00 : f32
    %553 = vector.broadcast %cst_110 : f32 to vector<8x32xf32>
    %554 = arith.subf %553, %547 : vector<8x32xf32>
    %555 = arith.mulf %554, %552 : vector<8x32xf32>
    %556 = arith.mulf %547, %497 : vector<8x32xf32>
    %557 = arith.addf %555, %556 : vector<8x32xf32>
    %cst_111 = arith.constant 0.000000e+00 : f32
    %558 = vector.shape_cast %37 : vector<8x1xi1> to vector<8x1xi1>
    %559 = vector.broadcast %558 : vector<8x1xi1> to vector<8x32xi1>
    %560 = vector.broadcast %cst_111 : f32 to vector<8x32xf32>
    %561 = arith.select %559, %527, %560 : vector<8x32xi1>, vector<8x32xf32>
    %c48_112 = arith.constant 48 : index
    %c0_113 = arith.constant 0 : index
    %562 = vector.load %arg16[%c48_112, %c0_113] : memref<64x64xf32, #tpu.memory_space<vmem>>, vector<8x32xf32>
    tpu.vector_store %arg16[%c48_112, %c0_113], %561 {strides = array<i32>} : memref<64x64xf32, #tpu.memory_space<vmem>>, vector<8x32xf32>,
    %cst_114 = arith.constant 0.000000e+00 : f32
    %563 = vector.shape_cast %27 : vector<8x1xi1> to vector<8x1xi1>
    %564 = vector.broadcast %563 : vector<8x1xi1> to vector<8x32xi1>
    %565 = vector.broadcast %cst_114 : f32 to vector<8x32xf32>
    %566 = arith.select %564, %557, %565 : vector<8x32xi1>, vector<8x32xf32>
    %c8_115 = arith.constant 8 : index
    %c32_116 = arith.constant 32 : index
    %567 = vector.load %arg16[%c8_115, %c32_116] : memref<64x64xf32, #tpu.memory_space<vmem>>, vector<8x32xf32>
    tpu.vector_store %arg16[%c8_115, %c32_116], %566 {strides = array<i32>} : memref<64x64xf32, #tpu.memory_space<vmem>>, vector<8x32xf32>,
    %568 = vector.shape_cast %37 : vector<8x1xi1> to vector<8x1xi1>
    %569 = vector.broadcast %568 : vector<8x1xi1> to vector<8x32xi1>
    %570 = arith.select %569, %527, %494 : vector<8x32xi1>, vector<8x32xf32>
    %571 = vector.shape_cast %27 : vector<8x1xi1> to vector<8x1xi1>
    %572 = vector.broadcast %571 : vector<8x1xi1> to vector<8x32xi1>
    %573 = arith.select %572, %557, %497 : vector<8x32xi1>, vector<8x32xf32>
    %574 = vector.extract_strided_slice %13 {offsets = [56, 0], sizes = [8, 96], strides = [1, 1]} : vector<64x96xf32> to vector<8x96xf32>
    %cst_117 = arith.constant dense<0.000000e+00> : vector<8x96xf32>
    %575 = tpu.matmul %570, %20, %cst_117 {dimension_numbers = #tpu.dot_dimension_numbers<[1], [0], [0], [1], [0, 0, 1, 1], [], []>} : vector<8x32xf32>, vector<32x96xf32>, vector<8x96xf32> -> vector<8x96xf32>
    %576 = vector.broadcast %21 : vector<1x96xf32> to vector<8x96xf32>
    %577 = arith.addf %575, %576 : vector<8x96xf32>
    %578 = vector.extract_strided_slice %574 {offsets = [0, 0], sizes = [8, 32], strides = [1, 1]} : vector<8x96xf32> to vector<8x32xf32>
    %579 = vector.extract_strided_slice %577 {offsets = [0, 0], sizes = [8, 32], strides = [1, 1]} : vector<8x96xf32> to vector<8x32xf32>
    %580 = arith.addf %578, %579 : vector<8x32xf32>
    %581 = arith.negf %580 : vector<8x32xf32>
    %582 = math.exp %581 : vector<8x32xf32>
    %cst_118 = arith.constant 1.000000e+00 : f32
    %583 = vector.broadcast %cst_118 : f32 to vector<8x32xf32>
    %584 = arith.addf %583, %582 : vector<8x32xf32>
    %585 = arith.divf %583, %584 : vector<8x32xf32>
    %586 = vector.extract_strided_slice %574 {offsets = [0, 32], sizes = [8, 32], strides = [1, 1]} : vector<8x96xf32> to vector<8x32xf32>
    %587 = vector.extract_strided_slice %577 {offsets = [0, 32], sizes = [8, 32], strides = [1, 1]} : vector<8x96xf32> to vector<8x32xf32>
    %588 = arith.addf %586, %587 : vector<8x32xf32>
    %589 = arith.negf %588 : vector<8x32xf32>
    %590 = math.exp %589 : vector<8x32xf32>
    %cst_119 = arith.constant 1.000000e+00 : f32
    %591 = vector.broadcast %cst_119 : f32 to vector<8x32xf32>
    %592 = arith.addf %591, %590 : vector<8x32xf32>
    %593 = arith.divf %591, %592 : vector<8x32xf32>
    %594 = vector.extract_strided_slice %574 {offsets = [0, 64], sizes = [8, 32], strides = [1, 1]} : vector<8x96xf32> to vector<8x32xf32>
    %595 = vector.extract_strided_slice %577 {offsets = [0, 64], sizes = [8, 32], strides = [1, 1]} : vector<8x96xf32> to vector<8x32xf32>
    %596 = arith.mulf %585, %595 : vector<8x32xf32>
    %597 = arith.addf %594, %596 : vector<8x32xf32>
    %598 = math.tanh %597 : vector<8x32xf32>
    %cst_120 = arith.constant 1.000000e+00 : f32
    %599 = vector.broadcast %cst_120 : f32 to vector<8x32xf32>
    %600 = arith.subf %599, %593 : vector<8x32xf32>
    %601 = arith.mulf %600, %598 : vector<8x32xf32>
    %602 = arith.mulf %593, %570 : vector<8x32xf32>
    %603 = arith.addf %601, %602 : vector<8x32xf32>
    %604 = vector.extract_strided_slice %18 {offsets = [0, 0], sizes = [8, 96], strides = [1, 1]} : vector<64x96xf32> to vector<8x96xf32>
    %cst_121 = arith.constant dense<0.000000e+00> : vector<8x96xf32>
    %605 = tpu.matmul %573, %22, %cst_121 {dimension_numbers = #tpu.dot_dimension_numbers<[1], [0], [0], [1], [0, 0, 1, 1], [], []>} : vector<8x32xf32>, vector<32x96xf32>, vector<8x96xf32> -> vector<8x96xf32>
    %606 = vector.broadcast %23 : vector<1x96xf32> to vector<8x96xf32>
    %607 = arith.addf %605, %606 : vector<8x96xf32>
    %608 = vector.extract_strided_slice %604 {offsets = [0, 0], sizes = [8, 32], strides = [1, 1]} : vector<8x96xf32> to vector<8x32xf32>
    %609 = vector.extract_strided_slice %607 {offsets = [0, 0], sizes = [8, 32], strides = [1, 1]} : vector<8x96xf32> to vector<8x32xf32>
    %610 = arith.addf %608, %609 : vector<8x32xf32>
    %611 = arith.negf %610 : vector<8x32xf32>
    %612 = math.exp %611 : vector<8x32xf32>
    %cst_122 = arith.constant 1.000000e+00 : f32
    %613 = vector.broadcast %cst_122 : f32 to vector<8x32xf32>
    %614 = arith.addf %613, %612 : vector<8x32xf32>
    %615 = arith.divf %613, %614 : vector<8x32xf32>
    %616 = vector.extract_strided_slice %604 {offsets = [0, 32], sizes = [8, 32], strides = [1, 1]} : vector<8x96xf32> to vector<8x32xf32>
    %617 = vector.extract_strided_slice %607 {offsets = [0, 32], sizes = [8, 32], strides = [1, 1]} : vector<8x96xf32> to vector<8x32xf32>
    %618 = arith.addf %616, %617 : vector<8x32xf32>
    %619 = arith.negf %618 : vector<8x32xf32>
    %620 = math.exp %619 : vector<8x32xf32>
    %cst_123 = arith.constant 1.000000e+00 : f32
    %621 = vector.broadcast %cst_123 : f32 to vector<8x32xf32>
    %622 = arith.addf %621, %620 : vector<8x32xf32>
    %623 = arith.divf %621, %622 : vector<8x32xf32>
    %624 = vector.extract_strided_slice %604 {offsets = [0, 64], sizes = [8, 32], strides = [1, 1]} : vector<8x96xf32> to vector<8x32xf32>
    %625 = vector.extract_strided_slice %607 {offsets = [0, 64], sizes = [8, 32], strides = [1, 1]} : vector<8x96xf32> to vector<8x32xf32>
    %626 = arith.mulf %615, %625 : vector<8x32xf32>
    %627 = arith.addf %624, %626 : vector<8x32xf32>
    %628 = math.tanh %627 : vector<8x32xf32>
    %cst_124 = arith.constant 1.000000e+00 : f32
    %629 = vector.broadcast %cst_124 : f32 to vector<8x32xf32>
    %630 = arith.subf %629, %623 : vector<8x32xf32>
    %631 = arith.mulf %630, %628 : vector<8x32xf32>
    %632 = arith.mulf %623, %573 : vector<8x32xf32>
    %633 = arith.addf %631, %632 : vector<8x32xf32>
    %cst_125 = arith.constant 0.000000e+00 : f32
    %634 = vector.shape_cast %39 : vector<8x1xi1> to vector<8x1xi1>
    %635 = vector.broadcast %634 : vector<8x1xi1> to vector<8x32xi1>
    %636 = vector.broadcast %cst_125 : f32 to vector<8x32xf32>
    %637 = arith.select %635, %603, %636 : vector<8x32xi1>, vector<8x32xf32>
    %c56_126 = arith.constant 56 : index
    %c0_127 = arith.constant 0 : index
    %638 = vector.load %arg16[%c56_126, %c0_127] : memref<64x64xf32, #tpu.memory_space<vmem>>, vector<8x32xf32>
    tpu.vector_store %arg16[%c56_126, %c0_127], %637 {strides = array<i32>} : memref<64x64xf32, #tpu.memory_space<vmem>>, vector<8x32xf32>,
    %cst_128 = arith.constant 0.000000e+00 : f32
    %639 = vector.shape_cast %25 : vector<8x1xi1> to vector<8x1xi1>
    %640 = vector.broadcast %639 : vector<8x1xi1> to vector<8x32xi1>
    %641 = vector.broadcast %cst_128 : f32 to vector<8x32xf32>
    %642 = arith.select %640, %633, %641 : vector<8x32xi1>, vector<8x32xf32>
    %c0_129 = arith.constant 0 : index
    %c32_130 = arith.constant 32 : index
    %643 = vector.load %arg16[%c0_129, %c32_130] : memref<64x64xf32, #tpu.memory_space<vmem>>, vector<8x32xf32>
    tpu.vector_store %arg16[%c0_129, %c32_130], %642 {strides = array<i32>} : memref<64x64xf32, #tpu.memory_space<vmem>>, vector<8x32xf32>,
    %c0_131 = arith.constant 0 : index
    %c0_132 = arith.constant 0 : index
    %644 = vector.load %arg16[%c0_131, %c0_132] : memref<64x64xf32, #tpu.memory_space<vmem>>, vector<64x64xf32>
    %c0_133 = arith.constant 0 : index
    %c0_134 = arith.constant 0 : index
    %645 = vector.load %arg12[%c0_133, %c0_134] : memref<64x32xf32, #tpu.memory_space<vmem>>, vector<64x32xf32>
    %cst_135 = arith.constant dense<0.000000e+00> : vector<64x32xf32>
    %646 = tpu.matmul %644, %645, %cst_135 {dimension_numbers = #tpu.dot_dimension_numbers<[1], [0], [0], [1], [0, 0, 1, 1], [], []>} : vector<64x64xf32>, vector<64x32xf32>, vector<64x32xf32> -> vector<64x32xf32>
    %c0_136 = arith.constant 0 : index
    %c0_137 = arith.constant 0 : index
    %647 = vector.load %arg13[%c0_136, %c0_137] : memref<1x32xf32, #tpu.memory_space<vmem>>, vector<1x32xf32>
    %648 = vector.broadcast %647 : vector<1x32xf32> to vector<64x32xf32>
    %649 = arith.addf %646, %648 : vector<64x32xf32>
    %650 = math.tanh %649 : vector<64x32xf32>
    %c0_138 = arith.constant 0 : index
    %c0_139 = arith.constant 0 : index
    %651 = vector.load %arg14[%c0_138, %c0_139] : memref<32x1xf32, #tpu.memory_space<vmem>>, vector<32x1xf32>
    %cst_140 = arith.constant dense<0.000000e+00> : vector<64x1xf32>
    %652 = tpu.matmul %650, %651, %cst_140 {dimension_numbers = #tpu.dot_dimension_numbers<[1], [0], [0], [1], [0, 0, 1, 1], [], []>} : vector<64x32xf32>, vector<32x1xf32>, vector<64x1xf32> -> vector<64x1xf32>
    %653 = vector.extract_strided_slice %652 {offsets = [0, 0], sizes = [8, 1], strides = [1, 1]} : vector<64x1xf32> to vector<8x1xf32>
    %654 = vector.extract_strided_slice %652 {offsets = [8, 0], sizes = [8, 1], strides = [1, 1]} : vector<64x1xf32> to vector<8x1xf32>
    %655 = vector.extract_strided_slice %652 {offsets = [16, 0], sizes = [8, 1], strides = [1, 1]} : vector<64x1xf32> to vector<8x1xf32>
    %656 = vector.extract_strided_slice %652 {offsets = [24, 0], sizes = [8, 1], strides = [1, 1]} : vector<64x1xf32> to vector<8x1xf32>
    %657 = vector.extract_strided_slice %652 {offsets = [32, 0], sizes = [8, 1], strides = [1, 1]} : vector<64x1xf32> to vector<8x1xf32>
    %658 = vector.extract_strided_slice %652 {offsets = [40, 0], sizes = [8, 1], strides = [1, 1]} : vector<64x1xf32> to vector<8x1xf32>
    %659 = vector.extract_strided_slice %652 {offsets = [48, 0], sizes = [8, 1], strides = [1, 1]} : vector<64x1xf32> to vector<8x1xf32>
    %660 = vector.extract_strided_slice %652 {offsets = [56, 0], sizes = [8, 1], strides = [1, 1]} : vector<64x1xf32> to vector<8x1xf32>
    %661 = tpu.concatenate %653, %654, %655, %656, %657, %658, %659, %660 in 1 : vector<8x1xf32>, vector<8x1xf32>, vector<8x1xf32>, vector<8x1xf32>, vector<8x1xf32>, vector<8x1xf32>, vector<8x1xf32>, vector<8x1xf32> -> vector<8x8xf32>
    %662 = tpu.iota {dimensions = array<i32: 1>} : vector<8x8xi32>
    %663 = vector.broadcast %19 : vector<8x1xi32> to vector<8x8xi32>
    %664 = arith.cmpi slt, %662, %663 : vector<8x8xi32>
    %cst_141 = arith.constant -1.000000e+30 : f32
    %665 = vector.broadcast %cst_141 : f32 to vector<8x8xf32>
    %666 = arith.select %664, %661, %665 : vector<8x8xi1>, vector<8x8xf32>
    %cst_142 = arith.constant dense<0xFF800000> : vector<8xf32>
    %667 = vector.multi_reduction <maximumf>, %666, %cst_142 [1] : vector<8x8xf32> to vector<8xf32>
    %668 = vector.shape_cast %667 : vector<8xf32> to vector<8x1xf32>
    %669 = vector.broadcast %668 : vector<8x1xf32> to vector<8x8xf32>
    %670 = arith.subf %666, %669 : vector<8x8xf32>
    %671 = math.exp %670 : vector<8x8xf32>
    %cst_143 = arith.constant dense<0.000000e+00> : vector<8xf32>
    %672 = vector.multi_reduction <add>, %671, %cst_143 [1] : vector<8x8xf32> to vector<8xf32>
    %673 = vector.shape_cast %672 : vector<8xf32> to vector<8x1xf32>
    %674 = vector.broadcast %673 : vector<8x1xf32> to vector<8x8xf32>
    %675 = arith.divf %671, %674 : vector<8x8xf32>
    %cst_144 = arith.constant 0.000000e+00 : f32
    %676 = vector.broadcast %cst_144 : f32 to vector<8x64xf32>
    %677 = vector.extract_strided_slice %675 {offsets = [0, 0], sizes = [8, 1], strides = [1, 1]} : vector<8x8xf32> to vector<8x1xf32>
    %678 = vector.extract_strided_slice %644 {offsets = [0, 0], sizes = [8, 64], strides = [1, 1]} : vector<64x64xf32> to vector<8x64xf32>
    %679 = vector.broadcast %677 : vector<8x1xf32> to vector<8x64xf32>
    %680 = arith.mulf %679, %678 : vector<8x64xf32>
    %681 = arith.addf %676, %680 : vector<8x64xf32>
    %682 = vector.extract_strided_slice %675 {offsets = [0, 1], sizes = [8, 1], strides = [1, 1]} : vector<8x8xf32> to vector<8x1xf32>
    %683 = vector.extract_strided_slice %644 {offsets = [8, 0], sizes = [8, 64], strides = [1, 1]} : vector<64x64xf32> to vector<8x64xf32>
    %684 = vector.broadcast %682 : vector<8x1xf32> to vector<8x64xf32>
    %685 = arith.mulf %684, %683 : vector<8x64xf32>
    %686 = arith.addf %681, %685 : vector<8x64xf32>
    %687 = vector.extract_strided_slice %675 {offsets = [0, 2], sizes = [8, 1], strides = [1, 1]} : vector<8x8xf32> to vector<8x1xf32>
    %688 = vector.extract_strided_slice %644 {offsets = [16, 0], sizes = [8, 64], strides = [1, 1]} : vector<64x64xf32> to vector<8x64xf32>
    %689 = vector.broadcast %687 : vector<8x1xf32> to vector<8x64xf32>
    %690 = arith.mulf %689, %688 : vector<8x64xf32>
    %691 = arith.addf %686, %690 : vector<8x64xf32>
    %692 = vector.extract_strided_slice %675 {offsets = [0, 3], sizes = [8, 1], strides = [1, 1]} : vector<8x8xf32> to vector<8x1xf32>
    %693 = vector.extract_strided_slice %644 {offsets = [24, 0], sizes = [8, 64], strides = [1, 1]} : vector<64x64xf32> to vector<8x64xf32>
    %694 = vector.broadcast %692 : vector<8x1xf32> to vector<8x64xf32>
    %695 = arith.mulf %694, %693 : vector<8x64xf32>
    %696 = arith.addf %691, %695 : vector<8x64xf32>
    %697 = vector.extract_strided_slice %675 {offsets = [0, 4], sizes = [8, 1], strides = [1, 1]} : vector<8x8xf32> to vector<8x1xf32>
    %698 = vector.extract_strided_slice %644 {offsets = [32, 0], sizes = [8, 64], strides = [1, 1]} : vector<64x64xf32> to vector<8x64xf32>
    %699 = vector.broadcast %697 : vector<8x1xf32> to vector<8x64xf32>
    %700 = arith.mulf %699, %698 : vector<8x64xf32>
    %701 = arith.addf %696, %700 : vector<8x64xf32>
    %702 = vector.extract_strided_slice %675 {offsets = [0, 5], sizes = [8, 1], strides = [1, 1]} : vector<8x8xf32> to vector<8x1xf32>
    %703 = vector.extract_strided_slice %644 {offsets = [40, 0], sizes = [8, 64], strides = [1, 1]} : vector<64x64xf32> to vector<8x64xf32>
    %704 = vector.broadcast %702 : vector<8x1xf32> to vector<8x64xf32>
    %705 = arith.mulf %704, %703 : vector<8x64xf32>
    %706 = arith.addf %701, %705 : vector<8x64xf32>
    %707 = vector.extract_strided_slice %675 {offsets = [0, 6], sizes = [8, 1], strides = [1, 1]} : vector<8x8xf32> to vector<8x1xf32>
    %708 = vector.extract_strided_slice %644 {offsets = [48, 0], sizes = [8, 64], strides = [1, 1]} : vector<64x64xf32> to vector<8x64xf32>
    %709 = vector.broadcast %707 : vector<8x1xf32> to vector<8x64xf32>
    %710 = arith.mulf %709, %708 : vector<8x64xf32>
    %711 = arith.addf %706, %710 : vector<8x64xf32>
    %712 = vector.extract_strided_slice %675 {offsets = [0, 7], sizes = [8, 1], strides = [1, 1]} : vector<8x8xf32> to vector<8x1xf32>
    %713 = vector.extract_strided_slice %644 {offsets = [56, 0], sizes = [8, 64], strides = [1, 1]} : vector<64x64xf32> to vector<8x64xf32>
    %714 = vector.broadcast %712 : vector<8x1xf32> to vector<8x64xf32>
    %715 = arith.mulf %714, %713 : vector<8x64xf32>
    %716 = arith.addf %711, %715 : vector<8x64xf32>
    %cst_145 = arith.constant 0.000000e+00 : f32
    %717 = vector.broadcast %cst_145 : f32 to vector<8x56xf32>
    %718 = tpu.concatenate %716, %675, %717 in 1 : vector<8x64xf32>, vector<8x8xf32>, vector<8x56xf32> -> vector<8x128xf32>
    %c0_146 = arith.constant 0 : index
    %c0_147 = arith.constant 0 : index
    %719 = vector.load %arg15[%c0_146, %c0_147] : memref<8x128xf32, #tpu.memory_space<vmem>>, vector<8x128xf32>
    tpu.vector_store %arg15[%c0_146, %c0_147], %718 {strides = array<i32>} : memref<8x128xf32, #tpu.memory_space<vmem>>, vector<8x128xf32>,
    return
  }
  func.func @transform_0(%arg0: i32) -> (i32, i32, i32) {
    %c0_i32 = arith.constant 0 : i32
    %c0_i32_0 = arith.constant 0 : i32
    %c0_i32_1 = arith.constant 0 : i32
    return %arg0, %c0_i32, %c0_i32_0 : i32, i32, i32
  }
  func.func @transform_1(%arg0: i32) -> (i32, i32) {
    %c0_i32 = arith.constant 0 : i32
    %c0_i32_0 = arith.constant 0 : i32
    return %arg0, %c0_i32 : i32, i32
  }
  func.func @transform_2(%arg0: i32) -> (i32, i32) {
    %c0_i32 = arith.constant 0 : i32
    %c0_i32_0 = arith.constant 0 : i32
    %c0_i32_1 = arith.constant 0 : i32
    return %c0_i32, %c0_i32_0 : i32, i32
  }
  func.func @transform_3(%arg0: i32) -> (i32, i32) {
    %c0_i32 = arith.constant 0 : i32
    %c0_i32_0 = arith.constant 0 : i32
    %c0_i32_1 = arith.constant 0 : i32
    return %c0_i32, %c0_i32_0 : i32, i32
  }
  func.func @transform_4(%arg0: i32) -> (i32, i32) {
    %c0_i32 = arith.constant 0 : i32
    %c0_i32_0 = arith.constant 0 : i32
    %c0_i32_1 = arith.constant 0 : i32
    return %c0_i32, %c0_i32_0 : i32, i32
  }
  func.func @transform_5(%arg0: i32) -> (i32, i32) {
    %c0_i32 = arith.constant 0 : i32
    %c0_i32_0 = arith.constant 0 : i32
    %c0_i32_1 = arith.constant 0 : i32
    return %c0_i32, %c0_i32_0 : i32, i32
  }
  func.func @transform_6(%arg0: i32) -> (i32, i32) {
    %c0_i32 = arith.constant 0 : i32
    %c0_i32_0 = arith.constant 0 : i32
    %c0_i32_1 = arith.constant 0 : i32
    return %c0_i32, %c0_i32_0 : i32, i32
  }
  func.func @transform_7(%arg0: i32) -> (i32, i32) {
    %c0_i32 = arith.constant 0 : i32
    %c0_i32_0 = arith.constant 0 : i32
    %c0_i32_1 = arith.constant 0 : i32
    return %c0_i32, %c0_i32_0 : i32, i32
  }
  func.func @transform_8(%arg0: i32) -> (i32, i32) {
    %c0_i32 = arith.constant 0 : i32
    %c0_i32_0 = arith.constant 0 : i32
    %c0_i32_1 = arith.constant 0 : i32
    return %c0_i32, %c0_i32_0 : i32, i32
  }
  func.func @transform_9(%arg0: i32) -> (i32, i32) {
    %c0_i32 = arith.constant 0 : i32
    %c0_i32_0 = arith.constant 0 : i32
    %c0_i32_1 = arith.constant 0 : i32
    return %c0_i32, %c0_i32_0 : i32, i32
  }
  func.func @transform_10(%arg0: i32) -> (i32, i32) {
    %c0_i32 = arith.constant 0 : i32
    %c0_i32_0 = arith.constant 0 : i32
    %c0_i32_1 = arith.constant 0 : i32
    return %c0_i32, %c0_i32_0 : i32, i32
  }
  func.func @transform_11(%arg0: i32) -> (i32, i32) {
    %c0_i32 = arith.constant 0 : i32
    %c0_i32_0 = arith.constant 0 : i32
    %c0_i32_1 = arith.constant 0 : i32
    return %c0_i32, %c0_i32_0 : i32, i32
  }
  func.func @transform_12(%arg0: i32) -> (i32, i32) {
    %c0_i32 = arith.constant 0 : i32
    %c0_i32_0 = arith.constant 0 : i32
    %c0_i32_1 = arith.constant 0 : i32
    return %c0_i32, %c0_i32_0 : i32, i32
  }
  func.func @transform_13(%arg0: i32) -> (i32, i32) {
    %c0_i32 = arith.constant 0 : i32
    %c0_i32_0 = arith.constant 0 : i32
    %c0_i32_1 = arith.constant 0 : i32
    return %c0_i32, %c0_i32_0 : i32, i32
  }
  func.func @transform_14(%arg0: i32) -> (i32, i32) {
    %c0_i32 = arith.constant 0 : i32
    %c0_i32_0 = arith.constant 0 : i32
    return %arg0, %c0_i32 : i32, i32
  }
}

</mosaic_0001>

<llo_original>
// kernel: tpu_custom_call.1
$region0: #{tpu_custom_call.1}
  #allocation0 [shape = 'u32[]', space=smem, size = 0x4, offset = 0x4, fixed_abs, tag = 'smem constant byte address 0x4 - core index']
  #allocation1 [shape = 'u32[72,128]{1,0:T(1,128)}', space=vmem, size = 0x9000, scoped, tag = 'internal scratch']
  #allocation2 [shape = 'f32[64,64]{1,0:T(8,128)}', space=vmem, size = 0x8000, scoped, tag = 'scratch operand']
  %s0 = inlined_call_operand.vmem [shape: s32[2,64,1], index: 0, kind: input, shape index: {}]
  %s1 = inlined_call_operand.vmem [shape: s32[16,1], index: 1, kind: input, shape index: {}]
  %s2 = inlined_call_operand.vmem [shape: f32[32,32], index: 2, kind: input, shape index: {}]
  %s3 = inlined_call_operand.vmem [shape: f32[32,96], index: 3, kind: input, shape index: {}]
  %s4 = inlined_call_operand.vmem [shape: f32[1,96], index: 4, kind: input, shape index: {}]
  %s5 = inlined_call_operand.vmem [shape: f32[32,96], index: 5, kind: input, shape index: {}]
  %s6 = inlined_call_operand.vmem [shape: f32[1,96], index: 6, kind: input, shape index: {}]
  %s7 = inlined_call_operand.vmem [shape: f32[32,96], index: 7, kind: input, shape index: {}]
  %s8 = inlined_call_operand.vmem [shape: f32[1,96], index: 8, kind: input, shape index: {}]
  %s9 = inlined_call_operand.vmem [shape: f32[32,96], index: 9, kind: input, shape index: {}]
  %s10 = inlined_call_operand.vmem [shape: f32[1,96], index: 10, kind: input, shape index: {}]
  %s11 = inlined_call_operand.vmem [shape: f32[64,32], index: 11, kind: input, shape index: {}]
  %s12 = inlined_call_operand.vmem [shape: f32[1,32], index: 12, kind: input, shape index: {}]
  %s13 = inlined_call_operand.vmem [shape: f32[32,1], index: 13, kind: input, shape index: {}]
  %s14 = inlined_call_operand.hbm [shape: f32[16,128], index: 14, kind: output, shape index: {}]
  %s15 = sld [smem:[#allocation0]]
  $region89: #{tpu_custom_call.1} parent=0
    _
  %s17 = ssub.s32 1, %s15
  %s18 = scalar_select 0, %s17, %s15
  $region1: #{tpu_custom_call.1} parent=0
    #allocation3 [shape = 'u8[8192]{0}', space=vmem, size = 0x2000, scoped, tag = 'output window, operand 0']
    #allocation4 [shape = 's32[2]{0}', space=sflag, size = 0x8, scoped, tag = 'scoped memory for tpu_custom_call.1']
    %19 = vsyncpa [#allocation4], 0
    %s20 = scalar_lea.sflag [#allocation4], 1
    %21 = vsyncpa %s20, 0
    loop: start=0, step=1, limit=4
    $region2: #{tpu_custom_call.1} parent=1 // loop_pre_header
      _
    $region3: #{tpu_custom_call.1} parent=1 // loop_header
      %s23 = sphi 0, %s27
      %p24 = scmp.ge.s32.totalorder %s23, 4
      %s33 = sphi 0, %s35
      %s36 = sphi 0, %s33
      %s37 = sphi 0, %s36
      %s53 = sphi 0, %s37
      %s59 = sphi 0, %s61
      %s62 = sphi 0, %s59
      %s63 = sphi 0, %s62
      %s79 = sphi 0, %s63
      %s83 = sphi 0, %s83
      %s85 = sphi 0, %s83
      %s86 = sphi 0, %s85
      %s100 = sphi 0, %s86
      %s104 = sphi 0, %s104
      %s106 = sphi 0, %s104
      %s107 = sphi 0, %s106
      %s121 = sphi 0, %s107
      %s125 = sphi 0, %s125
      %s127 = sphi 0, %s125
      %s128 = sphi 0, %s127
      %s142 = sphi 0, %s128
      %s146 = sphi 0, %s146
      %s148 = sphi 0, %s146
      %s149 = sphi 0, %s148
      %s163 = sphi 0, %s149
      %s167 = sphi 0, %s167
      %s169 = sphi 0, %s167
      %s170 = sphi 0, %s169
      %s184 = sphi 0, %s170
      %s188 = sphi 0, %s188
      %s190 = sphi 0, %s188
      %s191 = sphi 0, %s190
      %s205 = sphi 0, %s191
      %s209 = sphi 0, %s209
      %s211 = sphi 0, %s209
      %s212 = sphi 0, %s211
      %s226 = sphi 0, %s212
      %s230 = sphi 0, %s230
      %s232 = sphi 0, %s230
      %s233 = sphi 0, %s232
      %s247 = sphi 0, %s233
      %s251 = sphi 0, %s251
      %s253 = sphi 0, %s251
      %s254 = sphi 0, %s253
      %s268 = sphi 0, %s254
      %s272 = sphi 0, %s272
      %s274 = sphi 0, %s272
      %s275 = sphi 0, %s274
      %s289 = sphi 0, %s275
      %s293 = sphi 0, %s293
      %s295 = sphi 0, %s293
      %s296 = sphi 0, %s295
      %s310 = sphi 0, %s296
      %s314 = sphi 0, %s314
      %s316 = sphi 0, %s314
      %s317 = sphi 0, %s316
      %s331 = sphi 0, %s317
      %s337 = sphi 0, %s339
      %s340 = sphi 0, %s337
      %s341 = sphi 0, %s340
      %s357 = sphi 0, %s341
    $region4: #{tpu_custom_call.1} parent=1 // loop_header_branch
      %26 = sbr.rel (%p24) target = $region8
    $region5: #{tpu_custom_call.1} parent=1 // loop_body
      %s28 = ssub.s32 %s23, 1
      %s29 = ssub.s32 %s23, 2
      %s30 = sadd.s32 %s23, 1
      %s31 = ssub.s32 %s23, %s30
      %p32 = scmp.eq.s32.totalorder %s31, 0
      %s34 = sadd.s32 %s33, 1
      %s35 = scalar_select %p32, %s33, %s34
      %p38 = pneg %p32
      %p39 = scmp.eq.s32.totalorder %s23, 1
      %p40 = por %p38, %p39
      %p41 = scmp.ne.s32.totalorder %s33, %s36
      %p42 = scmp.eq.s32.totalorder %s23, 0
      %p43 = por %p41, %p42
      %p44 = scmp.ne.s32.totalorder %s33, %s36
      %p45 = scmp.eq.s32.totalorder %s28, 1
      %p46 = por %p44, %p45
      %p47 = scmp.ne.s32.totalorder %s36, %s37
      %p48 = scmp.eq.s32.totalorder %s28, 0
      %p49 = por %p47, %p48
      %p50 = scmp.ne.s32.totalorder %s36, %s37
      %p51 = scmp.eq.s32.totalorder %s29, 1
      %p52 = por %p50, %p51
      %p54 = scmp.ne.s32.totalorder %s37, %s53
      %p55 = scmp.eq.s32.totalorder %s29, 0
      %p56 = por %p54, %p55
      %s57 = ssub.s32 %s23, %s30
      %p58 = scmp.eq.s32.totalorder %s57, 0
      %s60 = sadd.s32 %s59, 1
      %s61 = scalar_select %p58, %s59, %s60
      %p64 = pneg %p58
      %p65 = scmp.eq.s32.totalorder %s23, 1
      %p66 = por %p64, %p65
      %p67 = scmp.ne.s32.totalorder %s59, %s62
      %p68 = scmp.eq.s32.totalorder %s23, 0
      %p69 = por %p67, %p68
      %p70 = scmp.ne.s32.totalorder %s59, %s62
      %p71 = scmp.eq.s32.totalorder %s28, 1
      %p72 = por %p70, %p71
      %p73 = scmp.ne.s32.totalorder %s62, %s63
      %p74 = scmp.eq.s32.totalorder %s28, 0
      %p75 = por %p73, %p74
      %p76 = scmp.ne.s32.totalorder %s62, %s63
      %p77 = scmp.eq.s32.totalorder %s29, 1
      %p78 = por %p76, %p77
      %p80 = scmp.ne.s32.totalorder %s63, %s79
      %p81 = scmp.eq.s32.totalorder %s29, 0
      %p82 = por %p80, %p81
      %s84 = sadd.s32 %s83, 1
      %p87 = scmp.eq.s32.totalorder %s23, 1
      %p88 = scmp.ne.s32.totalorder %s83, %s85
      %p89 = scmp.eq.s32.totalorder %s23, 0
      %p90 = por %p88, %p89
      %p91 = scmp.ne.s32.totalorder %s83, %s85
      %p92 = scmp.eq.s32.totalorder %s28, 1
      %p93 = por %p91, %p92
      %p94 = scmp.ne.s32.totalorder %s85, %s86
      %p95 = scmp.eq.s32.totalorder %s28, 0
      %p96 = por %p94, %p95
      %p97 = scmp.ne.s32.totalorder %s85, %s86
      %p98 = scmp.eq.s32.totalorder %s29, 1
      %p99 = por %p97, %p98
      %p101 = scmp.ne.s32.totalorder %s86, %s100
      %p102 = scmp.eq.s32.totalorder %s29, 0
      %p103 = por %p101, %p102
      %s105 = sadd.s32 %s104, 1
      %p108 = scmp.eq.s32.totalorder %s23, 1
      %p109 = scmp.ne.s32.totalorder %s104, %s106
      %p110 = scmp.eq.s32.totalorder %s23, 0
      %p111 = por %p109, %p110
      %p112 = scmp.ne.s32.totalorder %s104, %s106
      %p113 = scmp.eq.s32.totalorder %s28, 1
      %p114 = por %p112, %p113
      %p115 = scmp.ne.s32.totalorder %s106, %s107
      %p116 = scmp.eq.s32.totalorder %s28, 0
      %p117 = por %p115, %p116
      %p118 = scmp.ne.s32.totalorder %s106, %s107
      %p119 = scmp.eq.s32.totalorder %s29, 1
      %p120 = por %p118, %p119
      %p122 = scmp.ne.s32.totalorder %s107, %s121
      %p123 = scmp.eq.s32.totalorder %s29, 0
      %p124 = por %p122, %p123
      %s126 = sadd.s32 %s125, 1
      %p129 = scmp.eq.s32.totalorder %s23, 1
      %p130 = scmp.ne.s32.totalorder %s125, %s127
      %p131 = scmp.eq.s32.totalorder %s23, 0
      %p132 = por %p130, %p131
      %p133 = scmp.ne.s32.totalorder %s125, %s127
      %p134 = scmp.eq.s32.totalorder %s28, 1
      %p135 = por %p133, %p134
      %p136 = scmp.ne.s32.totalorder %s127, %s128
      %p137 = scmp.eq.s32.totalorder %s28, 0
      %p138 = por %p136, %p137
      %p139 = scmp.ne.s32.totalorder %s127, %s128
      %p140 = scmp.eq.s32.totalorder %s29, 1
      %p141 = por %p139, %p140
      %p143 = scmp.ne.s32.totalorder %s128, %s142
      %p144 = scmp.eq.s32.totalorder %s29, 0
      %p145 = por %p143, %p144
      %s147 = sadd.s32 %s146, 1
      %p150 = scmp.eq.s32.totalorder %s23, 1
      %p151 = scmp.ne.s32.totalorder %s146, %s148
      %p152 = scmp.eq.s32.totalorder %s23, 0
      %p153 = por %p151, %p152
      %p154 = scmp.ne.s32.totalorder %s146, %s148
      %p155 = scmp.eq.s32.totalorder %s28, 1
      %p156 = por %p154, %p155
      %p157 = scmp.ne.s32.totalorder %s148, %s149
      %p158 = scmp.eq.s32.totalorder %s28, 0
      %p159 = por %p157, %p158
      %p160 = scmp.ne.s32.totalorder %s148, %s149
      %p161 = scmp.eq.s32.totalorder %s29, 1
      %p162 = por %p160, %p161
      %p164 = scmp.ne.s32.totalorder %s149, %s163
      %p165 = scmp.eq.s32.totalorder %s29, 0
      %p166 = por %p164, %p165
      %s168 = sadd.s32 %s167, 1
      %p171 = scmp.eq.s32.totalorder %s23, 1
      %p172 = scmp.ne.s32.totalorder %s167, %s169
      %p173 = scmp.eq.s32.totalorder %s23, 0
      %p174 = por %p172, %p173
      %p175 = scmp.ne.s32.totalorder %s167, %s169
      %p176 = scmp.eq.s32.totalorder %s28, 1
      %p177 = por %p175, %p176
      %p178 = scmp.ne.s32.totalorder %s169, %s170
      %p179 = scmp.eq.s32.totalorder %s28, 0
      %p180 = por %p178, %p179
      %p181 = scmp.ne.s32.totalorder %s169, %s170
      %p182 = scmp.eq.s32.totalorder %s29, 1
      %p183 = por %p181, %p182
      %p185 = scmp.ne.s32.totalorder %s170, %s184
      %p186 = scmp.eq.s32.totalorder %s29, 0
      %p187 = por %p185, %p186
      %s189 = sadd.s32 %s188, 1
      %p192 = scmp.eq.s32.totalorder %s23, 1
      %p193 = scmp.ne.s32.totalorder %s188, %s190
      %p194 = scmp.eq.s32.totalorder %s23, 0
      %p195 = por %p193, %p194
      %p196 = scmp.ne.s32.totalorder %s188, %s190
      %p197 = scmp.eq.s32.totalorder %s28, 1
      %p198 = por %p196, %p197
      %p199 = scmp.ne.s32.totalorder %s190, %s191
      %p200 = scmp.eq.s32.totalorder %s28, 0
      %p201 = por %p199, %p200
      %p202 = scmp.ne.s32.totalorder %s190, %s191
      %p203 = scmp.eq.s32.totalorder %s29, 1
      %p204 = por %p202, %p203
      %p206 = scmp.ne.s32.totalorder %s191, %s205
      %p207 = scmp.eq.s32.totalorder %s29, 0
      %p208 = por %p206, %p207
      %s210 = sadd.s32 %s209, 1
      %p213 = scmp.eq.s32.totalorder %s23, 1
      %p214 = scmp.ne.s32.totalorder %s209, %s211
      %p215 = scmp.eq.s32.totalorder %s23, 0
      %p216 = por %p214, %p215
      %p217 = scmp.ne.s32.totalorder %s209, %s211
      %p218 = scmp.eq.s32.totalorder %s28, 1
      %p219 = por %p217, %p218
      %p220 = scmp.ne.s32.totalorder %s211, %s212
      %p221 = scmp.eq.s32.totalorder %s28, 0
      %p222 = por %p220, %p221
      %p223 = scmp.ne.s32.totalorder %s211, %s212
      %p224 = scmp.eq.s32.totalorder %s29, 1
      %p225 = por %p223, %p224
      %p227 = scmp.ne.s32.totalorder %s212, %s226
      %p228 = scmp.eq.s32.totalorder %s29, 0
      %p229 = por %p227, %p228
      %s231 = sadd.s32 %s230, 1
      %p234 = scmp.eq.s32.totalorder %s23, 1
      %p235 = scmp.ne.s32.totalorder %s230, %s232
      %p236 = scmp.eq.s32.totalorder %s23, 0
      %p237 = por %p235, %p236
      %p238 = scmp.ne.s32.totalorder %s230, %s232
      %p239 = scmp.eq.s32.totalorder %s28, 1
      %p240 = por %p238, %p239
      %p241 = scmp.ne.s32.totalorder %s232, %s233
      %p242 = scmp.eq.s32.totalorder %s28, 0
      %p243 = por %p241, %p242
      %p244 = scmp.ne.s32.totalorder %s232, %s233
      %p245 = scmp.eq.s32.totalorder %s29, 1
      %p246 = por %p244, %p245
      %p248 = scmp.ne.s32.totalorder %s233, %s247
      %p249 = scmp.eq.s32.totalorder %s29, 0
      %p250 = por %p248, %p249
      %s252 = sadd.s32 %s251, 1
      %p255 = scmp.eq.s32.totalorder %s23, 1
      %p256 = scmp.ne.s32.totalorder %s251, %s253
      %p257 = scmp.eq.s32.totalorder %s23, 0
      %p258 = por %p256, %p257
      %p259 = scmp.ne.s32.totalorder %s251, %s253
      %p260 = scmp.eq.s32.totalorder %s28, 1
      %p261 = por %p259, %p260
      %p262 = scmp.ne.s32.totalorder %s253, %s254
      %p263 = scmp.eq.s32.totalorder %s28, 0
      %p264 = por %p262, %p263
      %p265 = scmp.ne.s32.totalorder %s253, %s254
      %p266 = scmp.eq.s32.totalorder %s29, 1
      %p267 = por %p265, %p266
      %p269 = scmp.ne.s32.totalorder %s254, %s268
      %p270 = scmp.eq.s32.totalorder %s29, 0
      %p271 = por %p269, %p270
      %s273 = sadd.s32 %s272, 1
      %p276 = scmp.eq.s32.totalorder %s23, 1
      %p277 = scmp.ne.s32.totalorder %s272, %s274
      %p278 = scmp.eq.s32.totalorder %s23, 0
      %p279 = por %p277, %p278
      %p280 = scmp.ne.s32.totalorder %s272, %s274
      %p281 = scmp.eq.s32.totalorder %s28, 1
      %p282 = por %p280, %p281
      %p283 = scmp.ne.s32.totalorder %s274, %s275
      %p284 = scmp.eq.s32.totalorder %s28, 0
      %p285 = por %p283, %p284
      %p286 = scmp.ne.s32.totalorder %s274, %s275
      %p287 = scmp.eq.s32.totalorder %s29, 1
      %p288 = por %p286, %p287
      %p290 = scmp.ne.s32.totalorder %s275, %s289
      %p291 = scmp.eq.s32.totalorder %s29, 0
      %p292 = por %p290, %p291
      %s294 = sadd.s32 %s293, 1
      %p297 = scmp.eq.s32.totalorder %s23, 1
      %p298 = scmp.ne.s32.totalorder %s293, %s295
      %p299 = scmp.eq.s32.totalorder %s23, 0
      %p300 = por %p298, %p299
      %p301 = scmp.ne.s32.totalorder %s293, %s295
      %p302 = scmp.eq.s32.totalorder %s28, 1
      %p303 = por %p301, %p302
      %p304 = scmp.ne.s32.totalorder %s295, %s296
      %p305 = scmp.eq.s32.totalorder %s28, 0
      %p306 = por %p304, %p305
      %p307 = scmp.ne.s32.totalorder %s295, %s296
      %p308 = scmp.eq.s32.totalorder %s29, 1
      %p309 = por %p307, %p308
      %p311 = scmp.ne.s32.totalorder %s296, %s310
      %p312 = scmp.eq.s32.totalorder %s29, 0
      %p313 = por %p311, %p312
      %s315 = sadd.s32 %s314, 1
      %p318 = scmp.eq.s32.totalorder %s23, 1
      %p319 = scmp.ne.s32.totalorder %s314, %s316
      %p320 = scmp.eq.s32.totalorder %s23, 0
      %p321 = por %p319, %p320
      %p322 = scmp.ne.s32.totalorder %s314, %s316
      %p323 = scmp.eq.s32.totalorder %s28, 1
      %p324 = por %p322, %p323
      %p325 = scmp.ne.s32.totalorder %s316, %s317
      %p326 = scmp.eq.s32.totalorder %s28, 0
      %p327 = por %p325, %p326
      %p328 = scmp.ne.s32.totalorder %s316, %s317
      %p329 = scmp.eq.s32.totalorder %s29, 1
      %p330 = por %p328, %p329
      %p332 = scmp.ne.s32.totalorder %s317, %s331
      %p333 = scmp.eq.s32.totalorder %s29, 0
      %p334 = por %p332, %p333
      %s335 = ssub.s32 %s23, %s30
      %p336 = scmp.eq.s32.totalorder %s335, 0
      %s338 = sadd.s32 %s337, 1
      %s339 = scalar_select %p336, %s337, %s338
      %p342 = pneg %p336
      %p343 = scmp.eq.s32.totalorder %s23, 1
      %p344 = por %p342, %p343
      %p345 = scmp.ne.s32.totalorder %s337, %s340
      %p346 = scmp.eq.s32.totalorder %s23, 0
      %p347 = por %p345, %p346
      %p348 = scmp.ne.s32.totalorder %s337, %s340
      %p349 = scmp.eq.s32.totalorder %s28, 1
      %p350 = por %p348, %p349
      %p351 = scmp.ne.s32.totalorder %s340, %s341
      %p352 = scmp.eq.s32.totalorder %s28, 0
      %p353 = por %p351, %p352
      %p354 = scmp.ne.s32.totalorder %s340, %s341
      %p355 = scmp.eq.s32.totalorder %s29, 1
      %p356 = por %p354, %p355
      %p358 = scmp.ne.s32.totalorder %s341, %s357
      %p359 = scmp.eq.s32.totalorder %s29, 0
      %p360 = por %p358, %p359
      %p361 = scmp.le.s32.totalorder 1, %s23
      %p362 = scmp.lt.s32.totalorder %s23, 3
      %p363 = pnand %p361, %p362
      %p364 = pneg %p363
      // Predicated region
      $region9: #{tpu_custom_call.1} parent=5 // pred_check
        _
      $region10: #{tpu_custom_call.1} parent=5 // pred_check_branch
        %366 = sbr.rel (%p363) target = $region12
      $region11: #{tpu_custom_call.1} parent=5 // pred_region
        %s367 = ssub.s32 %s23, 1
        // Predicated region
        $region13: #{tpu_custom_call.1} parent=11 // pred_check
          %p368 = pneg %p96
        $region14: #{tpu_custom_call.1} parent=11 // pred_check_branch
          %370 = sbr.rel (%p368) target = $region16
        $region15: #{tpu_custom_call.1} parent=11 // pred_region
          _
        $region16: #{tpu_custom_call.1} parent=11 // pred_fallthru
          _
        // Predicated region
        $region17: #{tpu_custom_call.1} parent=11 // pred_check
          %p371 = pneg %p117
        $region18: #{tpu_custom_call.1} parent=11 // pred_check_branch
          %373 = sbr.rel (%p371) target = $region20
        $region19: #{tpu_custom_call.1} parent=11 // pred_region
          _
        $region20: #{tpu_custom_call.1} parent=11 // pred_fallthru
          _
        // Predicated region
        $region21: #{tpu_custom_call.1} parent=11 // pred_check
          %p374 = pneg %p138
        $region22: #{tpu_custom_call.1} parent=11 // pred_check_branch
          %376 = sbr.rel (%p374) target = $region24
        $region23: #{tpu_custom_call.1} parent=11 // pred_region
          _
        $region24: #{tpu_custom_call.1} parent=11 // pred_fallthru
          _
        // Predicated region
        $region25: #{tpu_custom_call.1} parent=11 // pred_check
          %p377 = pneg %p159
        $region26: #{tpu_custom_call.1} parent=11 // pred_check_branch
          %379 = sbr.rel (%p377) target = $region28
        $region27: #{tpu_custom_call.1} parent=11 // pred_region
          _
        $region28: #{tpu_custom_call.1} parent=11 // pred_fallthru
          _
        // Predicated region
        $region29: #{tpu_custom_call.1} parent=11 // pred_check
          %p380 = pneg %p180
        $region30: #{tpu_custom_call.1} parent=11 // pred_check_branch
          %382 = sbr.rel (%p380) target = $region32
        $region31: #{tpu_custom_call.1} parent=11 // pred_region
          _
        $region32: #{tpu_custom_call.1} parent=11 // pred_fallthru
          _
        // Predicated region
        $region33: #{tpu_custom_call.1} parent=11 // pred_check
          %p383 = pneg %p201
        $region34: #{tpu_custom_call.1} parent=11 // pred_check_branch
          %385 = sbr.rel (%p383) target = $region36
        $region35: #{tpu_custom_call.1} parent=11 // pred_region
          _
        $region36: #{tpu_custom_call.1} parent=11 // pred_fallthru
          _
        // Predicated region
        $region37: #{tpu_custom_call.1} parent=11 // pred_check
          %p386 = pneg %p222
        $region38: #{tpu_custom_call.1} parent=11 // pred_check_branch
          %388 = sbr.rel (%p386) target = $region40
        $region39: #{tpu_custom_call.1} parent=11 // pred_region
          _
        $region40: #{tpu_custom_call.1} parent=11 // pred_fallthru
          _
        // Predicated region
        $region41: #{tpu_custom_call.1} parent=11 // pred_check
          %p389 = pneg %p243
        $region42: #{tpu_custom_call.1} parent=11 // pred_check_branch
          %391 = sbr.rel (%p389) target = $region44
        $region43: #{tpu_custom_call.1} parent=11 // pred_region
          _
        $region44: #{tpu_custom_call.1} parent=11 // pred_fallthru
          _
        // Predicated region
        $region45: #{tpu_custom_call.1} parent=11 // pred_check
          %p392 = pneg %p264
        $region46: #{tpu_custom_call.1} parent=11 // pred_check_branch
          %394 = sbr.rel (%p392) target = $region48
        $region47: #{tpu_custom_call.1} parent=11 // pred_region
          _
        $region48: #{tpu_custom_call.1} parent=11 // pred_fallthru
          _
        // Predicated region
        $region49: #{tpu_custom_call.1} parent=11 // pred_check
          %p395 = pneg %p285
        $region50: #{tpu_custom_call.1} parent=11 // pred_check_branch
          %397 = sbr.rel (%p395) target = $region52
        $region51: #{tpu_custom_call.1} parent=11 // pred_region
          _
        $region52: #{tpu_custom_call.1} parent=11 // pred_fallthru
          _
        // Predicated region
        $region53: #{tpu_custom_call.1} parent=11 // pred_check
          %p398 = pneg %p306
        $region54: #{tpu_custom_call.1} parent=11 // pred_check_branch
          %400 = sbr.rel (%p398) target = $region56
        $region55: #{tpu_custom_call.1} parent=11 // pred_region
          _
        $region56: #{tpu_custom_call.1} parent=11 // pred_fallthru
          _
        // Predicated region
        $region57: #{tpu_custom_call.1} parent=11 // pred_check
          %p401 = pneg %p327
        $region58: #{tpu_custom_call.1} parent=11 // pred_check_branch
          %403 = sbr.rel (%p401) target = $region60
        $region59: #{tpu_custom_call.1} parent=11 // pred_region
          _
        $region60: #{tpu_custom_call.1} parent=11 // pred_fallthru
          _
      $region12: #{tpu_custom_call.1} parent=5 // pred_fallthru
        _
      %p404 = scmp.lt.s32.totalorder %s23, 2
      // Predicated region
      $region61: #{tpu_custom_call.1} parent=5 // pred_check
        %p405 = pneg %p404
      $region62: #{tpu_custom_call.1} parent=5 // pred_check_branch
        %407 = sbr.rel (%p405) target = $region64
      $region63: #{tpu_custom_call.1} parent=5 // pred_region
        // Predicated region
        $region65: #{tpu_custom_call.1} parent=63 // pred_check
          %p408 = pneg %p43
        $region66: #{tpu_custom_call.1} parent=63 // pred_check_branch
          %410 = sbr.rel (%p408) target = $region68
        $region67: #{tpu_custom_call.1} parent=63 // pred_region
          %p411 = scmp.lt.s32.totalorder %s23, 1
          %s412 = scalar_select %p411, %s23, 1
          %s413 = smul.addr %s412, 8
          %s414 = smul.addr %s413, 8
          %s415 = scalar_lea.vmem %s0, %s414
        $region68: #{tpu_custom_call.1} parent=63 // pred_fallthru
          _
        // Predicated region
        $region69: #{tpu_custom_call.1} parent=63 // pred_check
          %p416 = pneg %p69
        $region70: #{tpu_custom_call.1} parent=63 // pred_check_branch
          %418 = sbr.rel (%p416) target = $region72
        $region71: #{tpu_custom_call.1} parent=63 // pred_region
          %p419 = scmp.lt.s32.totalorder %s23, 1
          %s420 = scalar_select %p419, %s23, 1
          %s421 = smul.addr %s420, 8
          %s422 = scalar_lea.vmem %s1, %s421
        $region72: #{tpu_custom_call.1} parent=63 // pred_fallthru
          _
      $region64: #{tpu_custom_call.1} parent=5 // pred_fallthru
        _
      %p423 = scmp.le.s32.totalorder 1, %s23
      %p424 = scmp.lt.s32.totalorder %s23, 3
      %p425 = pnand %p423, %p424
      %p426 = pneg %p425
      // Predicated region
      $region73: #{tpu_custom_call.1} parent=5 // pred_check
        _
      $region74: #{tpu_custom_call.1} parent=5 // pred_check_branch
        %428 = sbr.rel (%p425) target = $region76
      $region75: #{tpu_custom_call.1} parent=5 // pred_region
        %s429 = ssub.s32 %s23, 1
        %p430 = scmp.lt.s32.totalorder %s28, 1
        %s431 = scalar_select %p430, %s28, 1
        %s432 = smul.addr %s431, 8
        %s433 = smul.addr %s432, 8
        %s434 = scalar_lea.vmem %s0, %s433
        %p435 = pneg %p49
        %p436 = pneg %p46
        %p437 = scmp.lt.s32.totalorder %s28, 1
        %s438 = scalar_select %p437, %s28, 1
        %s439 = smul.addr %s438, 8
        %s440 = scalar_lea.vmem %s1, %s439
        %p441 = pneg %p75
        %p442 = pneg %p72
        %p443 = pneg %p96
        %p444 = pneg %p93
        %p445 = pneg %p117
        %p446 = pneg %p114
        %p447 = pneg %p138
        %p448 = pneg %p135
        %p449 = pneg %p159
        %p450 = pneg %p156
        %p451 = pneg %p180
        %p452 = pneg %p177
        %p453 = pneg %p201
        %p454 = pneg %p198
        %p455 = pneg %p222
        %p456 = pneg %p219
        %p457 = pneg %p243
        %p458 = pneg %p240
        %p459 = pneg %p264
        %p460 = pneg %p261
        %p461 = pneg %p285
        %p462 = pneg %p282
        %p463 = pneg %p306
        %p464 = pneg %p303
        %p465 = pneg %p327
        %p466 = pneg %p324
        %p467 = pneg %p353
        %p468 = pneg %p350
        %s469 = sand.u32 %s340, 1
        %s470 = scalar_lea.sflag [#allocation4], %s469
        %s471 = sand.u32 %s340, 1
        %s472 = smul.addr %s471, 8
        %s473 = scalar_lea.vmem [#allocation3], %s472
        %p474 = scmp.lt.s32.totalorder %s28, 1
        %s475 = scalar_select %p474, %s28, 1
        %s476 = smul.addr %s475, 8
        %s477 = smul.addr %s476, 8
        %s478 = scalar_lea.vmem %s0, %s477
        %p479 = scmp.lt.s32.totalorder %s28, 1
        %s480 = scalar_select %p479, %s28, 1
        %s481 = smul.addr %s480, 8
        %s482 = scalar_lea.vmem %s1, %s481
        %v483 = vld [vmem:[%s478] sm:$0xff]
        %v484 = vld [vmem:[%s478 + $0x8] sm:$0xff]
        %v485 = vld [vmem:[%s478 + $0x10] sm:$0xff]
        %v486 = vld [vmem:[%s478 + $0x18] sm:$0xff]
        %v487 = vld [vmem:[%s478 + $0x20] sm:$0xff]
        %v488 = vld [vmem:[%s478 + $0x28] sm:$0xff]
        %v489 = vld [vmem:[%s478 + $0x30] sm:$0xff]
        %v490 = vld [vmem:[%s478 + $0x38] sm:$0xff]
        %v491 = vlaneseq
        %v492 = vand.u32 %v491, 127
        %493 = vset.pattern.permute.xlu0 0
        %494 = vperm.xlu0 %493, %v483
        %v495 = vpop.permute.xlu0 %494
        %496 = vset.pattern.permute.xlu0 0
        %497 = vperm.xlu0 %496, %v484
        %v498 = vpop.permute.xlu0 %497
        %499 = vset.pattern.permute.xlu0 0
        %500 = vperm.xlu0 %499, %v485
        %v501 = vpop.permute.xlu0 %500
        %502 = vset.pattern.permute.xlu0 0
        %503 = vperm.xlu0 %502, %v486
        %v504 = vpop.permute.xlu0 %503
        %505 = vset.pattern.permute.xlu0 0
        %506 = vperm.xlu0 %505, %v487
        %v507 = vpop.permute.xlu0 %506
        %508 = vset.pattern.permute.xlu0 0
        %509 = vperm.xlu0 %508, %v488
        %v510 = vpop.permute.xlu0 %509
        %511 = vset.pattern.permute.xlu0 0
        %512 = vperm.xlu0 %511, %v489
        %v513 = vpop.permute.xlu0 %512
        %514 = vset.pattern.permute.xlu0 0
        %515 = vperm.xlu0 %514, %v490
        %v516 = vpop.permute.xlu0 %515
        %vm517 = vcmp.eq.s32.totalorder %v492, %v495
        %vm518 = vcmp.eq.s32.totalorder %v492, %v498
        %vm519 = vcmp.eq.s32.totalorder %v492, %v501
        %vm520 = vcmp.eq.s32.totalorder %v492, %v504
        %vm521 = vcmp.eq.s32.totalorder %v492, %v507
        %vm522 = vcmp.eq.s32.totalorder %v492, %v510
        %vm523 = vcmp.eq.s32.totalorder %v492, %v513
        %vm524 = vcmp.eq.s32.totalorder %v492, %v516
        %v525 = vsel %vm517, 1, 0
        %v526 = vsel %vm518, 1, 0
        %v527 = vsel %vm519, 1, 0
        %v528 = vsel %vm520, 1, 0
        %v529 = vsel %vm521, 1, 0
        %v530 = vsel %vm522, 1, 0
        %v531 = vsel %vm523, 1, 0
        %v532 = vsel %vm524, 1, 0
        %v533 = vcvt.s32.f32 %v525
        %v534 = vcvt.s32.f32 %v526
        %v535 = vcvt.s32.f32 %v527
        %v536 = vcvt.s32.f32 %v528
        %v537 = vcvt.s32.f32 %v529
        %v538 = vcvt.s32.f32 %v530
        %v539 = vcvt.s32.f32 %v531
        %v540 = vcvt.s32.f32 %v532
        %v541 = vld [vmem:[%s2] sm:$0xff]
        %v542 = vld [vmem:[%s2 + $0x8] sm:$0xff]
        %v543 = vld [vmem:[%s2 + $0x10] sm:$0xff]
        %v544 = vld [vmem:[%s2 + $0x18] sm:$0xff]
        %vm545 = vcmask 261120
        %v547 = vsel %vm545, %v533, 0
        %v550 = vsel %vm545, %v534, 0
        %v553 = vsel %vm545, %v535, 0
        %v556 = vsel %vm545, %v536, 0
        %v559 = vsel %vm545, %v537, 0
        %v562 = vsel %vm545, %v538, 0
        %v565 = vsel %vm545, %v539, 0
        %v568 = vsel %vm545, %v540, 0
        %570 = vmatpush.msra.mxu0 0.0
        %571 = vmatpush.msra.mxu0 0.0
        %572 = vmatpush.msra.mxu0 0.0
        %573 = vmatpush.msra.mxu0 0.0
        %574 = vmatpush.msra.mxu0 0.0
        %575 = vmatpush.msra.mxu0 0.0
        %576 = vmatpush.msra.mxu0 0.0
        %577 = vmatpush.msra.mxu0 0.0
        %578 = vmatpush.msra.mxu0 0.0
        %579 = vmatpush.msra.mxu0 0.0
        %580 = vmatpush.msra.mxu0 0.0
        %581 = vmatpush.msra.mxu0 0.0
        %582 = vmatpush.msra.mxu0 %v544
        %583 = vmatpush.msra.mxu0 %v543
        %584 = vmatpush.msra.mxu0 %v542
        %585 = vmatpush.msra.mxu0 %v541
        %586 = vmatmul.f32.gmra.mxu0 %v547
        %v587 = vpop.f32.mrf.mxu0
        %v588 = vadd.f32 0.0, %v587
        %589 = vmatmul.f32.gmra.mxu0 %v550
        %v590 = vpop.f32.mrf.mxu0
        %v591 = vadd.f32 0.0, %v590
        %592 = vmatmul.f32.gmra.mxu0 %v553
        %v593 = vpop.f32.mrf.mxu0
        %v594 = vadd.f32 0.0, %v593
        %595 = vmatmul.f32.gmra.mxu0 %v556
        %v596 = vpop.f32.mrf.mxu0
        %v597 = vadd.f32 0.0, %v596
        %598 = vmatmul.f32.gmra.mxu0 %v559
        %v599 = vpop.f32.mrf.mxu0
        %v600 = vadd.f32 0.0, %v599
        %601 = vmatmul.f32.gmra.mxu0 %v562
        %v602 = vpop.f32.mrf.mxu0
        %v603 = vadd.f32 0.0, %v602
        %604 = vmatmul.f32.gmra.mxu0 %v565
        %v605 = vpop.f32.mrf.mxu0
        %v606 = vadd.f32 0.0, %v605
        %607 = vmatmul.f32.gmra.mxu0 %v568
        %v608 = vpop.f32.mrf.mxu0
        %v609 = vadd.f32 0.0, %v608
        %610 = vdwg.mxu0
        %v611 = vld [vmem:[%s3] sm:$0xff]
        %v612 = vld [vmem:[%s3 + $0x8] sm:$0xff]
        %v613 = vld [vmem:[%s3 + $0x10] sm:$0xff]
        %v614 = vld [vmem:[%s3 + $0x18] sm:$0xff]
        %v615 = vld [vmem:[%s4] sm:$0x1]
        %v617 = vperm.slane %v615, 0
        %v620 = vsel %vm545, %v588, 0
        %v623 = vsel %vm545, %v591, 0
        %v626 = vsel %vm545, %v594, 0
        %v629 = vsel %vm545, %v597, 0
        %v632 = vsel %vm545, %v600, 0
        %v635 = vsel %vm545, %v603, 0
        %v638 = vsel %vm545, %v606, 0
        %v641 = vsel %vm545, %v609, 0
        %643 = vmatpush.msra.mxu0 0.0
        %644 = vmatpush.msra.mxu0 0.0
        %645 = vmatpush.msra.mxu0 0.0
        %646 = vmatpush.msra.mxu0 0.0
        %647 = vmatpush.msra.mxu0 0.0
        %648 = vmatpush.msra.mxu0 0.0
        %649 = vmatpush.msra.mxu0 0.0
        %650 = vmatpush.msra.mxu0 0.0
        %651 = vmatpush.msra.mxu0 0.0
        %652 = vmatpush.msra.mxu0 0.0
        %653 = vmatpush.msra.mxu0 0.0
        %654 = vmatpush.msra.mxu0 0.0
        %655 = vmatpush.msra.mxu0 %v614
        %656 = vmatpush.msra.mxu0 %v613
        %657 = vmatpush.msra.mxu0 %v612
        %658 = vmatpush.msra.mxu0 %v611
        %659 = vmatmul.f32.gmra.mxu0 %v620
        %v660 = vpop.f32.mrf.mxu0
        %v661 = vadd.f32 %v617, %v660
        %662 = vmatmul.f32.gmra.mxu0 %v623
        %v663 = vpop.f32.mrf.mxu0
        %v664 = vadd.f32 %v617, %v663
        %665 = vmatmul.f32.gmra.mxu0 %v626
        %v666 = vpop.f32.mrf.mxu0
        %v667 = vadd.f32 %v617, %v666
        %668 = vmatmul.f32.gmra.mxu0 %v629
        %v669 = vpop.f32.mrf.mxu0
        %v670 = vadd.f32 %v617, %v669
        %671 = vmatmul.f32.gmra.mxu0 %v632
        %v672 = vpop.f32.mrf.mxu0
        %v673 = vadd.f32 %v617, %v672
        %674 = vmatmul.f32.gmra.mxu0 %v635
        %v675 = vpop.f32.mrf.mxu0
        %v676 = vadd.f32 %v617, %v675
        %677 = vmatmul.f32.gmra.mxu0 %v638
        %v678 = vpop.f32.mrf.mxu0
        %v679 = vadd.f32 %v617, %v678
        %680 = vmatmul.f32.gmra.mxu0 %v641
        %v681 = vpop.f32.mrf.mxu0
        %v682 = vadd.f32 %v617, %v681
        %683 = vdwg.mxu0
        %v684 = vld [vmem:[%s5] sm:$0xff]
        %v685 = vld [vmem:[%s5 + $0x8] sm:$0xff]
        %v686 = vld [vmem:[%s5 + $0x10] sm:$0xff]
        %v687 = vld [vmem:[%s5 + $0x18] sm:$0xff]
        %v688 = vld [vmem:[%s6] sm:$0x1]
        %v690 = vperm.slane %v688, 0
        %692 = vmatpush.msra.mxu0 0.0
        %693 = vmatpush.msra.mxu0 0.0
        %694 = vmatpush.msra.mxu0 0.0
        %695 = vmatpush.msra.mxu0 0.0
        %696 = vmatpush.msra.mxu0 0.0
        %697 = vmatpush.msra.mxu0 0.0
        %698 = vmatpush.msra.mxu0 0.0
        %699 = vmatpush.msra.mxu0 0.0
        %700 = vmatpush.msra.mxu0 0.0
        %701 = vmatpush.msra.mxu0 0.0
        %702 = vmatpush.msra.mxu0 0.0
        %703 = vmatpush.msra.mxu0 0.0
        %704 = vmatpush.msra.mxu0 %v687
        %705 = vmatpush.msra.mxu0 %v686
        %706 = vmatpush.msra.mxu0 %v685
        %707 = vmatpush.msra.mxu0 %v684
        %708 = vmatmul.f32.gmra.mxu0 %v620
        %v709 = vpop.f32.mrf.mxu0
        %v710 = vadd.f32 %v690, %v709
        %711 = vmatmul.f32.gmra.mxu0 %v623
        %v712 = vpop.f32.mrf.mxu0
        %v713 = vadd.f32 %v690, %v712
        %714 = vmatmul.f32.gmra.mxu0 %v626
        %v715 = vpop.f32.mrf.mxu0
        %v716 = vadd.f32 %v690, %v715
        %717 = vmatmul.f32.gmra.mxu0 %v629
        %v718 = vpop.f32.mrf.mxu0
        %v719 = vadd.f32 %v690, %v718
        %720 = vmatmul.f32.gmra.mxu0 %v632
        %v721 = vpop.f32.mrf.mxu0
        %v722 = vadd.f32 %v690, %v721
        %723 = vmatmul.f32.gmra.mxu0 %v635
        %v724 = vpop.f32.mrf.mxu0
        %v725 = vadd.f32 %v690, %v724
        %726 = vmatmul.f32.gmra.mxu0 %v638
        %v727 = vpop.f32.mrf.mxu0
        %v728 = vadd.f32 %v690, %v727
        %729 = vmatmul.f32.gmra.mxu0 %v641
        %v730 = vpop.f32.mrf.mxu0
        %v731 = vadd.f32 %v690, %v730
        %732 = vdwg.mxu0
        %v733 = vld [vmem:[%s482] sm:$0xff]
        %v734 = vld [vmem:[%s7] sm:$0xff]
        %v735 = vld [vmem:[%s7 + $0x8] sm:$0xff]
        %v736 = vld [vmem:[%s7 + $0x10] sm:$0xff]
        %v737 = vld [vmem:[%s7 + $0x18] sm:$0xff]
        %v738 = vld [vmem:[%s8] sm:$0x1]
        %v739 = vld [vmem:[%s9] sm:$0xff]
        %v740 = vld [vmem:[%s9 + $0x8] sm:$0xff]
        %v741 = vld [vmem:[%s9 + $0x10] sm:$0xff]
        %v742 = vld [vmem:[%s9 + $0x18] sm:$0xff]
        %v743 = vld [vmem:[%s10] sm:$0x1]
        %vm744 = vcmp.gt.s32.totalorder %v733, 0
        %vm745 = vcmp.gt.s32.totalorder %v733, 1
        %vm746 = vcmp.gt.s32.totalorder %v733, 2
        %vm747 = vcmp.gt.s32.totalorder %v733, 3
        %vm748 = vcmp.gt.s32.totalorder %v733, 4
        %vm749 = vcmp.gt.s32.totalorder %v733, 5
        %vm750 = vcmp.gt.s32.totalorder %v733, 6
        %vm751 = vcmp.gt.s32.totalorder %v733, 7
        %v753 = vperm.slane %v738, 0
        %v756 = vsel %vm545, 0.0, 0
        %758 = vmatpush.msra.mxu0 0.0
        %759 = vmatpush.msra.mxu0 0.0
        %760 = vmatpush.msra.mxu0 0.0
        %761 = vmatpush.msra.mxu0 0.0
        %762 = vmatpush.msra.mxu0 0.0
        %763 = vmatpush.msra.mxu0 0.0
        %764 = vmatpush.msra.mxu0 0.0
        %765 = vmatpush.msra.mxu0 0.0
        %766 = vmatpush.msra.mxu0 0.0
        %767 = vmatpush.msra.mxu0 0.0
        %768 = vmatpush.msra.mxu0 0.0
        %769 = vmatpush.msra.mxu0 0.0
        %770 = vmatpush.msra.mxu0 %v737
        %771 = vmatpush.msra.mxu0 %v736
        %772 = vmatpush.msra.mxu0 %v735
        %773 = vmatpush.msra.mxu0 %v734
        %774 = vmatmul.f32.gmra.mxu0 %v756
        %v775 = vpop.f32.mrf.mxu0
        %v776 = vadd.f32 %v753, %v775
        %777 = vdwg.mxu0
        %v778 = vadd.f32 %v661, %v776
        %v779 = vxor.u32 %v778, 2147483648
        %v780 = vmul.f32 %v779, 1.442695
        %v781 = vpow.pop %v780
        %v782 = vadd.f32 %v781, 1.0
        %v783 = vrcp.pop %v782
        %v784 = vmul.f32 %v782, %v783
        %v785 = vsub.f32 1.0, %v784
        %v786 = vmul.f32 %v783, %v785
        %v787 = vadd.f32 %v783, %v786
        %vm788 = vweird.f32 %v782
        %vm789 = vweird.f32 %v783
        %vm790 = vmor %vm788, %vm789
        %v791 = vsel %vm790, %v783, %v787
        %v792 = vand.u32 2147483647, %v782
        %vm793 = vcmp.eq.f32.partialorder %v792, 8.507059e+37
        %v794 = vand.u32 %v782, 2147483648
        %v795 = vor.u32 1.1754944e-38, %v794
        %v796 = vsel %vm793, %v795, %v791
        %v797 = vmul.f32 1.0, %v796
        %799 = vrot.lane.b32.xlu0 %v776, 64
        %v800 = vpop.permute.xlu0 %799
        %v802 = vmul.f32 %v797, %v800
        %804 = vrot.lane.b32.xlu0 %v802, 64
        %v805 = vpop.permute.xlu0 %804
        %v807 = vadd.f32 %v661, %v805
        %v808 = vtanh.pop %v807
        %v809 = vsub.f32 1.0, %v797
        %811 = vrot.lane.b32.xlu0 %v808, 96
        %v812 = vpop.permute.xlu0 %811
        %v814 = vmul.f32 %v809, %v812
        %v815 = vmul.f32 %v797, 0.0
        %v816 = vadd.f32 %v814, %v815
        %v818 = vperm.slane %v743, 0
        %820 = vmatpush.msra.mxu0 0.0
        %821 = vmatpush.msra.mxu0 0.0
        %822 = vmatpush.msra.mxu0 0.0
        %823 = vmatpush.msra.mxu0 0.0
        %824 = vmatpush.msra.mxu0 0.0
        %825 = vmatpush.msra.mxu0 0.0
        %826 = vmatpush.msra.mxu0 0.0
        %827 = vmatpush.msra.mxu0 0.0
        %828 = vmatpush.msra.mxu0 0.0
        %829 = vmatpush.msra.mxu0 0.0
        %830 = vmatpush.msra.mxu0 0.0
        %831 = vmatpush.msra.mxu0 0.0
        %832 = vmatpush.msra.mxu0 %v742
        %833 = vmatpush.msra.mxu0 %v741
        %834 = vmatpush.msra.mxu0 %v740
        %835 = vmatpush.msra.mxu0 %v739
        %836 = vmatmul.f32.gmra.mxu0 %v756
        %v837 = vpop.f32.mrf.mxu0
        %v838 = vadd.f32 %v818, %v837
        %839 = vdwg.mxu0
        %v840 = vadd.f32 %v731, %v838
        %v841 = vxor.u32 %v840, 2147483648
        %v842 = vmul.f32 %v841, 1.442695
        %v843 = vpow.pop %v842
        %v844 = vadd.f32 %v843, 1.0
        %v845 = vrcp.pop %v844
        %v846 = vmul.f32 %v844, %v845
        %v847 = vsub.f32 1.0, %v846
        %v848 = vmul.f32 %v845, %v847
        %v849 = vadd.f32 %v845, %v848
        %vm850 = vweird.f32 %v844
        %vm851 = vweird.f32 %v845
        %vm852 = vmor %vm850, %vm851
        %v853 = vsel %vm852, %v845, %v849
        %v854 = vand.u32 2147483647, %v844
        %vm855 = vcmp.eq.f32.partialorder %v854, 8.507059e+37
        %v856 = vand.u32 %v844, 2147483648
        %v857 = vor.u32 1.1754944e-38, %v856
        %v858 = vsel %vm855, %v857, %v853
        %v859 = vmul.f32 1.0, %v858
        %861 = vrot.lane.b32.xlu0 %v838, 64
        %v862 = vpop.permute.xlu0 %861
        %v864 = vmul.f32 %v859, %v862
        %866 = vrot.lane.b32.xlu0 %v864, 64
        %v867 = vpop.permute.xlu0 %866
        %v869 = vadd.f32 %v731, %v867
        %v870 = vtanh.pop %v869
        %v871 = vsub.f32 1.0, %v859
        %873 = vrot.lane.b32.xlu0 %v870, 96
        %v874 = vpop.permute.xlu0 %873
        %v876 = vmul.f32 %v871, %v874
        %v877 = vmul.f32 %v859, 0.0
        %v878 = vadd.f32 %v876, %v877
        %v879 = vsel %vm744, 1, 0
        %880 = vset.pattern.permute.xlu0 0
        %881 = vperm.xlu0 %880, %v879
        %v882 = vpop.permute.xlu0 %881
        %vm883 = vcmp.eq.s32.totalorder %v882, 1
        %v884 = vsel %vm883, %v816, 0.0
        %886 = vrot.lane.b32.xlu0 %v884, 96
        %v887 = vpop.permute.xlu0 %886
        %889 = vst.msk [vmem:[#allocation2] sm:$0xff] %vm545, %v887
        %v890 = vsel %vm751, 1, 0
        %891 = vset.pattern.permute.xlu0 0
        %892 = vperm.xlu0 %891, %v890
        %v893 = vpop.permute.xlu0 %892
        %vm894 = vcmp.eq.s32.totalorder %v893, 1
        %v895 = vsel %vm894, %v878, 0.0
        %vm896 = vcmask 523520
        %897 = vst.msk [vmem:[#allocation2 + $0x38] sm:$0xff] %vm896, %v895
        %v898 = vsel %vm545, %v887, 0
        %900 = vmatpush.msra.mxu0 0.0
        %901 = vmatpush.msra.mxu0 0.0
        %902 = vmatpush.msra.mxu0 0.0
        %903 = vmatpush.msra.mxu0 0.0
        %904 = vmatpush.msra.mxu0 0.0
        %905 = vmatpush.msra.mxu0 0.0
        %906 = vmatpush.msra.mxu0 0.0
        %907 = vmatpush.msra.mxu0 0.0
        %908 = vmatpush.msra.mxu0 0.0
        %909 = vmatpush.msra.mxu0 0.0
        %910 = vmatpush.msra.mxu0 0.0
        %911 = vmatpush.msra.mxu0 0.0
        %912 = vmatpush.msra.mxu0 %v737
        %913 = vmatpush.msra.mxu0 %v736
        %914 = vmatpush.msra.mxu0 %v735
        %915 = vmatpush.msra.mxu0 %v734
        %916 = vmatmul.f32.gmra.mxu0 %v898
        %v917 = vpop.f32.mrf.mxu0
        %v918 = vadd.f32 %v753, %v917
        %919 = vdwg.mxu0
        %v920 = vadd.f32 %v664, %v918
        %v921 = vxor.u32 %v920, 2147483648
        %v922 = vmul.f32 %v921, 1.442695
        %v923 = vpow.pop %v922
        %v924 = vadd.f32 %v923, 1.0
        %v925 = vrcp.pop %v924
        %v926 = vmul.f32 %v924, %v925
        %v927 = vsub.f32 1.0, %v926
        %v928 = vmul.f32 %v925, %v927
        %v929 = vadd.f32 %v925, %v928
        %vm930 = vweird.f32 %v924
        %vm931 = vweird.f32 %v925
        %vm932 = vmor %vm930, %vm931
        %v933 = vsel %vm932, %v925, %v929
        %v934 = vand.u32 2147483647, %v924
        %vm935 = vcmp.eq.f32.partialorder %v934, 8.507059e+37
        %v936 = vand.u32 %v924, 2147483648
        %v937 = vor.u32 1.1754944e-38, %v936
        %v938 = vsel %vm935, %v937, %v933
        %v939 = vmul.f32 1.0, %v938
        %941 = vrot.lane.b32.xlu0 %v918, 64
        %v942 = vpop.permute.xlu0 %941
        %v944 = vmul.f32 %v939, %v942
        %946 = vrot.lane.b32.xlu0 %v944, 64
        %v947 = vpop.permute.xlu0 %946
        %v949 = vadd.f32 %v664, %v947
        %v950 = vtanh.pop %v949
        %v951 = vsub.f32 1.0, %v939
        %953 = vrot.lane.b32.xlu0 %v950, 96
        %v954 = vpop.permute.xlu0 %953
        %v956 = vmul.f32 %v951, %v954
        %v957 = vmul.f32 %v939, %v884
        %v958 = vadd.f32 %v956, %v957
        %960 = vrot.lane.b32.xlu0 %v895, 96
        %v961 = vpop.permute.xlu0 %960
        %v962 = vsel %vm545, %v961, 0
        %964 = vmatpush.msra.mxu0 0.0
        %965 = vmatpush.msra.mxu0 0.0
        %966 = vmatpush.msra.mxu0 0.0
        %967 = vmatpush.msra.mxu0 0.0
        %968 = vmatpush.msra.mxu0 0.0
        %969 = vmatpush.msra.mxu0 0.0
        %970 = vmatpush.msra.mxu0 0.0
        %971 = vmatpush.msra.mxu0 0.0
        %972 = vmatpush.msra.mxu0 0.0
        %973 = vmatpush.msra.mxu0 0.0
        %974 = vmatpush.msra.mxu0 0.0
        %975 = vmatpush.msra.mxu0 0.0
        %976 = vmatpush.msra.mxu0 %v742
        %977 = vmatpush.msra.mxu0 %v741
        %978 = vmatpush.msra.mxu0 %v740
        %979 = vmatpush.msra.mxu0 %v739
        %980 = vmatmul.f32.gmra.mxu0 %v962
        %v981 = vpop.f32.mrf.mxu0
        %v982 = vadd.f32 %v818, %v981
        %983 = vdwg.mxu0
        %v984 = vadd.f32 %v728, %v982
        %v985 = vxor.u32 %v984, 2147483648
        %v986 = vmul.f32 %v985, 1.442695
        %v987 = vpow.pop %v986
        %v988 = vadd.f32 %v987, 1.0
        %v989 = vrcp.pop %v988
        %v990 = vmul.f32 %v988, %v989
        %v991 = vsub.f32 1.0, %v990
        %v992 = vmul.f32 %v989, %v991
        %v993 = vadd.f32 %v989, %v992
        %vm994 = vweird.f32 %v988
        %vm995 = vweird.f32 %v989
        %vm996 = vmor %vm994, %vm995
        %v997 = vsel %vm996, %v989, %v993
        %v998 = vand.u32 2147483647, %v988
        %vm999 = vcmp.eq.f32.partialorder %v998, 8.507059e+37
        %v1000 = vand.u32 %v988, 2147483648
        %v1001 = vor.u32 1.1754944e-38, %v1000
        %v1002 = vsel %vm999, %v1001, %v997
        %v1003 = vmul.f32 1.0, %v1002
        %1005 = vrot.lane.b32.xlu0 %v982, 64
        %v1006 = vpop.permute.xlu0 %1005
        %v1008 = vmul.f32 %v1003, %v1006
        %1010 = vrot.lane.b32.xlu0 %v1008, 64
        %v1011 = vpop.permute.xlu0 %1010
        %v1013 = vadd.f32 %v728, %v1011
        %v1014 = vtanh.pop %v1013
        %v1015 = vsub.f32 1.0, %v1003
        %1017 = vrot.lane.b32.xlu0 %v1014, 96
        %v1018 = vpop.permute.xlu0 %1017
        %v1020 = vmul.f32 %v1015, %v1018
        %v1021 = vmul.f32 %v1003, %v895
        %v1022 = vadd.f32 %v1020, %v1021
        %v1023 = vsel %vm745, 1, 0
        %1024 = vset.pattern.permute.xlu0 0
        %1025 = vperm.xlu0 %1024, %v1023
        %v1026 = vpop.permute.xlu0 %1025
        %vm1027 = vcmp.eq.s32.totalorder %v1026, 1
        %v1028 = vsel %vm1027, %v958, 0.0
        %1030 = vrot.lane.b32.xlu0 %v1028, 96
        %v1031 = vpop.permute.xlu0 %1030
        %1033 = vst.msk [vmem:[#allocation2 + $0x8] sm:$0xff] %vm545, %v1031
        %v1034 = vsel %vm750, 1, 0
        %1035 = vset.pattern.permute.xlu0 0
        %1036 = vperm.xlu0 %1035, %v1034
        %v1037 = vpop.permute.xlu0 %1036
        %vm1038 = vcmp.eq.s32.totalorder %v1037, 1
        %v1039 = vsel %vm1038, %v1022, 0.0
        %1040 = vst.msk [vmem:[#allocation2 + $0x30] sm:$0xff] %vm896, %v1039
        %v1041 = vsel %vm1027, %v958, %v884
        %v1042 = vsel %vm1038, %v1022, %v895
        %1044 = vrot.lane.b32.xlu0 %v1041, 96
        %v1045 = vpop.permute.xlu0 %1044
        %v1046 = vsel %vm545, %v1045, 0
        %1048 = vmatpush.msra.mxu0 0.0
        %1049 = vmatpush.msra.mxu0 0.0
        %1050 = vmatpush.msra.mxu0 0.0
        %1051 = vmatpush.msra.mxu0 0.0
        %1052 = vmatpush.msra.mxu0 0.0
        %1053 = vmatpush.msra.mxu0 0.0
        %1054 = vmatpush.msra.mxu0 0.0
        %1055 = vmatpush.msra.mxu0 0.0
        %1056 = vmatpush.msra.mxu0 0.0
        %1057 = vmatpush.msra.mxu0 0.0
        %1058 = vmatpush.msra.mxu0 0.0
        %1059 = vmatpush.msra.mxu0 0.0
        %1060 = vmatpush.msra.mxu0 %v737
        %1061 = vmatpush.msra.mxu0 %v736
        %1062 = vmatpush.msra.mxu0 %v735
        %1063 = vmatpush.msra.mxu0 %v734
        %1064 = vmatmul.f32.gmra.mxu0 %v1046
        %v1065 = vpop.f32.mrf.mxu0
        %v1066 = vadd.f32 %v753, %v1065
        %1067 = vdwg.mxu0
        %v1068 = vadd.f32 %v667, %v1066
        %v1069 = vxor.u32 %v1068, 2147483648
        %v1070 = vmul.f32 %v1069, 1.442695
        %v1071 = vpow.pop %v1070
        %v1072 = vadd.f32 %v1071, 1.0
        %v1073 = vrcp.pop %v1072
        %v1074 = vmul.f32 %v1072, %v1073
        %v1075 = vsub.f32 1.0, %v1074
        %v1076 = vmul.f32 %v1073, %v1075
        %v1077 = vadd.f32 %v1073, %v1076
        %vm1078 = vweird.f32 %v1072
        %vm1079 = vweird.f32 %v1073
        %vm1080 = vmor %vm1078, %vm1079
        %v1081 = vsel %vm1080, %v1073, %v1077
        %v1082 = vand.u32 2147483647, %v1072
        %vm1083 = vcmp.eq.f32.partialorder %v1082, 8.507059e+37
        %v1084 = vand.u32 %v1072, 2147483648
        %v1085 = vor.u32 1.1754944e-38, %v1084
        %v1086 = vsel %vm1083, %v1085, %v1081
        %v1087 = vmul.f32 1.0, %v1086
        %1089 = vrot.lane.b32.xlu0 %v1066, 64
        %v1090 = vpop.permute.xlu0 %1089
        %v1092 = vmul.f32 %v1087, %v1090
        %1094 = vrot.lane.b32.xlu0 %v1092, 64
        %v1095 = vpop.permute.xlu0 %1094
        %v1097 = vadd.f32 %v667, %v1095
        %v1098 = vtanh.pop %v1097
        %v1099 = vsub.f32 1.0, %v1087
        %1101 = vrot.lane.b32.xlu0 %v1098, 96
        %v1102 = vpop.permute.xlu0 %1101
        %v1104 = vmul.f32 %v1099, %v1102
        %v1105 = vmul.f32 %v1087, %v1041
        %v1106 = vadd.f32 %v1104, %v1105
        %1108 = vrot.lane.b32.xlu0 %v1042, 96
        %v1109 = vpop.permute.xlu0 %1108
        %v1110 = vsel %vm545, %v1109, 0
        %1112 = vmatpush.msra.mxu0 0.0
        %1113 = vmatpush.msra.mxu0 0.0
        %1114 = vmatpush.msra.mxu0 0.0
        %1115 = vmatpush.msra.mxu0 0.0
        %1116 = vmatpush.msra.mxu0 0.0
        %1117 = vmatpush.msra.mxu0 0.0
        %1118 = vmatpush.msra.mxu0 0.0
        %1119 = vmatpush.msra.mxu0 0.0
        %1120 = vmatpush.msra.mxu0 0.0
        %1121 = vmatpush.msra.mxu0 0.0
        %1122 = vmatpush.msra.mxu0 0.0
        %1123 = vmatpush.msra.mxu0 0.0
        %1124 = vmatpush.msra.mxu0 %v742
        %1125 = vmatpush.msra.mxu0 %v741
        %1126 = vmatpush.msra.mxu0 %v740
        %1127 = vmatpush.msra.mxu0 %v739
        %1128 = vmatmul.f32.gmra.mxu0 %v1110
        %v1129 = vpop.f32.mrf.mxu0
        %v1130 = vadd.f32 %v818, %v1129
        %1131 = vdwg.mxu0
        %v1132 = vadd.f32 %v725, %v1130
        %v1133 = vxor.u32 %v1132, 2147483648
        %v1134 = vmul.f32 %v1133, 1.442695
        %v1135 = vpow.pop %v1134
        %v1136 = vadd.f32 %v1135, 1.0
        %v1137 = vrcp.pop %v1136
        %v1138 = vmul.f32 %v1136, %v1137
        %v1139 = vsub.f32 1.0, %v1138
        %v1140 = vmul.f32 %v1137, %v1139
        %v1141 = vadd.f32 %v1137, %v1140
        %vm1142 = vweird.f32 %v1136
        %vm1143 = vweird.f32 %v1137
        %vm1144 = vmor %vm1142, %vm1143
        %v1145 = vsel %vm1144, %v1137, %v1141
        %v1146 = vand.u32 2147483647, %v1136
        %vm1147 = vcmp.eq.f32.partialorder %v1146, 8.507059e+37
        %v1148 = vand.u32 %v1136, 2147483648
        %v1149 = vor.u32 1.1754944e-38, %v1148
        %v1150 = vsel %vm1147, %v1149, %v1145
        %v1151 = vmul.f32 1.0, %v1150
        %1153 = vrot.lane.b32.xlu0 %v1130, 64
        %v1154 = vpop.permute.xlu0 %1153
        %v1156 = vmul.f32 %v1151, %v1154
        %1158 = vrot.lane.b32.xlu0 %v1156, 64
        %v1159 = vpop.permute.xlu0 %1158
        %v1161 = vadd.f32 %v725, %v1159
        %v1162 = vtanh.pop %v1161
        %v1163 = vsub.f32 1.0, %v1151
        %1165 = vrot.lane.b32.xlu0 %v1162, 96
        %v1166 = vpop.permute.xlu0 %1165
        %v1168 = vmul.f32 %v1163, %v1166
        %v1169 = vmul.f32 %v1151, %v1042
        %v1170 = vadd.f32 %v1168, %v1169
        %v1171 = vsel %vm746, 1, 0
        %1172 = vset.pattern.permute.xlu0 0
        %1173 = vperm.xlu0 %1172, %v1171
        %v1174 = vpop.permute.xlu0 %1173
        %vm1175 = vcmp.eq.s32.totalorder %v1174, 1
        %v1176 = vsel %vm1175, %v1106, 0.0
        %1178 = vrot.lane.b32.xlu0 %v1176, 96
        %v1179 = vpop.permute.xlu0 %1178
        %1181 = vst.msk [vmem:[#allocation2 + $0x10] sm:$0xff] %vm545, %v1179
        %v1182 = vsel %vm749, 1, 0
        %1183 = vset.pattern.permute.xlu0 0
        %1184 = vperm.xlu0 %1183, %v1182
        %v1185 = vpop.permute.xlu0 %1184
        %vm1186 = vcmp.eq.s32.totalorder %v1185, 1
        %v1187 = vsel %vm1186, %v1170, 0.0
        %1188 = vst.msk [vmem:[#allocation2 + $0x28] sm:$0xff] %vm896, %v1187
        %v1189 = vsel %vm1175, %v1106, %v1041
        %v1190 = vsel %vm1186, %v1170, %v1042
        %1192 = vrot.lane.b32.xlu0 %v1189, 96
        %v1193 = vpop.permute.xlu0 %1192
        %v1194 = vsel %vm545, %v1193, 0
        %1196 = vmatpush.msra.mxu0 0.0
        %1197 = vmatpush.msra.mxu0 0.0
        %1198 = vmatpush.msra.mxu0 0.0
        %1199 = vmatpush.msra.mxu0 0.0
        %1200 = vmatpush.msra.mxu0 0.0
        %1201 = vmatpush.msra.mxu0 0.0
        %1202 = vmatpush.msra.mxu0 0.0
        %1203 = vmatpush.msra.mxu0 0.0
        %1204 = vmatpush.msra.mxu0 0.0
        %1205 = vmatpush.msra.mxu0 0.0
        %1206 = vmatpush.msra.mxu0 0.0
        %1207 = vmatpush.msra.mxu0 0.0
        %1208 = vmatpush.msra.mxu0 %v737
        %1209 = vmatpush.msra.mxu0 %v736
        %1210 = vmatpush.msra.mxu0 %v735
        %1211 = vmatpush.msra.mxu0 %v734
        %1212 = vmatmul.f32.gmra.mxu0 %v1194
        %v1213 = vpop.f32.mrf.mxu0
        %v1214 = vadd.f32 %v753, %v1213
        %1215 = vdwg.mxu0
        %v1216 = vadd.f32 %v670, %v1214
        %v1217 = vxor.u32 %v1216, 2147483648
        %v1218 = vmul.f32 %v1217, 1.442695
        %v1219 = vpow.pop %v1218
        %v1220 = vadd.f32 %v1219, 1.0
        %v1221 = vrcp.pop %v1220
        %v1222 = vmul.f32 %v1220, %v1221
        %v1223 = vsub.f32 1.0, %v1222
        %v1224 = vmul.f32 %v1221, %v1223
        %v1225 = vadd.f32 %v1221, %v1224
        %vm1226 = vweird.f32 %v1220
        %vm1227 = vweird.f32 %v1221
        %vm1228 = vmor %vm1226, %vm1227
        %v1229 = vsel %vm1228, %v1221, %v1225
        %v1230 = vand.u32 2147483647, %v1220
        %vm1231 = vcmp.eq.f32.partialorder %v1230, 8.507059e+37
        %v1232 = vand.u32 %v1220, 2147483648
        %v1233 = vor.u32 1.1754944e-38, %v1232
        %v1234 = vsel %vm1231, %v1233, %v1229
        %v1235 = vmul.f32 1.0, %v1234
        %1237 = vrot.lane.b32.xlu0 %v1214, 64
        %v1238 = vpop.permute.xlu0 %1237
        %v1240 = vmul.f32 %v1235, %v1238
        %1242 = vrot.lane.b32.xlu0 %v1240, 64
        %v1243 = vpop.permute.xlu0 %1242
        %v1245 = vadd.f32 %v670, %v1243
        %v1246 = vtanh.pop %v1245
        %v1247 = vsub.f32 1.0, %v1235
        %1249 = vrot.lane.b32.xlu0 %v1246, 96
        %v1250 = vpop.permute.xlu0 %1249
        %v1252 = vmul.f32 %v1247, %v1250
        %v1253 = vmul.f32 %v1235, %v1189
        %v1254 = vadd.f32 %v1252, %v1253
        %1256 = vrot.lane.b32.xlu0 %v1190, 96
        %v1257 = vpop.permute.xlu0 %1256
        %v1258 = vsel %vm545, %v1257, 0
        %1260 = vmatpush.msra.mxu0 0.0
        %1261 = vmatpush.msra.mxu0 0.0
        %1262 = vmatpush.msra.mxu0 0.0
        %1263 = vmatpush.msra.mxu0 0.0
        %1264 = vmatpush.msra.mxu0 0.0
        %1265 = vmatpush.msra.mxu0 0.0
        %1266 = vmatpush.msra.mxu0 0.0
        %1267 = vmatpush.msra.mxu0 0.0
        %1268 = vmatpush.msra.mxu0 0.0
        %1269 = vmatpush.msra.mxu0 0.0
        %1270 = vmatpush.msra.mxu0 0.0
        %1271 = vmatpush.msra.mxu0 0.0
        %1272 = vmatpush.msra.mxu0 %v742
        %1273 = vmatpush.msra.mxu0 %v741
        %1274 = vmatpush.msra.mxu0 %v740
        %1275 = vmatpush.msra.mxu0 %v739
        %1276 = vmatmul.f32.gmra.mxu0 %v1258
        %v1277 = vpop.f32.mrf.mxu0
        %v1278 = vadd.f32 %v818, %v1277
        %1279 = vdwg.mxu0
        %v1280 = vadd.f32 %v722, %v1278
        %v1281 = vxor.u32 %v1280, 2147483648
        %v1282 = vmul.f32 %v1281, 1.442695
        %v1283 = vpow.pop %v1282
        %v1284 = vadd.f32 %v1283, 1.0
        %v1285 = vrcp.pop %v1284
        %v1286 = vmul.f32 %v1284, %v1285
        %v1287 = vsub.f32 1.0, %v1286
        %v1288 = vmul.f32 %v1285, %v1287
        %v1289 = vadd.f32 %v1285, %v1288
        %vm1290 = vweird.f32 %v1284
        %vm1291 = vweird.f32 %v1285
        %vm1292 = vmor %vm1290, %vm1291
        %v1293 = vsel %vm1292, %v1285, %v1289
        %v1294 = vand.u32 2147483647, %v1284
        %vm1295 = vcmp.eq.f32.partialorder %v1294, 8.507059e+37
        %v1296 = vand.u32 %v1284, 2147483648
        %v1297 = vor.u32 1.1754944e-38, %v1296
        %v1298 = vsel %vm1295, %v1297, %v1293
        %v1299 = vmul.f32 1.0, %v1298
        %1301 = vrot.lane.b32.xlu0 %v1278, 64
        %v1302 = vpop.permute.xlu0 %1301
        %v1304 = vmul.f32 %v1299, %v1302
        %1306 = vrot.lane.b32.xlu0 %v1304, 64
        %v1307 = vpop.permute.xlu0 %1306
        %v1309 = vadd.f32 %v722, %v1307
        %v1310 = vtanh.pop %v1309
        %v1311 = vsub.f32 1.0, %v1299
        %1313 = vrot.lane.b32.xlu0 %v1310, 96
        %v1314 = vpop.permute.xlu0 %1313
        %v1316 = vmul.f32 %v1311, %v1314
        %v1317 = vmul.f32 %v1299, %v1190
        %v1318 = vadd.f32 %v1316, %v1317
        %v1319 = vsel %vm747, 1, 0
        %1320 = vset.pattern.permute.xlu0 0
        %1321 = vperm.xlu0 %1320, %v1319
        %v1322 = vpop.permute.xlu0 %1321
        %vm1323 = vcmp.eq.s32.totalorder %v1322, 1
        %v1324 = vsel %vm1323, %v1254, 0.0
        %1326 = vrot.lane.b32.xlu0 %v1324, 96
        %v1327 = vpop.permute.xlu0 %1326
        %1329 = vst.msk [vmem:[#allocation2 + $0x18] sm:$0xff] %vm545, %v1327
        %v1330 = vsel %vm748, 1, 0
        %1331 = vset.pattern.permute.xlu0 0
        %1332 = vperm.xlu0 %1331, %v1330
        %v1333 = vpop.permute.xlu0 %1332
        %vm1334 = vcmp.eq.s32.totalorder %v1333, 1
        %v1335 = vsel %vm1334, %v1318, 0.0
        %1336 = vst.msk [vmem:[#allocation2 + $0x20] sm:$0xff] %vm896, %v1335
        %v1337 = vsel %vm1323, %v1254, %v1189
        %v1338 = vsel %vm1334, %v1318, %v1190
        %1340 = vrot.lane.b32.xlu0 %v1337, 96
        %v1341 = vpop.permute.xlu0 %1340
        %v1342 = vsel %vm545, %v1341, 0
        %1344 = vmatpush.msra.mxu0 0.0
        %1345 = vmatpush.msra.mxu0 0.0
        %1346 = vmatpush.msra.mxu0 0.0
        %1347 = vmatpush.msra.mxu0 0.0
        %1348 = vmatpush.msra.mxu0 0.0
        %1349 = vmatpush.msra.mxu0 0.0
        %1350 = vmatpush.msra.mxu0 0.0
        %1351 = vmatpush.msra.mxu0 0.0
        %1352 = vmatpush.msra.mxu0 0.0
        %1353 = vmatpush.msra.mxu0 0.0
        %1354 = vmatpush.msra.mxu0 0.0
        %1355 = vmatpush.msra.mxu0 0.0
        %1356 = vmatpush.msra.mxu0 %v737
        %1357 = vmatpush.msra.mxu0 %v736
        %1358 = vmatpush.msra.mxu0 %v735
        %1359 = vmatpush.msra.mxu0 %v734
        %1360 = vmatmul.f32.gmra.mxu0 %v1342
        %v1361 = vpop.f32.mrf.mxu0
        %v1362 = vadd.f32 %v753, %v1361
        %1363 = vdwg.mxu0
        %v1364 = vadd.f32 %v673, %v1362
        %v1365 = vxor.u32 %v1364, 2147483648
        %v1366 = vmul.f32 %v1365, 1.442695
        %v1367 = vpow.pop %v1366
        %v1368 = vadd.f32 %v1367, 1.0
        %v1369 = vrcp.pop %v1368
        %v1370 = vmul.f32 %v1368, %v1369
        %v1371 = vsub.f32 1.0, %v1370
        %v1372 = vmul.f32 %v1369, %v1371
        %v1373 = vadd.f32 %v1369, %v1372
        %vm1374 = vweird.f32 %v1368
        %vm1375 = vweird.f32 %v1369
        %vm1376 = vmor %vm1374, %vm1375
        %v1377 = vsel %vm1376, %v1369, %v1373
        %v1378 = vand.u32 2147483647, %v1368
        %vm1379 = vcmp.eq.f32.partialorder %v1378, 8.507059e+37
        %v1380 = vand.u32 %v1368, 2147483648
        %v1381 = vor.u32 1.1754944e-38, %v1380
        %v1382 = vsel %vm1379, %v1381, %v1377
        %v1383 = vmul.f32 1.0, %v1382
        %1385 = vrot.lane.b32.xlu0 %v1362, 64
        %v1386 = vpop.permute.xlu0 %1385
        %v1388 = vmul.f32 %v1383, %v1386
        %1390 = vrot.lane.b32.xlu0 %v1388, 64
        %v1391 = vpop.permute.xlu0 %1390
        %v1393 = vadd.f32 %v673, %v1391
        %v1394 = vtanh.pop %v1393
        %v1395 = vsub.f32 1.0, %v1383
        %1397 = vrot.lane.b32.xlu0 %v1394, 96
        %v1398 = vpop.permute.xlu0 %1397
        %v1400 = vmul.f32 %v1395, %v1398
        %v1401 = vmul.f32 %v1383, %v1337
        %v1402 = vadd.f32 %v1400, %v1401
        %1404 = vrot.lane.b32.xlu0 %v1338, 96
        %v1405 = vpop.permute.xlu0 %1404
        %v1406 = vsel %vm545, %v1405, 0
        %1408 = vmatpush.msra.mxu0 0.0
        %1409 = vmatpush.msra.mxu0 0.0
        %1410 = vmatpush.msra.mxu0 0.0
        %1411 = vmatpush.msra.mxu0 0.0
        %1412 = vmatpush.msra.mxu0 0.0
        %1413 = vmatpush.msra.mxu0 0.0
        %1414 = vmatpush.msra.mxu0 0.0
        %1415 = vmatpush.msra.mxu0 0.0
        %1416 = vmatpush.msra.mxu0 0.0
        %1417 = vmatpush.msra.mxu0 0.0
        %1418 = vmatpush.msra.mxu0 0.0
        %1419 = vmatpush.msra.mxu0 0.0
        %1420 = vmatpush.msra.mxu0 %v742
        %1421 = vmatpush.msra.mxu0 %v741
        %1422 = vmatpush.msra.mxu0 %v740
        %1423 = vmatpush.msra.mxu0 %v739
        %1424 = vmatmul.f32.gmra.mxu0 %v1406
        %v1425 = vpop.f32.mrf.mxu0
        %v1426 = vadd.f32 %v818, %v1425
        %1427 = vdwg.mxu0
        %v1428 = vadd.f32 %v719, %v1426
        %v1429 = vxor.u32 %v1428, 2147483648
        %v1430 = vmul.f32 %v1429, 1.442695
        %v1431 = vpow.pop %v1430
        %v1432 = vadd.f32 %v1431, 1.0
        %v1433 = vrcp.pop %v1432
        %v1434 = vmul.f32 %v1432, %v1433
        %v1435 = vsub.f32 1.0, %v1434
        %v1436 = vmul.f32 %v1433, %v1435
        %v1437 = vadd.f32 %v1433, %v1436
        %vm1438 = vweird.f32 %v1432
        %vm1439 = vweird.f32 %v1433
        %vm1440 = vmor %vm1438, %vm1439
        %v1441 = vsel %vm1440, %v1433, %v1437
        %v1442 = vand.u32 2147483647, %v1432
        %vm1443 = vcmp.eq.f32.partialorder %v1442, 8.507059e+37
        %v1444 = vand.u32 %v1432, 2147483648
        %v1445 = vor.u32 1.1754944e-38, %v1444
        %v1446 = vsel %vm1443, %v1445, %v1441
        %v1447 = vmul.f32 1.0, %v1446
        %1449 = vrot.lane.b32.xlu0 %v1426, 64
        %v1450 = vpop.permute.xlu0 %1449
        %v1452 = vmul.f32 %v1447, %v1450
        %1454 = vrot.lane.b32.xlu0 %v1452, 64
        %v1455 = vpop.permute.xlu0 %1454
        %v1457 = vadd.f32 %v719, %v1455
        %v1458 = vtanh.pop %v1457
        %v1459 = vsub.f32 1.0, %v1447
        %1461 = vrot.lane.b32.xlu0 %v1458, 96
        %v1462 = vpop.permute.xlu0 %1461
        %v1464 = vmul.f32 %v1459, %v1462
        %v1465 = vmul.f32 %v1447, %v1338
        %v1466 = vadd.f32 %v1464, %v1465
        %v1467 = vsel %vm1334, %v1402, 0.0
        %1469 = vrot.lane.b32.xlu0 %v1467, 96
        %v1470 = vpop.permute.xlu0 %1469
        %1472 = vst.msk [vmem:[#allocation2 + $0x20] sm:$0xff] %vm545, %v1470
        %v1473 = vsel %vm1323, %v1466, 0.0
        %1474 = vst.msk [vmem:[#allocation2 + $0x18] sm:$0xff] %vm896, %v1473
        %v1475 = vsel %vm1334, %v1402, %v1337
        %v1476 = vsel %vm1323, %v1466, %v1338
        %1478 = vrot.lane.b32.xlu0 %v1475, 96
        %v1479 = vpop.permute.xlu0 %1478
        %v1480 = vsel %vm545, %v1479, 0
        %1482 = vmatpush.msra.mxu0 0.0
        %1483 = vmatpush.msra.mxu0 0.0
        %1484 = vmatpush.msra.mxu0 0.0
        %1485 = vmatpush.msra.mxu0 0.0
        %1486 = vmatpush.msra.mxu0 0.0
        %1487 = vmatpush.msra.mxu0 0.0
        %1488 = vmatpush.msra.mxu0 0.0
        %1489 = vmatpush.msra.mxu0 0.0
        %1490 = vmatpush.msra.mxu0 0.0
        %1491 = vmatpush.msra.mxu0 0.0
        %1492 = vmatpush.msra.mxu0 0.0
        %1493 = vmatpush.msra.mxu0 0.0
        %1494 = vmatpush.msra.mxu0 %v737
        %1495 = vmatpush.msra.mxu0 %v736
        %1496 = vmatpush.msra.mxu0 %v735
        %1497 = vmatpush.msra.mxu0 %v734
        %1498 = vmatmul.f32.gmra.mxu0 %v1480
        %v1499 = vpop.f32.mrf.mxu0
        %v1500 = vadd.f32 %v753, %v1499
        %1501 = vdwg.mxu0
        %v1502 = vadd.f32 %v676, %v1500
        %v1503 = vxor.u32 %v1502, 2147483648
        %v1504 = vmul.f32 %v1503, 1.442695
        %v1505 = vpow.pop %v1504
        %v1506 = vadd.f32 %v1505, 1.0
        %v1507 = vrcp.pop %v1506
        %v1508 = vmul.f32 %v1506, %v1507
        %v1509 = vsub.f32 1.0, %v1508
        %v1510 = vmul.f32 %v1507, %v1509
        %v1511 = vadd.f32 %v1507, %v1510
        %vm1512 = vweird.f32 %v1506
        %vm1513 = vweird.f32 %v1507
        %vm1514 = vmor %vm1512, %vm1513
        %v1515 = vsel %vm1514, %v1507, %v1511
        %v1516 = vand.u32 2147483647, %v1506
        %vm1517 = vcmp.eq.f32.partialorder %v1516, 8.507059e+37
        %v1518 = vand.u32 %v1506, 2147483648
        %v1519 = vor.u32 1.1754944e-38, %v1518
        %v1520 = vsel %vm1517, %v1519, %v1515
        %v1521 = vmul.f32 1.0, %v1520
        %1523 = vrot.lane.b32.xlu0 %v1500, 64
        %v1524 = vpop.permute.xlu0 %1523
        %v1526 = vmul.f32 %v1521, %v1524
        %1528 = vrot.lane.b32.xlu0 %v1526, 64
        %v1529 = vpop.permute.xlu0 %1528
        %v1531 = vadd.f32 %v676, %v1529
        %v1532 = vtanh.pop %v1531
        %v1533 = vsub.f32 1.0, %v1521
        %1535 = vrot.lane.b32.xlu0 %v1532, 96
        %v1536 = vpop.permute.xlu0 %1535
        %v1538 = vmul.f32 %v1533, %v1536
        %v1539 = vmul.f32 %v1521, %v1475
        %v1540 = vadd.f32 %v1538, %v1539
        %1542 = vrot.lane.b32.xlu0 %v1476, 96
        %v1543 = vpop.permute.xlu0 %1542
        %v1544 = vsel %vm545, %v1543, 0
        %1546 = vmatpush.msra.mxu0 0.0
        %1547 = vmatpush.msra.mxu0 0.0
        %1548 = vmatpush.msra.mxu0 0.0
        %1549 = vmatpush.msra.mxu0 0.0
        %1550 = vmatpush.msra.mxu0 0.0
        %1551 = vmatpush.msra.mxu0 0.0
        %1552 = vmatpush.msra.mxu0 0.0
        %1553 = vmatpush.msra.mxu0 0.0
        %1554 = vmatpush.msra.mxu0 0.0
        %1555 = vmatpush.msra.mxu0 0.0
        %1556 = vmatpush.msra.mxu0 0.0
        %1557 = vmatpush.msra.mxu0 0.0
        %1558 = vmatpush.msra.mxu0 %v742
        %1559 = vmatpush.msra.mxu0 %v741
        %1560 = vmatpush.msra.mxu0 %v740
        %1561 = vmatpush.msra.mxu0 %v739
        %1562 = vmatmul.f32.gmra.mxu0 %v1544
        %v1563 = vpop.f32.mrf.mxu0
        %v1564 = vadd.f32 %v818, %v1563
        %1565 = vdwg.mxu0
        %v1566 = vadd.f32 %v716, %v1564
        %v1567 = vxor.u32 %v1566, 2147483648
        %v1568 = vmul.f32 %v1567, 1.442695
        %v1569 = vpow.pop %v1568
        %v1570 = vadd.f32 %v1569, 1.0
        %v1571 = vrcp.pop %v1570
        %v1572 = vmul.f32 %v1570, %v1571
        %v1573 = vsub.f32 1.0, %v1572
        %v1574 = vmul.f32 %v1571, %v1573
        %v1575 = vadd.f32 %v1571, %v1574
        %vm1576 = vweird.f32 %v1570
        %vm1577 = vweird.f32 %v1571
        %vm1578 = vmor %vm1576, %vm1577
        %v1579 = vsel %vm1578, %v1571, %v1575
        %v1580 = vand.u32 2147483647, %v1570
        %vm1581 = vcmp.eq.f32.partialorder %v1580, 8.507059e+37
        %v1582 = vand.u32 %v1570, 2147483648
        %v1583 = vor.u32 1.1754944e-38, %v1582
        %v1584 = vsel %vm1581, %v1583, %v1579
        %v1585 = vmul.f32 1.0, %v1584
        %1587 = vrot.lane.b32.xlu0 %v1564, 64
        %v1588 = vpop.permute.xlu0 %1587
        %v1590 = vmul.f32 %v1585, %v1588
        %1592 = vrot.lane.b32.xlu0 %v1590, 64
        %v1593 = vpop.permute.xlu0 %1592
        %v1595 = vadd.f32 %v716, %v1593
        %v1596 = vtanh.pop %v1595
        %v1597 = vsub.f32 1.0, %v1585
        %1599 = vrot.lane.b32.xlu0 %v1596, 96
        %v1600 = vpop.permute.xlu0 %1599
        %v1602 = vmul.f32 %v1597, %v1600
        %v1603 = vmul.f32 %v1585, %v1476
        %v1604 = vadd.f32 %v1602, %v1603
        %v1605 = vsel %vm1186, %v1540, 0.0
        %1607 = vrot.lane.b32.xlu0 %v1605, 96
        %v1608 = vpop.permute.xlu0 %1607
        %1610 = vst.msk [vmem:[#allocation2 + $0x28] sm:$0xff] %vm545, %v1608
        %v1611 = vsel %vm1175, %v1604, 0.0
        %1612 = vst.msk [vmem:[#allocation2 + $0x10] sm:$0xff] %vm896, %v1611
        %v1613 = vsel %vm1186, %v1540, %v1475
        %v1614 = vsel %vm1175, %v1604, %v1476
        %1616 = vrot.lane.b32.xlu0 %v1613, 96
        %v1617 = vpop.permute.xlu0 %1616
        %v1618 = vsel %vm545, %v1617, 0
        %1620 = vmatpush.msra.mxu0 0.0
        %1621 = vmatpush.msra.mxu0 0.0
        %1622 = vmatpush.msra.mxu0 0.0
        %1623 = vmatpush.msra.mxu0 0.0
        %1624 = vmatpush.msra.mxu0 0.0
        %1625 = vmatpush.msra.mxu0 0.0
        %1626 = vmatpush.msra.mxu0 0.0
        %1627 = vmatpush.msra.mxu0 0.0
        %1628 = vmatpush.msra.mxu0 0.0
        %1629 = vmatpush.msra.mxu0 0.0
        %1630 = vmatpush.msra.mxu0 0.0
        %1631 = vmatpush.msra.mxu0 0.0
        %1632 = vmatpush.msra.mxu0 %v737
        %1633 = vmatpush.msra.mxu0 %v736
        %1634 = vmatpush.msra.mxu0 %v735
        %1635 = vmatpush.msra.mxu0 %v734
        %1636 = vmatmul.f32.gmra.mxu0 %v1618
        %v1637 = vpop.f32.mrf.mxu0
        %v1638 = vadd.f32 %v753, %v1637
        %1639 = vdwg.mxu0
        %v1640 = vadd.f32 %v679, %v1638
        %v1641 = vxor.u32 %v1640, 2147483648
        %v1642 = vmul.f32 %v1641, 1.442695
        %v1643 = vpow.pop %v1642
        %v1644 = vadd.f32 %v1643, 1.0
        %v1645 = vrcp.pop %v1644
        %v1646 = vmul.f32 %v1644, %v1645
        %v1647 = vsub.f32 1.0, %v1646
        %v1648 = vmul.f32 %v1645, %v1647
        %v1649 = vadd.f32 %v1645, %v1648
        %vm1650 = vweird.f32 %v1644
        %vm1651 = vweird.f32 %v1645
        %vm1652 = vmor %vm1650, %vm1651
        %v1653 = vsel %vm1652, %v1645, %v1649
        %v1654 = vand.u32 2147483647, %v1644
        %vm1655 = vcmp.eq.f32.partialorder %v1654, 8.507059e+37
        %v1656 = vand.u32 %v1644, 2147483648
        %v1657 = vor.u32 1.1754944e-38, %v1656
        %v1658 = vsel %vm1655, %v1657, %v1653
        %v1659 = vmul.f32 1.0, %v1658
        %1661 = vrot.lane.b32.xlu0 %v1638, 64
        %v1662 = vpop.permute.xlu0 %1661
        %v1664 = vmul.f32 %v1659, %v1662
        %1666 = vrot.lane.b32.xlu0 %v1664, 64
        %v1667 = vpop.permute.xlu0 %1666
        %v1669 = vadd.f32 %v679, %v1667
        %v1670 = vtanh.pop %v1669
        %v1671 = vsub.f32 1.0, %v1659
        %1673 = vrot.lane.b32.xlu0 %v1670, 96
        %v1674 = vpop.permute.xlu0 %1673
        %v1676 = vmul.f32 %v1671, %v1674
        %v1677 = vmul.f32 %v1659, %v1613
        %v1678 = vadd.f32 %v1676, %v1677
        %1680 = vrot.lane.b32.xlu0 %v1614, 96
        %v1681 = vpop.permute.xlu0 %1680
        %v1682 = vsel %vm545, %v1681, 0
        %1684 = vmatpush.msra.mxu0 0.0
        %1685 = vmatpush.msra.mxu0 0.0
        %1686 = vmatpush.msra.mxu0 0.0
        %1687 = vmatpush.msra.mxu0 0.0
        %1688 = vmatpush.msra.mxu0 0.0
        %1689 = vmatpush.msra.mxu0 0.0
        %1690 = vmatpush.msra.mxu0 0.0
        %1691 = vmatpush.msra.mxu0 0.0
        %1692 = vmatpush.msra.mxu0 0.0
        %1693 = vmatpush.msra.mxu0 0.0
        %1694 = vmatpush.msra.mxu0 0.0
        %1695 = vmatpush.msra.mxu0 0.0
        %1696 = vmatpush.msra.mxu0 %v742
        %1697 = vmatpush.msra.mxu0 %v741
        %1698 = vmatpush.msra.mxu0 %v740
        %1699 = vmatpush.msra.mxu0 %v739
        %1700 = vmatmul.f32.gmra.mxu0 %v1682
        %v1701 = vpop.f32.mrf.mxu0
        %v1702 = vadd.f32 %v818, %v1701
        %1703 = vdwg.mxu0
        %v1704 = vadd.f32 %v713, %v1702
        %v1705 = vxor.u32 %v1704, 2147483648
        %v1706 = vmul.f32 %v1705, 1.442695
        %v1707 = vpow.pop %v1706
        %v1708 = vadd.f32 %v1707, 1.0
        %v1709 = vrcp.pop %v1708
        %v1710 = vmul.f32 %v1708, %v1709
        %v1711 = vsub.f32 1.0, %v1710
        %v1712 = vmul.f32 %v1709, %v1711
        %v1713 = vadd.f32 %v1709, %v1712
        %vm1714 = vweird.f32 %v1708
        %vm1715 = vweird.f32 %v1709
        %vm1716 = vmor %vm1714, %vm1715
        %v1717 = vsel %vm1716, %v1709, %v1713
        %v1718 = vand.u32 2147483647, %v1708
        %vm1719 = vcmp.eq.f32.partialorder %v1718, 8.507059e+37
        %v1720 = vand.u32 %v1708, 2147483648
        %v1721 = vor.u32 1.1754944e-38, %v1720
        %v1722 = vsel %vm1719, %v1721, %v1717
        %v1723 = vmul.f32 1.0, %v1722
        %1725 = vrot.lane.b32.xlu0 %v1702, 64
        %v1726 = vpop.permute.xlu0 %1725
        %v1728 = vmul.f32 %v1723, %v1726
        %1730 = vrot.lane.b32.xlu0 %v1728, 64
        %v1731 = vpop.permute.xlu0 %1730
        %v1733 = vadd.f32 %v713, %v1731
        %v1734 = vtanh.pop %v1733
        %v1735 = vsub.f32 1.0, %v1723
        %1737 = vrot.lane.b32.xlu0 %v1734, 96
        %v1738 = vpop.permute.xlu0 %1737
        %v1740 = vmul.f32 %v1735, %v1738
        %v1741 = vmul.f32 %v1723, %v1614
        %v1742 = vadd.f32 %v1740, %v1741
        %v1743 = vsel %vm1038, %v1678, 0.0
        %1745 = vrot.lane.b32.xlu0 %v1743, 96
        %v1746 = vpop.permute.xlu0 %1745
        %1748 = vst.msk [vmem:[#allocation2 + $0x30] sm:$0xff] %vm545, %v1746
        %v1749 = vsel %vm1027, %v1742, 0.0
        %1750 = vst.msk [vmem:[#allocation2 + $0x8] sm:$0xff] %vm896, %v1749
        %v1751 = vsel %vm1038, %v1678, %v1613
        %v1752 = vsel %vm1027, %v1742, %v1614
        %1754 = vrot.lane.b32.xlu0 %v1751, 96
        %v1755 = vpop.permute.xlu0 %1754
        %v1756 = vsel %vm545, %v1755, 0
        %1758 = vmatpush.msra.mxu0 0.0
        %1759 = vmatpush.msra.mxu0 0.0
        %1760 = vmatpush.msra.mxu0 0.0
        %1761 = vmatpush.msra.mxu0 0.0
        %1762 = vmatpush.msra.mxu0 0.0
        %1763 = vmatpush.msra.mxu0 0.0
        %1764 = vmatpush.msra.mxu0 0.0
        %1765 = vmatpush.msra.mxu0 0.0
        %1766 = vmatpush.msra.mxu0 0.0
        %1767 = vmatpush.msra.mxu0 0.0
        %1768 = vmatpush.msra.mxu0 0.0
        %1769 = vmatpush.msra.mxu0 0.0
        %1770 = vmatpush.msra.mxu0 %v737
        %1771 = vmatpush.msra.mxu0 %v736
        %1772 = vmatpush.msra.mxu0 %v735
        %1773 = vmatpush.msra.mxu0 %v734
        %1774 = vmatmul.f32.gmra.mxu0 %v1756
        %v1775 = vpop.f32.mrf.mxu0
        %v1776 = vadd.f32 %v753, %v1775
        %1777 = vdwg.mxu0
        %v1778 = vadd.f32 %v682, %v1776
        %v1779 = vxor.u32 %v1778, 2147483648
        %v1780 = vmul.f32 %v1779, 1.442695
        %v1781 = vpow.pop %v1780
        %v1782 = vadd.f32 %v1781, 1.0
        %v1783 = vrcp.pop %v1782
        %v1784 = vmul.f32 %v1782, %v1783
        %v1785 = vsub.f32 1.0, %v1784
        %v1786 = vmul.f32 %v1783, %v1785
        %v1787 = vadd.f32 %v1783, %v1786
        %vm1788 = vweird.f32 %v1782
        %vm1789 = vweird.f32 %v1783
        %vm1790 = vmor %vm1788, %vm1789
        %v1791 = vsel %vm1790, %v1783, %v1787
        %v1792 = vand.u32 2147483647, %v1782
        %vm1793 = vcmp.eq.f32.partialorder %v1792, 8.507059e+37
        %v1794 = vand.u32 %v1782, 2147483648
        %v1795 = vor.u32 1.1754944e-38, %v1794
        %v1796 = vsel %vm1793, %v1795, %v1791
        %v1797 = vmul.f32 1.0, %v1796
        %1799 = vrot.lane.b32.xlu0 %v1776, 64
        %v1800 = vpop.permute.xlu0 %1799
        %v1802 = vmul.f32 %v1797, %v1800
        %1804 = vrot.lane.b32.xlu0 %v1802, 64
        %v1805 = vpop.permute.xlu0 %1804
        %v1807 = vadd.f32 %v682, %v1805
        %v1808 = vtanh.pop %v1807
        %v1809 = vsub.f32 1.0, %v1797
        %1811 = vrot.lane.b32.xlu0 %v1808, 96
        %v1812 = vpop.permute.xlu0 %1811
        %v1814 = vmul.f32 %v1809, %v1812
        %v1815 = vmul.f32 %v1797, %v1751
        %v1816 = vadd.f32 %v1814, %v1815
        %1818 = vrot.lane.b32.xlu0 %v1752, 96
        %v1819 = vpop.permute.xlu0 %1818
        %v1820 = vsel %vm545, %v1819, 0
        %1822 = vmatpush.msra.mxu0 0.0
        %1823 = vmatpush.msra.mxu0 0.0
        %1824 = vmatpush.msra.mxu0 0.0
        %1825 = vmatpush.msra.mxu0 0.0
        %1826 = vmatpush.msra.mxu0 0.0
        %1827 = vmatpush.msra.mxu0 0.0
        %1828 = vmatpush.msra.mxu0 0.0
        %1829 = vmatpush.msra.mxu0 0.0
        %1830 = vmatpush.msra.mxu0 0.0
        %1831 = vmatpush.msra.mxu0 0.0
        %1832 = vmatpush.msra.mxu0 0.0
        %1833 = vmatpush.msra.mxu0 0.0
        %1834 = vmatpush.msra.mxu0 %v742
        %1835 = vmatpush.msra.mxu0 %v741
        %1836 = vmatpush.msra.mxu0 %v740
        %1837 = vmatpush.msra.mxu0 %v739
        %1838 = vmatmul.f32.gmra.mxu0 %v1820
        %v1839 = vpop.f32.mrf.mxu0
        %v1840 = vadd.f32 %v818, %v1839
        %1841 = vdwg.mxu0
        %v1842 = vadd.f32 %v710, %v1840
        %v1843 = vxor.u32 %v1842, 2147483648
        %v1844 = vmul.f32 %v1843, 1.442695
        %v1845 = vpow.pop %v1844
        %v1846 = vadd.f32 %v1845, 1.0
        %v1847 = vrcp.pop %v1846
        %v1848 = vmul.f32 %v1846, %v1847
        %v1849 = vsub.f32 1.0, %v1848
        %v1850 = vmul.f32 %v1847, %v1849
        %v1851 = vadd.f32 %v1847, %v1850
        %vm1852 = vweird.f32 %v1846
        %vm1853 = vweird.f32 %v1847
        %vm1854 = vmor %vm1852, %vm1853
        %v1855 = vsel %vm1854, %v1847, %v1851
        %v1856 = vand.u32 2147483647, %v1846
        %vm1857 = vcmp.eq.f32.partialorder %v1856, 8.507059e+37
        %v1858 = vand.u32 %v1846, 2147483648
        %v1859 = vor.u32 1.1754944e-38, %v1858
        %v1860 = vsel %vm1857, %v1859, %v1855
        %v1861 = vmul.f32 1.0, %v1860
        %1863 = vrot.lane.b32.xlu0 %v1840, 64
        %v1864 = vpop.permute.xlu0 %1863
        %v1866 = vmul.f32 %v1861, %v1864
        %1868 = vrot.lane.b32.xlu0 %v1866, 64
        %v1869 = vpop.permute.xlu0 %1868
        %v1871 = vadd.f32 %v710, %v1869
        %v1872 = vtanh.pop %v1871
        %v1873 = vsub.f32 1.0, %v1861
        %1875 = vrot.lane.b32.xlu0 %v1872, 96
        %v1876 = vpop.permute.xlu0 %1875
        %v1878 = vmul.f32 %v1873, %v1876
        %v1879 = vmul.f32 %v1861, %v1752
        %v1880 = vadd.f32 %v1878, %v1879
        %v1881 = vsel %vm894, %v1816, 0.0
        %1883 = vrot.lane.b32.xlu0 %v1881, 96
        %v1884 = vpop.permute.xlu0 %1883
        %1886 = vst.msk [vmem:[#allocation2 + $0x38] sm:$0xff] %vm545, %v1884
        %v1887 = vsel %vm883, %v1880, 0.0
        %1888 = vst.msk [vmem:[#allocation2] sm:$0xff] %vm896, %v1887
        %v1889 = vld [vmem:[#allocation2] sm:$0xff]
        %v1890 = vld [vmem:[#allocation2 + $0x8] sm:$0xff]
        %v1891 = vld [vmem:[#allocation2 + $0x10] sm:$0xff]
        %v1892 = vld [vmem:[#allocation2 + $0x18] sm:$0xff]
        %v1893 = vld [vmem:[#allocation2 + $0x20] sm:$0xff]
        %v1894 = vld [vmem:[#allocation2 + $0x28] sm:$0xff]
        %v1895 = vld [vmem:[#allocation2 + $0x30] sm:$0xff]
        %v1896 = vld [vmem:[#allocation2 + $0x38] sm:$0xff]
        %v1897 = vld [vmem:[%s11] sm:$0xff]
        %v1898 = vld [vmem:[%s11 + $0x8] sm:$0xff]
        %v1899 = vld [vmem:[%s11 + $0x10] sm:$0xff]
        %v1900 = vld [vmem:[%s11 + $0x18] sm:$0xff]
        %v1901 = vld [vmem:[%s11 + $0x20] sm:$0xff]
        %v1902 = vld [vmem:[%s11 + $0x28] sm:$0xff]
        %v1903 = vld [vmem:[%s11 + $0x30] sm:$0xff]
        %v1904 = vld [vmem:[%s11 + $0x38] sm:$0xff]
        %v1905 = vld [vmem:[%s12] sm:$0x1]
        %v1907 = vperm.slane %v1905, 0
        %vm1909 = vcmask 523264
        %v1911 = vsel %vm1909, %v1889, 0
        %v1914 = vsel %vm1909, %v1890, 0
        %v1917 = vsel %vm1909, %v1891, 0
        %v1920 = vsel %vm1909, %v1892, 0
        %v1923 = vsel %vm1909, %v1893, 0
        %v1926 = vsel %vm1909, %v1894, 0
        %v1929 = vsel %vm1909, %v1895, 0
        %v1932 = vsel %vm1909, %v1896, 0
        %1934 = vmatpush.msra.mxu0 0.0
        %1935 = vmatpush.msra.mxu0 0.0
        %1936 = vmatpush.msra.mxu0 0.0
        %1937 = vmatpush.msra.mxu0 0.0
        %1938 = vmatpush.msra.mxu0 0.0
        %1939 = vmatpush.msra.mxu0 0.0
        %1940 = vmatpush.msra.mxu0 0.0
        %1941 = vmatpush.msra.mxu0 0.0
        %1942 = vmatpush.msra.mxu0 %v1904
        %1943 = vmatpush.msra.mxu0 %v1903
        %1944 = vmatpush.msra.mxu0 %v1902
        %1945 = vmatpush.msra.mxu0 %v1901
        %1946 = vmatpush.msra.mxu0 %v1900
        %1947 = vmatpush.msra.mxu0 %v1899
        %1948 = vmatpush.msra.mxu0 %v1898
        %1949 = vmatpush.msra.mxu0 %v1897
        %1950 = vmatmul.f32.gmra.mxu0 %v1911
        %v1951 = vpop.f32.mrf.mxu0
        %v1952 = vadd.f32 %v1907, %v1951
        %1953 = vmatmul.f32.gmra.mxu0 %v1914
        %v1954 = vpop.f32.mrf.mxu0
        %v1955 = vadd.f32 %v1907, %v1954
        %1956 = vmatmul.f32.gmra.mxu0 %v1917
        %v1957 = vpop.f32.mrf.mxu0
        %v1958 = vadd.f32 %v1907, %v1957
        %1959 = vmatmul.f32.gmra.mxu0 %v1920
        %v1960 = vpop.f32.mrf.mxu0
        %v1961 = vadd.f32 %v1907, %v1960
        %1962 = vmatmul.f32.gmra.mxu0 %v1923
        %v1963 = vpop.f32.mrf.mxu0
        %v1964 = vadd.f32 %v1907, %v1963
        %1965 = vmatmul.f32.gmra.mxu0 %v1926
        %v1966 = vpop.f32.mrf.mxu0
        %v1967 = vadd.f32 %v1907, %v1966
        %1968 = vmatmul.f32.gmra.mxu0 %v1929
        %v1969 = vpop.f32.mrf.mxu0
        %v1970 = vadd.f32 %v1907, %v1969
        %1971 = vmatmul.f32.gmra.mxu0 %v1932
        %v1972 = vpop.f32.mrf.mxu0
        %v1973 = vadd.f32 %v1907, %v1972
        %1974 = vdwg.mxu0
        %v1975 = vtanh.pop %v1952
        %v1976 = vtanh.pop %v1955
        %v1977 = vtanh.pop %v1958
        %v1978 = vtanh.pop %v1961
        %v1979 = vtanh.pop %v1964
        %v1980 = vtanh.pop %v1967
        %v1981 = vtanh.pop %v1970
        %v1982 = vtanh.pop %v1973
        %v1983 = vld [vmem:[%s13] sm:$0xff]
        %v1984 = vld [vmem:[%s13 + $0x8] sm:$0xff]
        %v1985 = vld [vmem:[%s13 + $0x10] sm:$0xff]
        %v1986 = vld [vmem:[%s13 + $0x18] sm:$0xff]
        %v1988 = vsel %vm545, %v1975, 0
        %v1991 = vsel %vm545, %v1976, 0
        %v1994 = vsel %vm545, %v1977, 0
        %v1997 = vsel %vm545, %v1978, 0
        %v2000 = vsel %vm545, %v1979, 0
        %v2003 = vsel %vm545, %v1980, 0
        %v2006 = vsel %vm545, %v1981, 0
        %v2009 = vsel %vm545, %v1982, 0
        %2011 = vmatpush.msra.mxu0 0.0
        %2012 = vmatpush.msra.mxu0 0.0
        %2013 = vmatpush.msra.mxu0 0.0
        %2014 = vmatpush.msra.mxu0 0.0
        %2015 = vmatpush.msra.mxu0 0.0
        %2016 = vmatpush.msra.mxu0 0.0
        %2017 = vmatpush.msra.mxu0 0.0
        %2018 = vmatpush.msra.mxu0 0.0
        %2019 = vmatpush.msra.mxu0 0.0
        %2020 = vmatpush.msra.mxu0 0.0
        %2021 = vmatpush.msra.mxu0 0.0
        %2022 = vmatpush.msra.mxu0 0.0
        %2023 = vmatpush.msra.mxu0 %v1986
        %2024 = vmatpush.msra.mxu0 %v1985
        %2025 = vmatpush.msra.mxu0 %v1984
        %2026 = vmatpush.msra.mxu0 %v1983
        %2027 = vmatmul.f32.gmra.mxu0 %v1988
        %v2028 = vpop.f32.mrf.mxu0
        %v2029 = vadd.f32 0.0, %v2028
        %2030 = vmatmul.f32.gmra.mxu0 %v1991
        %v2031 = vpop.f32.mrf.mxu0
        %v2032 = vadd.f32 0.0, %v2031
        %2033 = vmatmul.f32.gmra.mxu0 %v1994
        %v2034 = vpop.f32.mrf.mxu0
        %v2035 = vadd.f32 0.0, %v2034
        %2036 = vmatmul.f32.gmra.mxu0 %v1997
        %v2037 = vpop.f32.mrf.mxu0
        %v2038 = vadd.f32 0.0, %v2037
        %2039 = vmatmul.f32.gmra.mxu0 %v2000
        %v2040 = vpop.f32.mrf.mxu0
        %v2041 = vadd.f32 0.0, %v2040
        %2042 = vmatmul.f32.gmra.mxu0 %v2003
        %v2043 = vpop.f32.mrf.mxu0
        %v2044 = vadd.f32 0.0, %v2043
        %2045 = vmatmul.f32.gmra.mxu0 %v2006
        %v2046 = vpop.f32.mrf.mxu0
        %v2047 = vadd.f32 0.0, %v2046
        %2048 = vmatmul.f32.gmra.mxu0 %v2009
        %v2049 = vpop.f32.mrf.mxu0
        %v2050 = vadd.f32 0.0, %v2049
        %2051 = vdwg.mxu0
        %2053 = vrot.lane.b32.xlu0 %v2032, 1
        %v2054 = vpop.permute.xlu0 %2053
        %2057 = vrot.lane.b32.xlu0 %v2035, 2
        %v2058 = vpop.permute.xlu0 %2057
        %2061 = vrot.lane.b32.xlu0 %v2038, 3
        %v2062 = vpop.permute.xlu0 %2061
        %2065 = vrot.lane.b32.xlu0 %v2041, 4
        %v2066 = vpop.permute.xlu0 %2065
        %2069 = vrot.lane.b32.xlu0 %v2044, 5
        %v2070 = vpop.permute.xlu0 %2069
        %2073 = vrot.lane.b32.xlu0 %v2047, 6
        %v2074 = vpop.permute.xlu0 %2073
        %2077 = vrot.lane.b32.xlu0 %v2050, 7
        %v2078 = vpop.permute.xlu0 %2077
        %vm2080 = vcmask 7168
        %v2081 = vsel %vm2080, %v2029, %v2054
        %vm2082 = vcmask 15360
        %v2083 = vsel %vm2082, %v2081, %v2058
        %vm2084 = vcmask 23552
        %v2085 = vsel %vm2084, %v2083, %v2062
        %vm2086 = vcmask 31744
        %v2087 = vsel %vm2086, %v2085, %v2066
        %vm2088 = vcmask 39936
        %v2089 = vsel %vm2088, %v2087, %v2070
        %vm2090 = vcmask 48128
        %v2091 = vsel %vm2090, %v2089, %v2074
        %vm2092 = vcmask 56320
        %v2093 = vsel %vm2092, %v2091, %v2078
        %2094 = vset.pattern.permute.xlu0 0
        %2095 = vperm.xlu0 %2094, %v733
        %v2096 = vpop.permute.xlu0 %2095
        %vm2097 = vcmp.lt.s32.totalorder %v492, %v2096
        %v2098 = vsel %vm2097, %v2093, -1e+30
        %vm2099 = vcmask 64512
        %v2100 = vsel %vm2099, %v2098, -inf
        %2101 = vmax.xlane.f32.xlu0 %v2100
        %v2102 = vpop.xlane.xlu0 %2101
        %v2103 = vsub.f32 %v2098, %v2102
        %v2104 = vmul.f32 %v2103, 1.442695
        %v2105 = vpow.pop %v2104
        %v2106 = vsel %vm2099, %v2105, 0.0
        %2107 = vadd.xlane.f32.xlu0 %v2106
        %v2108 = vpop.xlane.xlu0 %2107
        %v2109 = vrcp.pop %v2108
        %v2110 = vmul.f32 %v2108, %v2109
        %v2111 = vsub.f32 1.0, %v2110
        %v2112 = vmul.f32 %v2109, %v2111
        %v2113 = vadd.f32 %v2109, %v2112
        %vm2114 = vweird.f32 %v2108
        %vm2115 = vweird.f32 %v2109
        %vm2116 = vmor %vm2114, %vm2115
        %v2117 = vsel %vm2116, %v2109, %v2113
        %v2118 = vand.u32 2147483647, %v2108
        %vm2119 = vcmp.eq.f32.partialorder %v2118, 8.507059e+37
        %v2120 = vand.u32 %v2108, 2147483648
        %v2121 = vor.u32 1.1754944e-38, %v2120
        %v2122 = vsel %vm2119, %v2121, %v2117
        %v2123 = vmul.f32 %v2105, %v2122
        %2125 = vset.pattern.permute.xlu0 0
        %2126 = vperm.xlu0 %2125, %v2123
        %v2127 = vpop.permute.xlu0 %2126
        %v2129 = vmul.f32 %v2127, %v1889
        %v2130 = vadd.f32 %v2129, 0.0
        %2131 = vset.pattern.permute.xlu0 1
        %2132 = vperm.xlu0 %2131, %v2123
        %v2133 = vpop.permute.xlu0 %2132
        %v2135 = vmul.f32 %v2133, %v1890
        %v2136 = vadd.f32 %v2130, %v2135
        %2137 = vset.pattern.permute.xlu0 2
        %2138 = vperm.xlu0 %2137, %v2123
        %v2139 = vpop.permute.xlu0 %2138
        %v2141 = vmul.f32 %v2139, %v1891
        %v2142 = vadd.f32 %v2136, %v2141
        %2143 = vset.pattern.permute.xlu0 3
        %2144 = vperm.xlu0 %2143, %v2123
        %v2145 = vpop.permute.xlu0 %2144
        %v2147 = vmul.f32 %v2145, %v1892
        %v2148 = vadd.f32 %v2142, %v2147
        %2149 = vset.pattern.permute.xlu0 4
        %2150 = vperm.xlu0 %2149, %v2123
        %v2151 = vpop.permute.xlu0 %2150
        %v2153 = vmul.f32 %v2151, %v1893
        %v2154 = vadd.f32 %v2148, %v2153
        %2155 = vset.pattern.permute.xlu0 5
        %2156 = vperm.xlu0 %2155, %v2123
        %v2157 = vpop.permute.xlu0 %2156
        %v2159 = vmul.f32 %v2157, %v1894
        %v2160 = vadd.f32 %v2154, %v2159
        %2161 = vset.pattern.permute.xlu0 6
        %2162 = vperm.xlu0 %2161, %v2123
        %v2163 = vpop.permute.xlu0 %2162
        %v2165 = vmul.f32 %v2163, %v1895
        %v2166 = vadd.f32 %v2160, %v2165
        %2167 = vset.pattern.permute.xlu0 7
        %2168 = vperm.xlu0 %2167, %v2123
        %v2169 = vpop.permute.xlu0 %2168
        %v2171 = vmul.f32 %v2169, %v1896
        %v2172 = vadd.f32 %v2166, %v2171
        %2173 = vrot.lane.b32.xlu0 %v2123, 64
        %v2174 = vpop.permute.xlu0 %2173
        %v2176 = vsel %vm1909, %v2172, %v2174
        %vm2177 = vcmask 588800
        %v2178 = vsel %vm2177, %v2176, 0.0
        %2179 = vst [vmem:[%s473] sm:$0xff] %v2178
        %s2180 = sand.u32 %s340, 1
        %s2181 = scalar_lea.sflag [#allocation4], %s2180
        %s2182 = sand.u32 %s340, 1
        %s2183 = smul.addr %s2182, 8
        %s2184 = scalar_lea.vmem [#allocation3], %s2183
        // Predicated region
        $region77: #{tpu_custom_call.1} parent=75 // pred_check
          %p2185 = pneg %p350
        $region78: #{tpu_custom_call.1} parent=75 // pred_check_branch
          %2187 = sbr.rel (%p2185) target = $region80
        $region79: #{tpu_custom_call.1} parent=75 // pred_region
          %2189 = vsyncadd %s2181, 0
          %s2190 = smul.addr %s28, 8
          %s2191 = scalar_lea.hbm %s14, %s2190
          %s2193 = sshll.u32 %s2184, 4
          %s2194 = int_to_ptr.vmem [resolvable:$true] %s2193
          %s2195 = sshll.u32 %s2191, 4
          %s2196 = int_to_ptr.hbm [resolvable:$true] %s2195
          %2198 = dma.vmem_to_hbm [thread:$0]  %s2194, 128, %s2196, %s2181
        $region80: #{tpu_custom_call.1} parent=75 // pred_fallthru
          _
      $region76: #{tpu_custom_call.1} parent=5 // pred_fallthru
        _
      %p2199 = scmp.le.s32.totalorder 2, %s23
      // Predicated region
      $region81: #{tpu_custom_call.1} parent=5 // pred_check
        %p2200 = pneg %p2199
      $region82: #{tpu_custom_call.1} parent=5 // pred_check_branch
        %2202 = sbr.rel (%p2200) target = $region84
      $region83: #{tpu_custom_call.1} parent=5 // pred_region
        %s2203 = ssub.s32 %s23, 2
        // Predicated region
        $region85: #{tpu_custom_call.1} parent=83 // pred_check
          %p2204 = pneg %p356
        $region86: #{tpu_custom_call.1} parent=83 // pred_check_branch
          %2206 = sbr.rel (%p2204) target = $region88
        $region87: #{tpu_custom_call.1} parent=83 // pred_region
          %s2207 = sand.u32 %s341, 1
          %s2208 = scalar_lea.sflag [#allocation4], %s2207
          %s2209 = sand.u32 %s341, 1
          %s2210 = smul.addr %s2209, 8
          %s2211 = scalar_lea.vmem [#allocation3], %s2210
          %2213 = dma.done %s2208, 128
        $region88: #{tpu_custom_call.1} parent=83 // pred_fallthru
          _
      $region84: #{tpu_custom_call.1} parent=5 // pred_fallthru
        _
    $region6: #{tpu_custom_call.1} parent=1 // loop_footer
      %s27 = sadd.s32 1, %s23
    $region7: #{tpu_custom_call.1} parent=1 // loop_footer_branch
      %22 = sbr.rel target = $region3
    $region8: #{tpu_custom_call.1} parent=1 // loop_exit
      _
    %2214 = vsyncpa [#allocation4], 1
    %s2215 = scalar_lea.sflag [#allocation4], 1
    %2216 = vsyncpa %s2215, 1

</llo_original>
